<compile_context>
chip_gen: v7x
topology: tpu7x:2x2x1
jax: 0.10.0
libtpu: 0.0.40
codegen_flags: <defaults>
</compile_context>

<pallas_src>
import functools

import jax
import jax.numpy as jnp
from jax.experimental import pallas as pl
from jax.experimental.pallas import tpu as pltpu


# ----------------------------- Pallas kernel ------------------------------ #
def _convblock_kernel(x_ref, w_ref, shift_ref, o_ref, acc_ref, *, offsets):
    # x_ref:     (L_pad, C)    flattened (phase-major) padded NHWC input
    # w_ref:     (k*k, C, TOC) BN-scale-folded (block-diag for groups) weights
    # shift_ref: (1, TOC)      folded BN shift (f32)
    # o_ref:     (M_pad, TOC)  output block (compute dtype, lane-dense)
    # acc_ref:   (M_pad, TOC)  f32 accumulator scratch
    m_pad = o_ref.shape[0]
    for t, off in enumerate(offsets):            # static unroll over k*k taps
        lhs = x_ref[pl.ds(off, m_pad), :]        # static slice: fused im2col
        contrib = jnp.dot(lhs, w_ref[t], preferred_element_type=jnp.float32)
        if t == 0:
            acc_ref[...] = contrib
        else:
            acc_ref[...] += contrib
    y = acc_ref[...] + shift_ref[...]            # f32 epilogue
    o_ref[...] = jnp.clip(y, 0.0, 6.0).astype(o_ref.dtype)   # relu6


# ------------------------------- glue (JAX) -------------------------------- #
def _round_up(x, m):
    return (x + m - 1) // m * m


@functools.partial(jax.jit,
                   static_argnames=("k", "s", "p", "g", "compute_dtype"))
def conv_block_forward(x, weight, gamma, beta, running_mean, running_var,
                       *, k, s=1, p=0, g=1, eps=1e-5,
                       compute_dtype=jnp.bfloat16):
    """Conv2d(bias=False, groups=g) + BatchNorm2d(eval) + relu6.  x: (N,C,H,W)."""
    N, C, H, W = x.shape
    out_c = weight.shape[0]
    c_g, oc_g = C // g, out_c // g

    Hp, Wp = H + 2 * p, W + 2 * p
    Ho, Wo = (Hp - k) // s + 1, (Wp - k) // s + 1
    Hq, Wq = -(-Hp // s), -(-Wp // s)            # ceil(.. / s) super-rows/cols

    # Phases (space-to-batch sub-images) actually referenced by the k*k taps.
    used = sorted({(kh % s, kw % s) for kh in range(k) for kw in range(k)})
    ph_idx = {ph: i for i, ph in enumerate(used)}
    n_ph = len(used)

    # Static tap offsets into the flat (phase, Hq, Wq) axis: output position
    # m = ho*Wq + wo reads x_flat[m + off(kh,kw)] for every tap.
    offsets = tuple(ph_idx[(kh % s, kw % s)] * Hq * Wq
                    + (kh // s) * Wq + (kw // s)
                    for kh in range(k) for kw in range(k))

    M = Ho * Wq                                   # flat GEMM rows (incl. margin)
    M_pad = _round_up(M, 8)
    L = n_ph * Hq * Wq
    L_pad = _round_up(max(L, max(offsets) + M_pad), 8)

    # --- input: NCHW -> NHWC, spatial pad, phase split (s>1), flatten -------
    xh = x.astype(compute_dtype).transpose(0, 2, 3, 1)          # (N,H,W,C)
    xh = jnp.pad(xh, ((0, 0), (p, Hq * s - H - p),
                      (p, Wq * s - W - p), (0, 0)))             # (N,Hq*s,Wq*s,C)
    x6 = xh.reshape(N, Hq, s, Wq, s, C)
    phases = [x6[:, :, i, :, j, :].reshape(N, Hq * Wq, C) for (i, j) in used]
    x_flat = phases[0] if n_ph == 1 else jnp.concatenate(phases, axis=1)
    x_flat = jnp.pad(x_flat, ((0, 0), (0, L_pad - L), (0, 0)))  # (N, L_pad, C)

    # --- fold BatchNorm (eval) into weights + per-channel shift -------------
    scale = gamma / jnp.sqrt(running_var + eps)                 # (out_c,)
    shift = beta - running_mean * scale                         # (out_c,)
    w_s = weight * scale[:, None, None, None]                   # (out_c,c_g,k,k)

    if g == 1:
        w_kkco = w_s.transpose(2, 3, 1, 0)                      # (k,k,C,out_c)
    else:
        # Groups packed block-diagonally into the lane dim (no per-group pad).
        w_kkco = jnp.zeros((k, k, C, out_c), jnp.float32)
        w_gr = w_s.reshape(g, oc_g, c_g, k, k).transpose(3, 4, 2, 0, 1)
        for gi in range(g):
            w_kkco = w_kkco.at[:, :, gi * c_g:(gi + 1) * c_g,
                               gi * oc_g:(gi + 1) * oc_g].set(w_gr[:, :, :, gi, :])

    oc_p = _round_up(out_c, 128)
    w_stack = jnp.pad(w_kkco.reshape(k * k, C, out_c),
                      ((0, 0), (0, 0), (0, oc_p - out_c))).astype(compute_dtype)
    shift_p = jnp.pad(shift, (0, oc_p - out_c)).reshape(1, oc_p).astype(jnp.float32)

    # oc tiling: 256-wide blocks for the 256x256 MXUs when out_c is large.
    if oc_p <= 256:
        TOC = oc_p
    elif oc_p % 256 == 0:
        TOC = 256
    else:
        TOC = 128
    n_oc = oc_p // TOC

    # --- VMEM budget (double-buffered blocks + accumulator) -----------------
    itemsize = jnp.dtype(compute_dtype).itemsize
    sub = 16 if itemsize == 2 else 8
    vmem_est = (2 * _round_up(L_pad, sub) * _round_up(C, 128) * itemsize   # x
                + 2 * k * k * _round_up(C, sub) * TOC * itemsize           # w
                + 2 * _round_up(M_pad, sub) * TOC * itemsize               # out
                + _round_up(M_pad, 8) * TOC * 4                            # acc
                + 2 * 8 * TOC * 4)                                         # shift
    try:
        vmem_cap = int(pltpu.get_tpu_info().vmem_capacity_bytes)
    except Exception:
        vmem_cap = 64 * 2**20                    # conservative (v7x-sized)
    vmem_limit = int(min(max(vmem_est + (vmem_est >> 2), 32 * 2**20),
                         (3 * vmem_cap) // 4))

    out_flat = pl.pallas_call(
        functools.partial(_convblock_kernel, offsets=offsets),
        out_shape=jax.ShapeDtypeStruct((N, M_pad, oc_p), compute_dtype),
        grid_spec=pltpu.PrefetchScalarGridSpec(
            num_scalar_prefetch=0,
            grid=(N, n_oc),
            in_specs=[
                pl.BlockSpec((None, L_pad, C), lambda n, o: (n, 0, 0)),
                pl.BlockSpec((k * k, C, TOC), lambda n, o: (0, 0, o)),
                pl.BlockSpec((1, TOC), lambda n, o: (0, o)),
            ],
            out_specs=pl.BlockSpec((None, M_pad, TOC), lambda n, o: (n, 0, o)),
            scratch_shapes=[pltpu.VMEM((M_pad, TOC), jnp.float32)],
        ),
        compiler_params=pltpu.CompilerParams(
            dimension_semantics=("parallel", "parallel"),
            vmem_limit_bytes=vmem_limit),
    )(x_flat, w_stack, shift_p)                  # (N, M_pad, oc_p)

    # --- slice out valid positions, back to NCHW / f32 (interface parity) ---
    out = out_flat[:, :Ho * Wq, :out_c].reshape(N, Ho, Wq, out_c)[:, :, :Wo, :]
    return out.transpose(0, 3, 1, 2).astype(jnp.float32)        # (N,out_c,Ho,Wo)


# ----------------------------- reference (JAX) ----------------------------- #
def _reference(x, weight, gamma, beta, mean, var, *, k, s, p, g, eps=1e-5):
    y = jax.lax.conv_general_dilated(
        x, weight, window_strides=(s, s), padding=[(p, p), (p, p)],
        dimension_numbers=("NCHW", "OIHW", "NCHW"),
        feature_group_count=g, precision=jax.lax.Precision.HIGHEST)
    sc = (gamma / jnp.sqrt(var + eps)).reshape(1, -1, 1, 1)
    sh = (beta - mean * gamma / jnp.sqrt(var + eps)).reshape(1, -1, 1, 1)
    return jnp.clip(y * sc + sh, 0.0, 6.0)


if __name__ == "__main__":
    key = jax.random.PRNGKey(0)
    kx, kw = jax.random.split(key)

    N, in_c, H, W = 2, 4, 16, 16
    out_c = 8
    x = jax.random.normal(kx, (N, in_c, H, W), dtype=jnp.float32)
    gamma = 1.0 + 0.05 * jnp.arange(out_c, dtype=jnp.float32)
    beta = 0.02 * jnp.arange(out_c, dtype=jnp.float32)
    running_mean = 0.01 * jnp.arange(out_c, dtype=jnp.float32)
    running_var = 1.0 + 0.03 * jnp.arange(out_c, dtype=jnp.float32)

    # --- Test 1: ConvBlock(4 -> 8, k=3, s=1, p=1, g=1), bf16 (default) path ---
    k1, s1, p1, g1 = 3, 1, 1, 1
    w1 = 0.1 * jax.random.normal(kw, (out_c, in_c // g1, k1, k1), dtype=jnp.float32)
    out1 = conv_block_forward(x, w1, gamma, beta, running_mean, running_var,
                              k=k1, s=s1, p=p1, g=g1,
                              compute_dtype=jnp.bfloat16)
    out1 = jax.block_until_ready(out1)
    ref1 = _reference(x, w1, gamma, beta, running_mean, running_var,
                      k=k1, s=s1, p=p1, g=g1)
    assert out1.shape == (N, out_c, H, W)
    assert jnp.allclose(out1, ref1, atol=5e-2, rtol=5e-2), "bf16 ConvBlock mismatch"

    # --- Test 2: grouped, strided ConvBlock(4 -> 8, k=3, s=2, p=1, g=2), f32 ---
    k2, s2, p2, g2 = 3, 2, 1, 2
    kw2, _ = jax.random.split(kw)
    w2 = 0.1 * jax.random.normal(kw2, (out_c, in_c // g2, k2, k2), dtype=jnp.float32)
    out2 = conv_block_forward(x, w2, gamma, beta, running_mean, running_var,
                              k=k2, s=s2, p=p2, g=g2,
                              compute_dtype=jnp.float32)
    out2 = jax.block_until_ready(out2)
    ref2 = _reference(x, w2, gamma, beta, running_mean, running_var,
                      k=k2, s=s2, p=p2, g=g2)
    assert out2.shape == (N, out_c, H // 2, W // 2)
    assert jnp.allclose(out2, ref2, atol=1e-3, rtol=1e-3), "grouped ConvBlock mismatch"

    print("KERNEL_OK")
</pallas_src>

<mosaic_0001>
module attributes {stable_mosaic.version = 11 : i64} {
  func.func @_convblock_kernel(%arg0: i32, %arg1: i32, %arg2: memref<1x328x4xbf16, #tpu.memory_space<vmem>>, %arg3: memref<9x4x128xbf16, #tpu.memory_space<vmem>>, %arg4: memref<1x128xf32, #tpu.memory_space<vmem>>, %arg5: memref<1x288x128xbf16, #tpu.memory_space<vmem>>, %arg6: memref<288x128xf32, #tpu.memory_space<vmem>>) attributes {dimension_semantics = [#tpu.dimension_semantics<parallel>, #tpu.dimension_semantics<parallel>], iteration_bounds = array<i64: 2, 1>, scalar_prefetch = 0 : i64, scratch_operands = 1 : i64, tpu.core_type = #tpu.core_type<tc>, window_params = [{transform_indices = @transform_0, window_bounds = array<i64: 1, 328, 4>}, {transform_indices = @transform_1, window_bounds = array<i64: 9, 4, 128>}, {transform_indices = @transform_2, window_bounds = array<i64: 1, 128>}, {transform_indices = @transform_3, window_bounds = array<i64: 1, 288, 128>}]} {
    %c0 = arith.constant 0 : index
    %c0_0 = arith.constant 0 : index
    %c0_1 = arith.constant 0 : index
    %0 = vector.load %arg2[%c0, %c0_0, %c0_1] : memref<1x328x4xbf16, #tpu.memory_space<vmem>>, vector<1x288x4xbf16>
    %1 = vector.shape_cast %0 : vector<1x288x4xbf16> to vector<288x4xbf16>
    %c0_2 = arith.constant 0 : index
    %c0_3 = arith.constant 0 : index
    %c0_4 = arith.constant 0 : index
    %2 = vector.load %arg3[%c0_2, %c0_3, %c0_4] : memref<9x4x128xbf16, #tpu.memory_space<vmem>>, vector<1x4x128xbf16>
    %3 = vector.shape_cast %2 : vector<1x4x128xbf16> to vector<4x128xbf16>
    %cst = arith.constant dense<0.000000e+00> : vector<288x128xf32>
    %4 = tpu.matmul %1, %3, %cst {dimension_numbers = #tpu.dot_dimension_numbers<[1], [0], [0], [1], [0, 0, 1, 1], [], []>} : vector<288x4xbf16>, vector<4x128xbf16>, vector<288x128xf32> -> vector<288x128xf32>
    %c0_5 = arith.constant 0 : index
    %c0_6 = arith.constant 0 : index
    %5 = vector.load %arg6[%c0_5, %c0_6] : memref<288x128xf32, #tpu.memory_space<vmem>>, vector<288x128xf32>
    tpu.vector_store %arg6[%c0_5, %c0_6], %4 {strides = array<i32>} : memref<288x128xf32, #tpu.memory_space<vmem>>, vector<288x128xf32>,
    %c0_7 = arith.constant 0 : index
    %c1 = arith.constant 1 : index
    %c0_8 = arith.constant 0 : index
    %6 = vector.load %arg2[%c0_7, %c1, %c0_8] : memref<1x328x4xbf16, #tpu.memory_space<vmem>>, vector<1x288x4xbf16>
    %7 = vector.shape_cast %6 : vector<1x288x4xbf16> to vector<288x4xbf16>
    %c1_9 = arith.constant 1 : index
    %c0_10 = arith.constant 0 : index
    %c0_11 = arith.constant 0 : index
    %8 = vector.load %arg3[%c1_9, %c0_10, %c0_11] : memref<9x4x128xbf16, #tpu.memory_space<vmem>>, vector<1x4x128xbf16>
    %9 = vector.shape_cast %8 : vector<1x4x128xbf16> to vector<4x128xbf16>
    %cst_12 = arith.constant dense<0.000000e+00> : vector<288x128xf32>
    %10 = tpu.matmul %7, %9, %cst_12 {dimension_numbers = #tpu.dot_dimension_numbers<[1], [0], [0], [1], [0, 0, 1, 1], [], []>} : vector<288x4xbf16>, vector<4x128xbf16>, vector<288x128xf32> -> vector<288x128xf32>
    %c0_13 = arith.constant 0 : index
    %c0_14 = arith.constant 0 : index
    %11 = vector.load %arg6[%c0_13, %c0_14] : memref<288x128xf32, #tpu.memory_space<vmem>>, vector<288x128xf32>
    %12 = arith.addf %11, %10 : vector<288x128xf32>
    %c0_15 = arith.constant 0 : index
    %c0_16 = arith.constant 0 : index
    %13 = vector.load %arg6[%c0_15, %c0_16] : memref<288x128xf32, #tpu.memory_space<vmem>>, vector<288x128xf32>
    tpu.vector_store %arg6[%c0_15, %c0_16], %12 {strides = array<i32>} : memref<288x128xf32, #tpu.memory_space<vmem>>, vector<288x128xf32>,
    %c0_17 = arith.constant 0 : index
    %c2 = arith.constant 2 : index
    %c0_18 = arith.constant 0 : index
    %14 = vector.load %arg2[%c0_17, %c2, %c0_18] : memref<1x328x4xbf16, #tpu.memory_space<vmem>>, vector<1x288x4xbf16>
    %15 = vector.shape_cast %14 : vector<1x288x4xbf16> to vector<288x4xbf16>
    %c2_19 = arith.constant 2 : index
    %c0_20 = arith.constant 0 : index
    %c0_21 = arith.constant 0 : index
    %16 = vector.load %arg3[%c2_19, %c0_20, %c0_21] : memref<9x4x128xbf16, #tpu.memory_space<vmem>>, vector<1x4x128xbf16>
    %17 = vector.shape_cast %16 : vector<1x4x128xbf16> to vector<4x128xbf16>
    %cst_22 = arith.constant dense<0.000000e+00> : vector<288x128xf32>
    %18 = tpu.matmul %15, %17, %cst_22 {dimension_numbers = #tpu.dot_dimension_numbers<[1], [0], [0], [1], [0, 0, 1, 1], [], []>} : vector<288x4xbf16>, vector<4x128xbf16>, vector<288x128xf32> -> vector<288x128xf32>
    %c0_23 = arith.constant 0 : index
    %c0_24 = arith.constant 0 : index
    %19 = vector.load %arg6[%c0_23, %c0_24] : memref<288x128xf32, #tpu.memory_space<vmem>>, vector<288x128xf32>
    %20 = arith.addf %19, %18 : vector<288x128xf32>
    %c0_25 = arith.constant 0 : index
    %c0_26 = arith.constant 0 : index
    %21 = vector.load %arg6[%c0_25, %c0_26] : memref<288x128xf32, #tpu.memory_space<vmem>>, vector<288x128xf32>
    tpu.vector_store %arg6[%c0_25, %c0_26], %20 {strides = array<i32>} : memref<288x128xf32, #tpu.memory_space<vmem>>, vector<288x128xf32>,
    %c0_27 = arith.constant 0 : index
    %c18 = arith.constant 18 : index
    %c0_28 = arith.constant 0 : index
    %22 = vector.load %arg2[%c0_27, %c18, %c0_28] : memref<1x328x4xbf16, #tpu.memory_space<vmem>>, vector<1x288x4xbf16>
    %23 = vector.shape_cast %22 : vector<1x288x4xbf16> to vector<288x4xbf16>
    %c3 = arith.constant 3 : index
    %c0_29 = arith.constant 0 : index
    %c0_30 = arith.constant 0 : index
    %24 = vector.load %arg3[%c3, %c0_29, %c0_30] : memref<9x4x128xbf16, #tpu.memory_space<vmem>>, vector<1x4x128xbf16>
    %25 = vector.shape_cast %24 : vector<1x4x128xbf16> to vector<4x128xbf16>
    %cst_31 = arith.constant dense<0.000000e+00> : vector<288x128xf32>
    %26 = tpu.matmul %23, %25, %cst_31 {dimension_numbers = #tpu.dot_dimension_numbers<[1], [0], [0], [1], [0, 0, 1, 1], [], []>} : vector<288x4xbf16>, vector<4x128xbf16>, vector<288x128xf32> -> vector<288x128xf32>
    %c0_32 = arith.constant 0 : index
    %c0_33 = arith.constant 0 : index
    %27 = vector.load %arg6[%c0_32, %c0_33] : memref<288x128xf32, #tpu.memory_space<vmem>>, vector<288x128xf32>
    %28 = arith.addf %27, %26 : vector<288x128xf32>
    %c0_34 = arith.constant 0 : index
    %c0_35 = arith.constant 0 : index
    %29 = vector.load %arg6[%c0_34, %c0_35] : memref<288x128xf32, #tpu.memory_space<vmem>>, vector<288x128xf32>
    tpu.vector_store %arg6[%c0_34, %c0_35], %28 {strides = array<i32>} : memref<288x128xf32, #tpu.memory_space<vmem>>, vector<288x128xf32>,
    %c0_36 = arith.constant 0 : index
    %c19 = arith.constant 19 : index
    %c0_37 = arith.constant 0 : index
    %30 = vector.load %arg2[%c0_36, %c19, %c0_37] : memref<1x328x4xbf16, #tpu.memory_space<vmem>>, vector<1x288x4xbf16>
    %31 = vector.shape_cast %30 : vector<1x288x4xbf16> to vector<288x4xbf16>
    %c4 = arith.constant 4 : index
    %c0_38 = arith.constant 0 : index
    %c0_39 = arith.constant 0 : index
    %32 = vector.load %arg3[%c4, %c0_38, %c0_39] : memref<9x4x128xbf16, #tpu.memory_space<vmem>>, vector<1x4x128xbf16>
    %33 = vector.shape_cast %32 : vector<1x4x128xbf16> to vector<4x128xbf16>
    %cst_40 = arith.constant dense<0.000000e+00> : vector<288x128xf32>
    %34 = tpu.matmul %31, %33, %cst_40 {dimension_numbers = #tpu.dot_dimension_numbers<[1], [0], [0], [1], [0, 0, 1, 1], [], []>} : vector<288x4xbf16>, vector<4x128xbf16>, vector<288x128xf32> -> vector<288x128xf32>
    %c0_41 = arith.constant 0 : index
    %c0_42 = arith.constant 0 : index
    %35 = vector.load %arg6[%c0_41, %c0_42] : memref<288x128xf32, #tpu.memory_space<vmem>>, vector<288x128xf32>
    %36 = arith.addf %35, %34 : vector<288x128xf32>
    %c0_43 = arith.constant 0 : index
    %c0_44 = arith.constant 0 : index
    %37 = vector.load %arg6[%c0_43, %c0_44] : memref<288x128xf32, #tpu.memory_space<vmem>>, vector<288x128xf32>
    tpu.vector_store %arg6[%c0_43, %c0_44], %36 {strides = array<i32>} : memref<288x128xf32, #tpu.memory_space<vmem>>, vector<288x128xf32>,
    %c0_45 = arith.constant 0 : index
    %c20 = arith.constant 20 : index
    %c0_46 = arith.constant 0 : index
    %38 = vector.load %arg2[%c0_45, %c20, %c0_46] : memref<1x328x4xbf16, #tpu.memory_space<vmem>>, vector<1x288x4xbf16>
    %39 = vector.shape_cast %38 : vector<1x288x4xbf16> to vector<288x4xbf16>
    %c5 = arith.constant 5 : index
    %c0_47 = arith.constant 0 : index
    %c0_48 = arith.constant 0 : index
    %40 = vector.load %arg3[%c5, %c0_47, %c0_48] : memref<9x4x128xbf16, #tpu.memory_space<vmem>>, vector<1x4x128xbf16>
    %41 = vector.shape_cast %40 : vector<1x4x128xbf16> to vector<4x128xbf16>
    %cst_49 = arith.constant dense<0.000000e+00> : vector<288x128xf32>
    %42 = tpu.matmul %39, %41, %cst_49 {dimension_numbers = #tpu.dot_dimension_numbers<[1], [0], [0], [1], [0, 0, 1, 1], [], []>} : vector<288x4xbf16>, vector<4x128xbf16>, vector<288x128xf32> -> vector<288x128xf32>
    %c0_50 = arith.constant 0 : index
    %c0_51 = arith.constant 0 : index
    %43 = vector.load %arg6[%c0_50, %c0_51] : memref<288x128xf32, #tpu.memory_space<vmem>>, vector<288x128xf32>
    %44 = arith.addf %43, %42 : vector<288x128xf32>
    %c0_52 = arith.constant 0 : index
    %c0_53 = arith.constant 0 : index
    %45 = vector.load %arg6[%c0_52, %c0_53] : memref<288x128xf32, #tpu.memory_space<vmem>>, vector<288x128xf32>
    tpu.vector_store %arg6[%c0_52, %c0_53], %44 {strides = array<i32>} : memref<288x128xf32, #tpu.memory_space<vmem>>, vector<288x128xf32>,
    %c0_54 = arith.constant 0 : index
    %c36 = arith.constant 36 : index
    %c0_55 = arith.constant 0 : index
    %46 = vector.load %arg2[%c0_54, %c36, %c0_55] : memref<1x328x4xbf16, #tpu.memory_space<vmem>>, vector<1x288x4xbf16>
    %47 = vector.shape_cast %46 : vector<1x288x4xbf16> to vector<288x4xbf16>
    %c6 = arith.constant 6 : index
    %c0_56 = arith.constant 0 : index
    %c0_57 = arith.constant 0 : index
    %48 = vector.load %arg3[%c6, %c0_56, %c0_57] : memref<9x4x128xbf16, #tpu.memory_space<vmem>>, vector<1x4x128xbf16>
    %49 = vector.shape_cast %48 : vector<1x4x128xbf16> to vector<4x128xbf16>
    %cst_58 = arith.constant dense<0.000000e+00> : vector<288x128xf32>
    %50 = tpu.matmul %47, %49, %cst_58 {dimension_numbers = #tpu.dot_dimension_numbers<[1], [0], [0], [1], [0, 0, 1, 1], [], []>} : vector<288x4xbf16>, vector<4x128xbf16>, vector<288x128xf32> -> vector<288x128xf32>
    %c0_59 = arith.constant 0 : index
    %c0_60 = arith.constant 0 : index
    %51 = vector.load %arg6[%c0_59, %c0_60] : memref<288x128xf32, #tpu.memory_space<vmem>>, vector<288x128xf32>
    %52 = arith.addf %51, %50 : vector<288x128xf32>
    %c0_61 = arith.constant 0 : index
    %c0_62 = arith.constant 0 : index
    %53 = vector.load %arg6[%c0_61, %c0_62] : memref<288x128xf32, #tpu.memory_space<vmem>>, vector<288x128xf32>
    tpu.vector_store %arg6[%c0_61, %c0_62], %52 {strides = array<i32>} : memref<288x128xf32, #tpu.memory_space<vmem>>, vector<288x128xf32>,
    %c0_63 = arith.constant 0 : index
    %c37 = arith.constant 37 : index
    %c0_64 = arith.constant 0 : index
    %54 = vector.load %arg2[%c0_63, %c37, %c0_64] : memref<1x328x4xbf16, #tpu.memory_space<vmem>>, vector<1x288x4xbf16>
    %55 = vector.shape_cast %54 : vector<1x288x4xbf16> to vector<288x4xbf16>
    %c7 = arith.constant 7 : index
    %c0_65 = arith.constant 0 : index
    %c0_66 = arith.constant 0 : index
    %56 = vector.load %arg3[%c7, %c0_65, %c0_66] : memref<9x4x128xbf16, #tpu.memory_space<vmem>>, vector<1x4x128xbf16>
    %57 = vector.shape_cast %56 : vector<1x4x128xbf16> to vector<4x128xbf16>
    %cst_67 = arith.constant dense<0.000000e+00> : vector<288x128xf32>
    %58 = tpu.matmul %55, %57, %cst_67 {dimension_numbers = #tpu.dot_dimension_numbers<[1], [0], [0], [1], [0, 0, 1, 1], [], []>} : vector<288x4xbf16>, vector<4x128xbf16>, vector<288x128xf32> -> vector<288x128xf32>
    %c0_68 = arith.constant 0 : index
    %c0_69 = arith.constant 0 : index
    %59 = vector.load %arg6[%c0_68, %c0_69] : memref<288x128xf32, #tpu.memory_space<vmem>>, vector<288x128xf32>
    %60 = arith.addf %59, %58 : vector<288x128xf32>
    %c0_70 = arith.constant 0 : index
    %c0_71 = arith.constant 0 : index
    %61 = vector.load %arg6[%c0_70, %c0_71] : memref<288x128xf32, #tpu.memory_space<vmem>>, vector<288x128xf32>
    tpu.vector_store %arg6[%c0_70, %c0_71], %60 {strides = array<i32>} : memref<288x128xf32, #tpu.memory_space<vmem>>, vector<288x128xf32>,
    %c0_72 = arith.constant 0 : index
    %c38 = arith.constant 38 : index
    %c0_73 = arith.constant 0 : index
    %62 = vector.load %arg2[%c0_72, %c38, %c0_73] : memref<1x328x4xbf16, #tpu.memory_space<vmem>>, vector<1x288x4xbf16>
    %63 = vector.shape_cast %62 : vector<1x288x4xbf16> to vector<288x4xbf16>
    %c8 = arith.constant 8 : index
    %c0_74 = arith.constant 0 : index
    %c0_75 = arith.constant 0 : index
    %64 = vector.load %arg3[%c8, %c0_74, %c0_75] : memref<9x4x128xbf16, #tpu.memory_space<vmem>>, vector<1x4x128xbf16>
    %65 = vector.shape_cast %64 : vector<1x4x128xbf16> to vector<4x128xbf16>
    %cst_76 = arith.constant dense<0.000000e+00> : vector<288x128xf32>
    %66 = tpu.matmul %63, %65, %cst_76 {dimension_numbers = #tpu.dot_dimension_numbers<[1], [0], [0], [1], [0, 0, 1, 1], [], []>} : vector<288x4xbf16>, vector<4x128xbf16>, vector<288x128xf32> -> vector<288x128xf32>
    %c0_77 = arith.constant 0 : index
    %c0_78 = arith.constant 0 : index
    %67 = vector.load %arg6[%c0_77, %c0_78] : memref<288x128xf32, #tpu.memory_space<vmem>>, vector<288x128xf32>
    %68 = arith.addf %67, %66 : vector<288x128xf32>
    %c0_79 = arith.constant 0 : index
    %c0_80 = arith.constant 0 : index
    %69 = vector.load %arg6[%c0_79, %c0_80] : memref<288x128xf32, #tpu.memory_space<vmem>>, vector<288x128xf32>
    tpu.vector_store %arg6[%c0_79, %c0_80], %68 {strides = array<i32>} : memref<288x128xf32, #tpu.memory_space<vmem>>, vector<288x128xf32>,
    %c0_81 = arith.constant 0 : index
    %c0_82 = arith.constant 0 : index
    %70 = vector.load %arg6[%c0_81, %c0_82] : memref<288x128xf32, #tpu.memory_space<vmem>>, vector<288x128xf32>
    %c0_83 = arith.constant 0 : index
    %c0_84 = arith.constant 0 : index
    %71 = vector.load %arg4[%c0_83, %c0_84] : memref<1x128xf32, #tpu.memory_space<vmem>>, vector<1x128xf32>
    %72 = vector.broadcast %71 : vector<1x128xf32> to vector<288x128xf32>
    %73 = arith.addf %70, %72 : vector<288x128xf32>
    %cst_85 = arith.constant 0.000000e+00 : f32
    %cst_86 = arith.constant 6.000000e+00 : f32
    %74 = vector.broadcast %cst_85 : f32 to vector<288x128xf32>
    %75 = arith.maximumf %74, %73 : vector<288x128xf32>
    %76 = vector.broadcast %cst_86 : f32 to vector<288x128xf32>
    %77 = arith.minimumf %76, %75 : vector<288x128xf32>
    %78 = arith.truncf %77 : vector<288x128xf32> to vector<288x128xbf16>
    %c0_87 = arith.constant 0 : index
    %c0_88 = arith.constant 0 : index
    %c0_89 = arith.constant 0 : index
    %79 = vector.load %arg5[%c0_87, %c0_88, %c0_89] : memref<1x288x128xbf16, #tpu.memory_space<vmem>>, vector<1x288x128xbf16>
    %80 = vector.shape_cast %79 : vector<1x288x128xbf16> to vector<288x128xbf16>
    %81 = vector.shape_cast %78 : vector<288x128xbf16> to vector<1x288x128xbf16>
    tpu.vector_store %arg5[%c0_87, %c0_88, %c0_89], %81 {strides = array<i32>} : memref<1x288x128xbf16, #tpu.memory_space<vmem>>, vector<1x288x128xbf16>,
    return
  }
  func.func @transform_0(%arg0: i32, %arg1: i32) -> (i32, i32, i32) {
    %c0_i32 = arith.constant 0 : i32
    %c0_i32_0 = arith.constant 0 : i32
    %c0_i32_1 = arith.constant 0 : i32
    return %arg0, %c0_i32, %c0_i32_0 : i32, i32, i32
  }
  func.func @transform_1(%arg0: i32, %arg1: i32) -> (i32, i32, i32) {
    %c0_i32 = arith.constant 0 : i32
    %c0_i32_0 = arith.constant 0 : i32
    %c0_i32_1 = arith.constant 0 : i32
    return %c0_i32, %c0_i32_0, %arg1 : i32, i32, i32
  }
  func.func @transform_2(%arg0: i32, %arg1: i32) -> (i32, i32) {
    %c0_i32 = arith.constant 0 : i32
    %c0_i32_0 = arith.constant 0 : i32
    return %c0_i32, %arg1 : i32, i32
  }
  func.func @transform_3(%arg0: i32, %arg1: i32) -> (i32, i32, i32) {
    %c0_i32 = arith.constant 0 : i32
    %c0_i32_0 = arith.constant 0 : i32
    return %arg0, %c0_i32, %arg1 : i32, i32, i32
  }
}

</mosaic_0001>

<llo_original>
// kernel: conv_block_forward.1
$region0: #{conv_block_forward.1}
  #allocation0 [shape = 'u32[]', space=smem, size = 0x4, offset = 0x4, fixed_abs, tag = 'smem constant byte address 0x4 - core index']
  #allocation1 [shape = 'u32[144,128]{1,0:T(1,128)}', space=vmem, size = 0x12000, scoped, tag = 'internal scratch']
  #allocation2 [shape = 'f32[288,128]{1,0:T(8,128)}', space=vmem, size = 0x24000, scoped, tag = 'scratch operand']
  %s0 = inlined_call_operand.vmem [shape: bf16[2,328,4], index: 0, kind: input, shape index: {}]
  %s1 = inlined_call_operand.vmem [shape: bf16[9,4,128], index: 1, kind: input, shape index: {}]
  %s2 = inlined_call_operand.vmem [shape: f32[1,128], index: 2, kind: input, shape index: {}]
  %s3 = inlined_call_operand.vmem [shape: bf16[2,288,128], index: 3, kind: output, shape index: {}]
  %s4 = sld [smem:[#allocation0]]
  $region45: #{conv_block_forward.1} parent=0
    _
  %s6 = ssub.s32 1, %s4
  %s7 = scalar_select 0, %s6, %s4
  loop: start=0, step=1, limit=4
  $region2: #{conv_block_forward.1} parent=0 // loop_pre_header
    _
  $region3: #{conv_block_forward.1} parent=0 // loop_header
    %s9 = sphi 0, %s13
    %p10 = scmp.ge.s32.totalorder %s9, 4
    %s16 = sphi 0, %s28
    %s17 = sphi 0, %s24
    %s18 = sphi 0, %s16
    %s19 = sphi 0, %s17
    %s20 = sphi 0, %s18
    %s21 = sphi 0, %s19
    %s31 = sphi 0, %s33
    %s34 = sphi 0, %s31
    %s35 = sphi 0, %s34
    %s51 = sphi 0, %s35
    %s57 = sphi 0, %s59
    %s60 = sphi 0, %s57
    %s61 = sphi 0, %s60
    %s77 = sphi 0, %s61
    %s83 = sphi 0, %s85
    %s86 = sphi 0, %s83
    %s87 = sphi 0, %s86
    %s103 = sphi 0, %s87
    %s111 = sphi 0, %s113
    %s114 = sphi 0, %s111
    %s115 = sphi 0, %s114
    %s131 = sphi 0, %s115
  $region4: #{conv_block_forward.1} parent=0 // loop_header_branch
    %12 = sbr.rel (%p10) target = $region8
  $region5: #{conv_block_forward.1} parent=0 // loop_body
    %s14 = ssub.s32 %s9, 1
    %s15 = ssub.s32 %s9, 2
    %s22 = sadd.s32 1, %s17
    %p23 = scmp.ge.s32.totalorder %s22, 1
    %s24 = scalar_select %p23, 0, %s22
    %s25 = sadd.s32 1, %s16
    %s26 = scalar_select %p23, %s25, %s16
    %p27 = scmp.ge.s32.totalorder %s26, 2
    %s28 = scalar_select %p27, 0, %s26
    %s29 = ssub.s32 %s16, %s28
    %p30 = scmp.eq.s32.totalorder %s29, 0
    %s32 = sadd.s32 %s31, 1
    %s33 = scalar_select %p30, %s31, %s32
    %p36 = pneg %p30
    %p37 = scmp.eq.s32.totalorder %s9, 1
    %p38 = por %p36, %p37
    %p39 = scmp.ne.s32.totalorder %s31, %s34
    %p40 = scmp.eq.s32.totalorder %s9, 0
    %p41 = por %p39, %p40
    %p42 = scmp.ne.s32.totalorder %s31, %s34
    %p43 = scmp.eq.s32.totalorder %s14, 1
    %p44 = por %p42, %p43
    %p45 = scmp.ne.s32.totalorder %s34, %s35
    %p46 = scmp.eq.s32.totalorder %s14, 0
    %p47 = por %p45, %p46
    %p48 = scmp.ne.s32.totalorder %s34, %s35
    %p49 = scmp.eq.s32.totalorder %s15, 1
    %p50 = por %p48, %p49
    %p52 = scmp.ne.s32.totalorder %s35, %s51
    %p53 = scmp.eq.s32.totalorder %s15, 0
    %p54 = por %p52, %p53
    %s55 = ssub.s32 %s17, %s24
    %p56 = scmp.eq.s32.totalorder %s55, 0
    %s58 = sadd.s32 %s57, 1
    %s59 = scalar_select %p56, %s57, %s58
    %p62 = pneg %p56
    %p63 = scmp.eq.s32.totalorder %s9, 1
    %p64 = por %p62, %p63
    %p65 = scmp.ne.s32.totalorder %s57, %s60
    %p66 = scmp.eq.s32.totalorder %s9, 0
    %p67 = por %p65, %p66
    %p68 = scmp.ne.s32.totalorder %s57, %s60
    %p69 = scmp.eq.s32.totalorder %s14, 1
    %p70 = por %p68, %p69
    %p71 = scmp.ne.s32.totalorder %s60, %s61
    %p72 = scmp.eq.s32.totalorder %s14, 0
    %p73 = por %p71, %p72
    %p74 = scmp.ne.s32.totalorder %s60, %s61
    %p75 = scmp.eq.s32.totalorder %s15, 1
    %p76 = por %p74, %p75
    %p78 = scmp.ne.s32.totalorder %s61, %s77
    %p79 = scmp.eq.s32.totalorder %s15, 0
    %p80 = por %p78, %p79
    %s81 = ssub.s32 %s17, %s24
    %p82 = scmp.eq.s32.totalorder %s81, 0
    %s84 = sadd.s32 %s83, 1
    %s85 = scalar_select %p82, %s83, %s84
    %p88 = pneg %p82
    %p89 = scmp.eq.s32.totalorder %s9, 1
    %p90 = por %p88, %p89
    %p91 = scmp.ne.s32.totalorder %s83, %s86
    %p92 = scmp.eq.s32.totalorder %s9, 0
    %p93 = por %p91, %p92
    %p94 = scmp.ne.s32.totalorder %s83, %s86
    %p95 = scmp.eq.s32.totalorder %s14, 1
    %p96 = por %p94, %p95
    %p97 = scmp.ne.s32.totalorder %s86, %s87
    %p98 = scmp.eq.s32.totalorder %s14, 0
    %p99 = por %p97, %p98
    %p100 = scmp.ne.s32.totalorder %s86, %s87
    %p101 = scmp.eq.s32.totalorder %s15, 1
    %p102 = por %p100, %p101
    %p104 = scmp.ne.s32.totalorder %s87, %s103
    %p105 = scmp.eq.s32.totalorder %s15, 0
    %p106 = por %p104, %p105
    %s107 = ssub.s32 %s16, %s28
    %s108 = ssub.s32 %s17, %s24
    %s109 = sor.u32 %s107, %s108
    %p110 = scmp.eq.s32.totalorder %s109, 0
    %s112 = sadd.s32 %s111, 1
    %s113 = scalar_select %p110, %s111, %s112
    %p116 = pneg %p110
    %p117 = scmp.eq.s32.totalorder %s9, 1
    %p118 = por %p116, %p117
    %p119 = scmp.ne.s32.totalorder %s111, %s114
    %p120 = scmp.eq.s32.totalorder %s9, 0
    %p121 = por %p119, %p120
    %p122 = scmp.ne.s32.totalorder %s111, %s114
    %p123 = scmp.eq.s32.totalorder %s14, 1
    %p124 = por %p122, %p123
    %p125 = scmp.ne.s32.totalorder %s114, %s115
    %p126 = scmp.eq.s32.totalorder %s14, 0
    %p127 = por %p125, %p126
    %p128 = scmp.ne.s32.totalorder %s114, %s115
    %p129 = scmp.eq.s32.totalorder %s15, 1
    %p130 = por %p128, %p129
    %p132 = scmp.ne.s32.totalorder %s115, %s131
    %p133 = scmp.eq.s32.totalorder %s15, 0
    %p134 = por %p132, %p133
    %p135 = scmp.le.s32.totalorder 1, %s9
    %p136 = scmp.lt.s32.totalorder %s9, 3
    %p137 = pnand %p135, %p136
    %p138 = pneg %p137
    // Predicated region
    $region9: #{conv_block_forward.1} parent=5 // pred_check
      _
    $region10: #{conv_block_forward.1} parent=5 // pred_check_branch
      %140 = sbr.rel (%p137) target = $region12
    $region11: #{conv_block_forward.1} parent=5 // pred_region
      %s141 = ssub.s32 %s9, 1
      // Predicated region
      $region13: #{conv_block_forward.1} parent=11 // pred_check
        %p142 = pneg %p73
      $region14: #{conv_block_forward.1} parent=11 // pred_check_branch
        %144 = sbr.rel (%p142) target = $region16
      $region15: #{conv_block_forward.1} parent=11 // pred_region
        %p145 = scmp.lt.s32.totalorder %s19, 0
        %s146 = scalar_select %p145, %s19, 0
        %s147 = smul.addr %s146, 2
        %s148 = scalar_lea.vmem %s1, %s147
      $region16: #{conv_block_forward.1} parent=11 // pred_fallthru
        _
      // Predicated region
      $region17: #{conv_block_forward.1} parent=11 // pred_check
        %p149 = pneg %p99
      $region18: #{conv_block_forward.1} parent=11 // pred_check_branch
        %151 = sbr.rel (%p149) target = $region20
      $region19: #{conv_block_forward.1} parent=11 // pred_region
        %p152 = scmp.lt.s32.totalorder %s19, 0
        %s153 = scalar_select %p152, %s19, 0
        %s154 = scalar_lea.vmem %s2, %s153
      $region20: #{conv_block_forward.1} parent=11 // pred_fallthru
        _
    $region12: #{conv_block_forward.1} parent=5 // pred_fallthru
      _
    %p155 = scmp.lt.s32.totalorder %s9, 2
    // Predicated region
    $region21: #{conv_block_forward.1} parent=5 // pred_check
      %p156 = pneg %p155
    $region22: #{conv_block_forward.1} parent=5 // pred_check_branch
      %158 = sbr.rel (%p156) target = $region24
    $region23: #{conv_block_forward.1} parent=5 // pred_region
      // Predicated region
      $region25: #{conv_block_forward.1} parent=23 // pred_check
        %p159 = pneg %p41
      $region26: #{conv_block_forward.1} parent=23 // pred_check_branch
        %161 = sbr.rel (%p159) target = $region28
      $region27: #{conv_block_forward.1} parent=23 // pred_region
        %p162 = scmp.lt.s32.totalorder %s16, 1
        %s163 = scalar_select %p162, %s16, 1
        %s164 = smul.addr %s163, 41
        %s165 = smul.addr %s164, 4
        %s166 = scalar_lea.vmem %s0, %s165
      $region28: #{conv_block_forward.1} parent=23 // pred_fallthru
        _
    $region24: #{conv_block_forward.1} parent=5 // pred_fallthru
      _
    %p167 = scmp.le.s32.totalorder 1, %s9
    %p168 = scmp.lt.s32.totalorder %s9, 3
    %p169 = pnand %p167, %p168
    %p170 = pneg %p169
    // Predicated region
    $region29: #{conv_block_forward.1} parent=5 // pred_check
      _
    $region30: #{conv_block_forward.1} parent=5 // pred_check_branch
      %172 = sbr.rel (%p169) target = $region32
    $region31: #{conv_block_forward.1} parent=5 // pred_region
      %s173 = ssub.s32 %s9, 1
      %p174 = scmp.lt.s32.totalorder %s18, 1
      %s175 = scalar_select %p174, %s18, 1
      %s176 = smul.addr %s175, 41
      %s177 = smul.addr %s176, 4
      %s178 = scalar_lea.vmem %s0, %s177
      %p179 = pneg %p47
      %p180 = pneg %p44
      %p181 = scmp.lt.s32.totalorder %s19, 0
      %s182 = scalar_select %p181, %s19, 0
      %s183 = smul.addr %s182, 2
      %s184 = scalar_lea.vmem %s1, %s183
      %p185 = pneg %p73
      %p186 = pneg %p70
      %p187 = scmp.lt.s32.totalorder %s19, 0
      %s188 = scalar_select %p187, %s19, 0
      %s189 = scalar_lea.vmem %s2, %s188
      %p190 = pneg %p99
      %p191 = pneg %p96
      %p192 = pneg %p127
      %p193 = pneg %p124
      %p194 = scmp.lt.s32.totalorder %s18, 1
      %s195 = scalar_select %p194, %s18, 1
      %p196 = scmp.lt.s32.totalorder %s19, 0
      %s197 = scalar_select %p196, %s19, 0
      %s198 = smul.addr %s195, 36
      %s199 = sadd.s32 %s197, %s198
      %s200 = smul.addr %s199, 4
      %s201 = scalar_lea.vmem %s3, %s200
      %p202 = scmp.lt.s32.totalorder %s18, 1
      %s203 = scalar_select %p202, %s18, 1
      %s204 = smul.addr %s203, 41
      %s205 = smul.addr %s204, 4
      %s206 = scalar_lea.vmem %s0, %s205
      %p207 = scmp.lt.s32.totalorder %s19, 0
      %s208 = scalar_select %p207, %s19, 0
      %s209 = smul.addr %s208, 2
      %s210 = scalar_lea.vmem %s1, %s209
      %p211 = scmp.lt.s32.totalorder %s19, 0
      %s212 = scalar_select %p211, %s19, 0
      %s213 = scalar_lea.vmem %s2, %s212
      %p214 = scmp.lt.s32.totalorder %s18, 1
      %s215 = scalar_select %p214, %s18, 1
      %p216 = scmp.lt.s32.totalorder %s19, 0
      %s217 = scalar_select %p216, %s19, 0
      %s218 = smul.addr %s215, 36
      %s219 = sadd.s32 %s217, %s218
      %s220 = smul.addr %s219, 4
      %s221 = scalar_lea.vmem %s3, %s220
      %v223 = vld [vmem:[%s206] sm:$0xf]
      %v224 = vld [vmem:[%s206 + $0x4] sm:$0xf]
      %v225 = vld [vmem:[%s206 + $0x8] sm:$0xf]
      %v226 = vld [vmem:[%s206 + $0xc] sm:$0xf]
      %v227 = vld [vmem:[%s206 + $0x10] sm:$0xf]
      %v228 = vld [vmem:[%s206 + $0x14] sm:$0xf]
      %v229 = vld [vmem:[%s206 + $0x18] sm:$0xf]
      %v230 = vld [vmem:[%s206 + $0x1c] sm:$0xf]
      %v231 = vld [vmem:[%s206 + $0x20] sm:$0xf]
      %v232 = vld [vmem:[%s206 + $0x24] sm:$0xf]
      %v233 = vld [vmem:[%s206 + $0x28] sm:$0xf]
      %v234 = vld [vmem:[%s206 + $0x2c] sm:$0xf]
      %v235 = vld [vmem:[%s206 + $0x30] sm:$0xf]
      %v236 = vld [vmem:[%s206 + $0x34] sm:$0xf]
      %v237 = vld [vmem:[%s206 + $0x38] sm:$0xf]
      %v238 = vld [vmem:[%s206 + $0x3c] sm:$0xf]
      %v239 = vld [vmem:[%s206 + $0x40] sm:$0xf]
      %v240 = vld [vmem:[%s206 + $0x44] sm:$0xf]
      %v241 = vld [vmem:[%s206 + $0x48] sm:$0xf]
      %v242 = vld [vmem:[%s206 + $0x4c] sm:$0xf]
      %v243 = vld [vmem:[%s206 + $0x50] sm:$0xf]
      %v244 = vld [vmem:[%s206 + $0x54] sm:$0xf]
      %v245 = vld [vmem:[%s206 + $0x58] sm:$0xf]
      %v246 = vld [vmem:[%s206 + $0x5c] sm:$0xf]
      %v247 = vld [vmem:[%s206 + $0x60] sm:$0xf]
      %v248 = vld [vmem:[%s206 + $0x64] sm:$0xf]
      %v249 = vld [vmem:[%s206 + $0x68] sm:$0xf]
      %v250 = vld [vmem:[%s206 + $0x6c] sm:$0xf]
      %v251 = vld [vmem:[%s206 + $0x70] sm:$0xf]
      %v252 = vld [vmem:[%s206 + $0x74] sm:$0xf]
      %v253 = vld [vmem:[%s206 + $0x78] sm:$0xf]
      %v254 = vld [vmem:[%s206 + $0x7c] sm:$0xf]
      %v255 = vld [vmem:[%s206 + $0x80] sm:$0xf]
      %v256 = vld [vmem:[%s206 + $0x84] sm:$0xf]
      %v257 = vld [vmem:[%s206 + $0x88] sm:$0xf]
      %v258 = vld [vmem:[%s206 + $0x8c] sm:$0xf]
      %v259 = vld [vmem:[%s210] sm:$0x3]
      %v296 = vunpack.c.l.b16 %v223
      %v297 = vunpack.c.l.b16 %v224
      %v298 = vunpack.c.l.b16 %v225
      %v299 = vunpack.c.l.b16 %v226
      %v300 = vunpack.c.l.b16 %v227
      %v301 = vunpack.c.l.b16 %v228
      %v302 = vunpack.c.l.b16 %v229
      %v303 = vunpack.c.l.b16 %v230
      %v304 = vunpack.c.l.b16 %v231
      %v305 = vunpack.c.l.b16 %v232
      %v306 = vunpack.c.l.b16 %v233
      %v307 = vunpack.c.l.b16 %v234
      %v308 = vunpack.c.l.b16 %v235
      %v309 = vunpack.c.l.b16 %v236
      %v310 = vunpack.c.l.b16 %v237
      %v311 = vunpack.c.l.b16 %v238
      %v312 = vunpack.c.l.b16 %v239
      %v313 = vunpack.c.l.b16 %v240
      %v314 = vunpack.c.l.b16 %v241
      %v315 = vunpack.c.l.b16 %v242
      %v316 = vunpack.c.l.b16 %v243
      %v317 = vunpack.c.l.b16 %v244
      %v318 = vunpack.c.l.b16 %v245
      %v319 = vunpack.c.l.b16 %v246
      %v320 = vunpack.c.l.b16 %v247
      %v321 = vunpack.c.l.b16 %v248
      %v322 = vunpack.c.l.b16 %v249
      %v323 = vunpack.c.l.b16 %v250
      %v324 = vunpack.c.l.b16 %v251
      %v325 = vunpack.c.l.b16 %v252
      %v326 = vunpack.c.l.b16 %v253
      %v327 = vunpack.c.l.b16 %v254
      %v328 = vunpack.c.l.b16 %v255
      %v329 = vunpack.c.l.b16 %v256
      %v330 = vunpack.c.l.b16 %v257
      %v331 = vunpack.c.l.b16 %v258
      %v332 = vpack.c.b16 %v297, %v296
      %v333 = vpack.c.b16 %v299, %v298
      %v334 = vpack.c.b16 %v301, %v300
      %v335 = vpack.c.b16 %v303, %v302
      %v336 = vpack.c.b16 %v305, %v304
      %v337 = vpack.c.b16 %v307, %v306
      %v338 = vpack.c.b16 %v309, %v308
      %v339 = vpack.c.b16 %v311, %v310
      %v340 = vpack.c.b16 %v313, %v312
      %v341 = vpack.c.b16 %v315, %v314
      %v342 = vpack.c.b16 %v317, %v316
      %v343 = vpack.c.b16 %v319, %v318
      %v344 = vpack.c.b16 %v321, %v320
      %v345 = vpack.c.b16 %v323, %v322
      %v346 = vpack.c.b16 %v325, %v324
      %v347 = vpack.c.b16 %v327, %v326
      %v348 = vpack.c.b16 %v329, %v328
      %v349 = vpack.c.b16 %v331, %v330
      %vm350 = vcmask 31744
      %v352 = vsel %vm350, %v332, 0
      %v355 = vsel %vm350, %v333, 0
      %v358 = vsel %vm350, %v334, 0
      %v361 = vsel %vm350, %v335, 0
      %v364 = vsel %vm350, %v336, 0
      %v367 = vsel %vm350, %v337, 0
      %v370 = vsel %vm350, %v338, 0
      %v373 = vsel %vm350, %v339, 0
      %v376 = vsel %vm350, %v340, 0
      %v379 = vsel %vm350, %v341, 0
      %v382 = vsel %vm350, %v342, 0
      %v385 = vsel %vm350, %v343, 0
      %v388 = vsel %vm350, %v344, 0
      %v391 = vsel %vm350, %v345, 0
      %v394 = vsel %vm350, %v346, 0
      %v397 = vsel %vm350, %v347, 0
      %v400 = vsel %vm350, %v348, 0
      %v403 = vsel %vm350, %v349, 0
      %vm405 = vcmask 1041408
      %v407 = vsel %vm405, %v259, 0
      %409 = vmatprep.subr.bf16.mxu0 0
      %410 = vmatpush1.bf16.msra.mxu0 %v407
      %411 = vmatprep.subr.bf16.mxu0 0
      %412 = vmatpush1.bf16.msra.mxu0 0
      %413 = vmatprep.subr.bf16.mxu0 0
      %414 = vmatpush1.bf16.msra.mxu0 0
      %415 = vmatprep.subr.bf16.mxu0 0
      %416 = vmatpush1.bf16.msra.mxu0 0
      %417 = vmatprep.subr.bf16.mxu0 0
      %418 = vmatpush1.bf16.msra.mxu0 0
      %419 = vmatprep.subr.bf16.mxu0 0
      %420 = vmatpush1.bf16.msra.mxu0 0
      %421 = vmatprep.subr.bf16.mxu0 0
      %422 = vmatpush1.bf16.msra.mxu0 0
      %423 = vmatprep.subr.bf16.mxu0 0
      %424 = vmatpush1.bf16.msra.mxu0 0
      %425 = vmatprep.subr.bf16.mxu0 0
      %426 = vmatpush1.bf16.msra.mxu0 0
      %427 = vmatprep.subr.bf16.mxu0 0
      %428 = vmatpush1.bf16.msra.mxu0 0
      %429 = vmatprep.subr.bf16.mxu0 0
      %430 = vmatpush1.bf16.msra.mxu0 0
      %431 = vmatprep.subr.bf16.mxu0 0
      %432 = vmatpush1.bf16.msra.mxu0 0
      %433 = vmatprep.subr.bf16.mxu0 0
      %434 = vmatpush1.bf16.msra.mxu0 0
      %435 = vmatprep.subr.bf16.mxu0 0
      %436 = vmatpush1.bf16.msra.mxu0 0
      %437 = vmatprep.subr.bf16.mxu0 0
      %438 = vmatpush1.bf16.msra.mxu0 0
      %439 = vmatprep.subr.bf16.mxu0 0
      %440 = vmatpush1.bf16.msra.mxu0 0
      %441 = vmatprep.mubr.bf16.mxu0 0
      %442 = vmatmul.mubr.bf16.gmra.mrb[0].mxu0 %v352
      %v443 = vpop.f32.mrb[0].mxu0
      %v444 = vadd.f32 0.0, %v443
      %v445 = vpop.f32.mrb[0].mxu0
      %v446 = vpop.f32.mrb[0].mxu0
      %v447 = vadd.f32 0.0, %v446
      %v448 = vpop.f32.mrb[0].mxu0
      %449 = vmatprep.mubr.bf16.mxu0 0
      %450 = vmatmul.mubr.bf16.gmra.mrb[0].mxu0 %v355
      %v451 = vpop.f32.mrb[0].mxu0
      %v452 = vadd.f32 0.0, %v451
      %v453 = vpop.f32.mrb[0].mxu0
      %v454 = vpop.f32.mrb[0].mxu0
      %v455 = vadd.f32 0.0, %v454
      %v456 = vpop.f32.mrb[0].mxu0
      %457 = vmatprep.mubr.bf16.mxu0 0
      %458 = vmatmul.mubr.bf16.gmra.mrb[0].mxu0 %v358
      %v459 = vpop.f32.mrb[0].mxu0
      %v460 = vadd.f32 0.0, %v459
      %v461 = vpop.f32.mrb[0].mxu0
      %v462 = vpop.f32.mrb[0].mxu0
      %v463 = vadd.f32 0.0, %v462
      %v464 = vpop.f32.mrb[0].mxu0
      %465 = vmatprep.mubr.bf16.mxu0 0
      %466 = vmatmul.mubr.bf16.gmra.mrb[0].mxu0 %v361
      %v467 = vpop.f32.mrb[0].mxu0
      %v468 = vadd.f32 0.0, %v467
      %v469 = vpop.f32.mrb[0].mxu0
      %v470 = vpop.f32.mrb[0].mxu0
      %v471 = vadd.f32 0.0, %v470
      %v472 = vpop.f32.mrb[0].mxu0
      %473 = vmatprep.mubr.bf16.mxu0 0
      %474 = vmatmul.mubr.bf16.gmra.mrb[0].mxu0 %v364
      %v475 = vpop.f32.mrb[0].mxu0
      %v476 = vadd.f32 0.0, %v475
      %v477 = vpop.f32.mrb[0].mxu0
      %v478 = vpop.f32.mrb[0].mxu0
      %v479 = vadd.f32 0.0, %v478
      %v480 = vpop.f32.mrb[0].mxu0
      %481 = vmatprep.mubr.bf16.mxu0 0
      %482 = vmatmul.mubr.bf16.gmra.mrb[0].mxu0 %v367
      %v483 = vpop.f32.mrb[0].mxu0
      %v484 = vadd.f32 0.0, %v483
      %v485 = vpop.f32.mrb[0].mxu0
      %v486 = vpop.f32.mrb[0].mxu0
      %v487 = vadd.f32 0.0, %v486
      %v488 = vpop.f32.mrb[0].mxu0
      %489 = vmatprep.mubr.bf16.mxu0 0
      %490 = vmatmul.mubr.bf16.gmra.mrb[0].mxu0 %v370
      %v491 = vpop.f32.mrb[0].mxu0
      %v492 = vadd.f32 0.0, %v491
      %v493 = vpop.f32.mrb[0].mxu0
      %v494 = vpop.f32.mrb[0].mxu0
      %v495 = vadd.f32 0.0, %v494
      %v496 = vpop.f32.mrb[0].mxu0
      %497 = vmatprep.mubr.bf16.mxu0 0
      %498 = vmatmul.mubr.bf16.gmra.mrb[0].mxu0 %v373
      %v499 = vpop.f32.mrb[0].mxu0
      %v500 = vadd.f32 0.0, %v499
      %v501 = vpop.f32.mrb[0].mxu0
      %v502 = vpop.f32.mrb[0].mxu0
      %v503 = vadd.f32 0.0, %v502
      %v504 = vpop.f32.mrb[0].mxu0
      %505 = vmatprep.mubr.bf16.mxu0 0
      %506 = vmatmul.mubr.bf16.gmra.mrb[0].mxu0 %v376
      %v507 = vpop.f32.mrb[0].mxu0
      %v508 = vadd.f32 0.0, %v507
      %v509 = vpop.f32.mrb[0].mxu0
      %v510 = vpop.f32.mrb[0].mxu0
      %v511 = vadd.f32 0.0, %v510
      %v512 = vpop.f32.mrb[0].mxu0
      %513 = vmatprep.mubr.bf16.mxu0 0
      %514 = vmatmul.mubr.bf16.gmra.mrb[0].mxu0 %v379
      %v515 = vpop.f32.mrb[0].mxu0
      %v516 = vadd.f32 0.0, %v515
      %v517 = vpop.f32.mrb[0].mxu0
      %v518 = vpop.f32.mrb[0].mxu0
      %v519 = vadd.f32 0.0, %v518
      %v520 = vpop.f32.mrb[0].mxu0
      %521 = vmatprep.mubr.bf16.mxu0 0
      %522 = vmatmul.mubr.bf16.gmra.mrb[0].mxu0 %v382
      %v523 = vpop.f32.mrb[0].mxu0
      %v524 = vadd.f32 0.0, %v523
      %v525 = vpop.f32.mrb[0].mxu0
      %v526 = vpop.f32.mrb[0].mxu0
      %v527 = vadd.f32 0.0, %v526
      %v528 = vpop.f32.mrb[0].mxu0
      %529 = vmatprep.mubr.bf16.mxu0 0
      %530 = vmatmul.mubr.bf16.gmra.mrb[0].mxu0 %v385
      %v531 = vpop.f32.mrb[0].mxu0
      %v532 = vadd.f32 0.0, %v531
      %v533 = vpop.f32.mrb[0].mxu0
      %v534 = vpop.f32.mrb[0].mxu0
      %v535 = vadd.f32 0.0, %v534
      %v536 = vpop.f32.mrb[0].mxu0
      %537 = vmatprep.mubr.bf16.mxu0 0
      %538 = vmatmul.mubr.bf16.gmra.mrb[0].mxu0 %v388
      %v539 = vpop.f32.mrb[0].mxu0
      %v540 = vadd.f32 0.0, %v539
      %v541 = vpop.f32.mrb[0].mxu0
      %v542 = vpop.f32.mrb[0].mxu0
      %v543 = vadd.f32 0.0, %v542
      %v544 = vpop.f32.mrb[0].mxu0
      %545 = vmatprep.mubr.bf16.mxu0 0
      %546 = vmatmul.mubr.bf16.gmra.mrb[0].mxu0 %v391
      %v547 = vpop.f32.mrb[0].mxu0
      %v548 = vadd.f32 0.0, %v547
      %v549 = vpop.f32.mrb[0].mxu0
      %v550 = vpop.f32.mrb[0].mxu0
      %v551 = vadd.f32 0.0, %v550
      %v552 = vpop.f32.mrb[0].mxu0
      %553 = vmatprep.mubr.bf16.mxu0 0
      %554 = vmatmul.mubr.bf16.gmra.mrb[0].mxu0 %v394
      %v555 = vpop.f32.mrb[0].mxu0
      %v556 = vadd.f32 0.0, %v555
      %v557 = vpop.f32.mrb[0].mxu0
      %v558 = vpop.f32.mrb[0].mxu0
      %v559 = vadd.f32 0.0, %v558
      %v560 = vpop.f32.mrb[0].mxu0
      %561 = vmatprep.mubr.bf16.mxu0 0
      %562 = vmatmul.mubr.bf16.gmra.mrb[0].mxu0 %v397
      %v563 = vpop.f32.mrb[0].mxu0
      %v564 = vadd.f32 0.0, %v563
      %v565 = vpop.f32.mrb[0].mxu0
      %v566 = vpop.f32.mrb[0].mxu0
      %v567 = vadd.f32 0.0, %v566
      %v568 = vpop.f32.mrb[0].mxu0
      %569 = vmatprep.mubr.bf16.mxu0 0
      %570 = vmatmul.mubr.bf16.gmra.mrb[0].mxu0 %v400
      %v571 = vpop.f32.mrb[0].mxu0
      %v572 = vadd.f32 0.0, %v571
      %v573 = vpop.f32.mrb[0].mxu0
      %v574 = vpop.f32.mrb[0].mxu0
      %v575 = vadd.f32 0.0, %v574
      %v576 = vpop.f32.mrb[0].mxu0
      %577 = vmatprep.mubr.bf16.mxu0 0
      %578 = vmatmul.mubr.bf16.gmra.mrb[0].mxu0 %v403
      %v579 = vpop.f32.mrb[0].mxu0
      %v580 = vadd.f32 0.0, %v579
      %v581 = vpop.f32.mrb[0].mxu0
      %v582 = vpop.f32.mrb[0].mxu0
      %v583 = vadd.f32 0.0, %v582
      %v584 = vpop.f32.mrb[0].mxu0
      %585 = vdwg.mxu0
      %586 = vst [vmem:[#allocation2] sm:$0xff] %v444
      %587 = vst [vmem:[#allocation2 + $0x8] sm:$0xff] %v447
      %588 = vst [vmem:[#allocation2 + $0x10] sm:$0xff] %v452
      %589 = vst [vmem:[#allocation2 + $0x18] sm:$0xff] %v455
      %590 = vst [vmem:[#allocation2 + $0x20] sm:$0xff] %v460
      %591 = vst [vmem:[#allocation2 + $0x28] sm:$0xff] %v463
      %592 = vst [vmem:[#allocation2 + $0x30] sm:$0xff] %v468
      %593 = vst [vmem:[#allocation2 + $0x38] sm:$0xff] %v471
      %594 = vst [vmem:[#allocation2 + $0x40] sm:$0xff] %v476
      %595 = vst [vmem:[#allocation2 + $0x48] sm:$0xff] %v479
      %596 = vst [vmem:[#allocation2 + $0x50] sm:$0xff] %v484
      %597 = vst [vmem:[#allocation2 + $0x58] sm:$0xff] %v487
      %598 = vst [vmem:[#allocation2 + $0x60] sm:$0xff] %v492
      %599 = vst [vmem:[#allocation2 + $0x68] sm:$0xff] %v495
      %600 = vst [vmem:[#allocation2 + $0x70] sm:$0xff] %v500
      %601 = vst [vmem:[#allocation2 + $0x78] sm:$0xff] %v503
      %602 = vst [vmem:[#allocation2 + $0x80] sm:$0xff] %v508
      %603 = vst [vmem:[#allocation2 + $0x88] sm:$0xff] %v511
      %604 = vst [vmem:[#allocation2 + $0x90] sm:$0xff] %v516
      %605 = vst [vmem:[#allocation2 + $0x98] sm:$0xff] %v519
      %606 = vst [vmem:[#allocation2 + $0xa0] sm:$0xff] %v524
      %607 = vst [vmem:[#allocation2 + $0xa8] sm:$0xff] %v527
      %608 = vst [vmem:[#allocation2 + $0xb0] sm:$0xff] %v532
      %609 = vst [vmem:[#allocation2 + $0xb8] sm:$0xff] %v535
      %610 = vst [vmem:[#allocation2 + $0xc0] sm:$0xff] %v540
      %611 = vst [vmem:[#allocation2 + $0xc8] sm:$0xff] %v543
      %612 = vst [vmem:[#allocation2 + $0xd0] sm:$0xff] %v548
      %613 = vst [vmem:[#allocation2 + $0xd8] sm:$0xff] %v551
      %614 = vst [vmem:[#allocation2 + $0xe0] sm:$0xff] %v556
      %615 = vst [vmem:[#allocation2 + $0xe8] sm:$0xff] %v559
      %616 = vst [vmem:[#allocation2 + $0xf0] sm:$0xff] %v564
      %617 = vst [vmem:[#allocation2 + $0xf8] sm:$0xff] %v567
      %618 = vst [vmem:[#allocation2 + $0x100] sm:$0xff] %v572
      %619 = vst [vmem:[#allocation2 + $0x108] sm:$0xff] %v575
      %620 = vst [vmem:[#allocation2 + $0x110] sm:$0xff] %v580
      %621 = vst [vmem:[#allocation2 + $0x118] sm:$0xff] %v583
      %v622 = vld [vmem:[%s206] sm:$0xf]
      %v623 = vld [vmem:[%s206 + $0x4] sm:$0xf]
      %v624 = vld [vmem:[%s206 + $0x8] sm:$0xf]
      %v625 = vld [vmem:[%s206 + $0xc] sm:$0xf]
      %v626 = vld [vmem:[%s206 + $0x10] sm:$0xf]
      %v627 = vld [vmem:[%s206 + $0x14] sm:$0xf]
      %v628 = vld [vmem:[%s206 + $0x18] sm:$0xf]
      %v629 = vld [vmem:[%s206 + $0x1c] sm:$0xf]
      %v630 = vld [vmem:[%s206 + $0x20] sm:$0xf]
      %v631 = vld [vmem:[%s206 + $0x24] sm:$0xf]
      %v632 = vld [vmem:[%s206 + $0x28] sm:$0xf]
      %v633 = vld [vmem:[%s206 + $0x2c] sm:$0xf]
      %v634 = vld [vmem:[%s206 + $0x30] sm:$0xf]
      %v635 = vld [vmem:[%s206 + $0x34] sm:$0xf]
      %v636 = vld [vmem:[%s206 + $0x38] sm:$0xf]
      %v637 = vld [vmem:[%s206 + $0x3c] sm:$0xf]
      %v638 = vld [vmem:[%s206 + $0x40] sm:$0xf]
      %v639 = vld [vmem:[%s206 + $0x44] sm:$0xf]
      %v640 = vld [vmem:[%s206 + $0x48] sm:$0xf]
      %v641 = vld [vmem:[%s206 + $0x4c] sm:$0xf]
      %v642 = vld [vmem:[%s206 + $0x50] sm:$0xf]
      %v643 = vld [vmem:[%s206 + $0x54] sm:$0xf]
      %v644 = vld [vmem:[%s206 + $0x58] sm:$0xf]
      %v645 = vld [vmem:[%s206 + $0x5c] sm:$0xf]
      %v646 = vld [vmem:[%s206 + $0x60] sm:$0xf]
      %v647 = vld [vmem:[%s206 + $0x64] sm:$0xf]
      %v648 = vld [vmem:[%s206 + $0x68] sm:$0xf]
      %v649 = vld [vmem:[%s206 + $0x6c] sm:$0xf]
      %v650 = vld [vmem:[%s206 + $0x70] sm:$0xf]
      %v651 = vld [vmem:[%s206 + $0x74] sm:$0xf]
      %v652 = vld [vmem:[%s206 + $0x78] sm:$0xf]
      %v653 = vld [vmem:[%s206 + $0x7c] sm:$0xf]
      %v654 = vld [vmem:[%s206 + $0x80] sm:$0xf]
      %v655 = vld [vmem:[%s206 + $0x84] sm:$0xf]
      %v656 = vld [vmem:[%s206 + $0x88] sm:$0xf]
      %v657 = vld [vmem:[%s206 + $0x8c] sm:$0xf]
      %v658 = vld [vmem:[%s206 + $0x90] sm:$0x1]
      %s659 = scalar_lea.vmem %s210, 2
      %v660 = vld [vmem:[%s659] sm:$0x3]
      %v698 = vunpack.c.l.b16 %v622
      %v699 = vunpack.c.l.b16 %v623
      %v700 = vunpack.c.l.b16 %v624
      %v701 = vunpack.c.l.b16 %v625
      %v702 = vunpack.c.l.b16 %v626
      %v703 = vunpack.c.l.b16 %v627
      %v704 = vunpack.c.l.b16 %v628
      %v705 = vunpack.c.l.b16 %v629
      %v706 = vunpack.c.l.b16 %v630
      %v707 = vunpack.c.l.b16 %v631
      %v708 = vunpack.c.l.b16 %v632
      %v709 = vunpack.c.l.b16 %v633
      %v710 = vunpack.c.l.b16 %v634
      %v711 = vunpack.c.l.b16 %v635
      %v712 = vunpack.c.l.b16 %v636
      %v713 = vunpack.c.l.b16 %v637
      %v714 = vunpack.c.l.b16 %v638
      %v715 = vunpack.c.l.b16 %v639
      %v716 = vunpack.c.l.b16 %v640
      %v717 = vunpack.c.l.b16 %v641
      %v718 = vunpack.c.l.b16 %v642
      %v719 = vunpack.c.l.b16 %v643
      %v720 = vunpack.c.l.b16 %v644
      %v721 = vunpack.c.l.b16 %v645
      %v722 = vunpack.c.l.b16 %v646
      %v723 = vunpack.c.l.b16 %v647
      %v724 = vunpack.c.l.b16 %v648
      %v725 = vunpack.c.l.b16 %v649
      %v726 = vunpack.c.l.b16 %v650
      %v727 = vunpack.c.l.b16 %v651
      %v728 = vunpack.c.l.b16 %v652
      %v729 = vunpack.c.l.b16 %v653
      %v730 = vunpack.c.l.b16 %v654
      %v731 = vunpack.c.l.b16 %v655
      %v732 = vunpack.c.l.b16 %v656
      %v733 = vunpack.c.l.b16 %v657
      %v734 = vunpack.c.l.b16 %v658
      %v735 = vpack.c.b16 %v699, %v698
      %v736 = vpack.c.b16 %v701, %v700
      %v737 = vpack.c.b16 %v703, %v702
      %v738 = vpack.c.b16 %v705, %v704
      %v739 = vpack.c.b16 %v707, %v706
      %v740 = vpack.c.b16 %v709, %v708
      %v741 = vpack.c.b16 %v711, %v710
      %v742 = vpack.c.b16 %v713, %v712
      %v743 = vpack.c.b16 %v715, %v714
      %v744 = vpack.c.b16 %v717, %v716
      %v745 = vpack.c.b16 %v719, %v718
      %v746 = vpack.c.b16 %v721, %v720
      %v747 = vpack.c.b16 %v723, %v722
      %v748 = vpack.c.b16 %v725, %v724
      %v749 = vpack.c.b16 %v727, %v726
      %v750 = vpack.c.b16 %v729, %v728
      %v751 = vpack.c.b16 %v731, %v730
      %v752 = vpack.c.b16 %v733, %v732
      %v753 = vpack.c.b16 %v734, %v734
      %vm754 = vsmask.f32 7424
      %v756 = vshrl.u32 %v735, 16
      %v758 = vshll.u32 %v735, 16
      %v760 = vrot.slane %v758, 1
      %v761 = vor.u32 %v756, %v760
      %v763 = vshll.u32 %v736, 16
      %v765 = vrot.slane %v763, 1
      %v766 = vsel %vm754, %v761, %v765
      %v767 = vshrl.u32 %v736, 16
      %v769 = vor.u32 %v767, %v765
      %v771 = vshll.u32 %v737, 16
      %v773 = vrot.slane %v771, 1
      %v774 = vsel %vm754, %v769, %v773
      %v775 = vshrl.u32 %v737, 16
      %v777 = vor.u32 %v775, %v773
      %v779 = vshll.u32 %v738, 16
      %v781 = vrot.slane %v779, 1
      %v782 = vsel %vm754, %v777, %v781
      %v783 = vshrl.u32 %v738, 16
      %v785 = vor.u32 %v783, %v781
      %v787 = vshll.u32 %v739, 16
      %v789 = vrot.slane %v787, 1
      %v790 = vsel %vm754, %v785, %v789
      %v791 = vshrl.u32 %v739, 16
      %v793 = vor.u32 %v791, %v789
      %v795 = vshll.u32 %v740, 16
      %v797 = vrot.slane %v795, 1
      %v798 = vsel %vm754, %v793, %v797
      %v799 = vshrl.u32 %v740, 16
      %v801 = vor.u32 %v799, %v797
      %v803 = vshll.u32 %v741, 16
      %v805 = vrot.slane %v803, 1
      %v806 = vsel %vm754, %v801, %v805
      %v807 = vshrl.u32 %v741, 16
      %v809 = vor.u32 %v807, %v805
      %v811 = vshll.u32 %v742, 16
      %v813 = vrot.slane %v811, 1
      %v814 = vsel %vm754, %v809, %v813
      %v815 = vshrl.u32 %v742, 16
      %v817 = vor.u32 %v815, %v813
      %v819 = vshll.u32 %v743, 16
      %v821 = vrot.slane %v819, 1
      %v822 = vsel %vm754, %v817, %v821
      %v823 = vshrl.u32 %v743, 16
      %v825 = vor.u32 %v823, %v821
      %v827 = vshll.u32 %v744, 16
      %v829 = vrot.slane %v827, 1
      %v830 = vsel %vm754, %v825, %v829
      %v831 = vshrl.u32 %v744, 16
      %v833 = vor.u32 %v831, %v829
      %v835 = vshll.u32 %v745, 16
      %v837 = vrot.slane %v835, 1
      %v838 = vsel %vm754, %v833, %v837
      %v839 = vshrl.u32 %v745, 16
      %v841 = vor.u32 %v839, %v837
      %v843 = vshll.u32 %v746, 16
      %v845 = vrot.slane %v843, 1
      %v846 = vsel %vm754, %v841, %v845
      %v847 = vshrl.u32 %v746, 16
      %v849 = vor.u32 %v847, %v845
      %v851 = vshll.u32 %v747, 16
      %v853 = vrot.slane %v851, 1
      %v854 = vsel %vm754, %v849, %v853
      %v855 = vshrl.u32 %v747, 16
      %v857 = vor.u32 %v855, %v853
      %v859 = vshll.u32 %v748, 16
      %v861 = vrot.slane %v859, 1
      %v862 = vsel %vm754, %v857, %v861
      %v863 = vshrl.u32 %v748, 16
      %v865 = vor.u32 %v863, %v861
      %v867 = vshll.u32 %v749, 16
      %v869 = vrot.slane %v867, 1
      %v870 = vsel %vm754, %v865, %v869
      %v871 = vshrl.u32 %v749, 16
      %v873 = vor.u32 %v871, %v869
      %v875 = vshll.u32 %v750, 16
      %v877 = vrot.slane %v875, 1
      %v878 = vsel %vm754, %v873, %v877
      %v879 = vshrl.u32 %v750, 16
      %v881 = vor.u32 %v879, %v877
      %v883 = vshll.u32 %v751, 16
      %v885 = vrot.slane %v883, 1
      %v886 = vsel %vm754, %v881, %v885
      %v887 = vshrl.u32 %v751, 16
      %v889 = vor.u32 %v887, %v885
      %v891 = vshll.u32 %v752, 16
      %v893 = vrot.slane %v891, 1
      %v894 = vsel %vm754, %v889, %v893
      %v895 = vshrl.u32 %v752, 16
      %v897 = vor.u32 %v895, %v893
      %v899 = vshll.u32 %v753, 16
      %v901 = vrot.slane %v899, 1
      %v902 = vsel %vm754, %v897, %v901
      %v904 = vsel %vm350, %v766, 0
      %v907 = vsel %vm350, %v774, 0
      %v910 = vsel %vm350, %v782, 0
      %v913 = vsel %vm350, %v790, 0
      %v916 = vsel %vm350, %v798, 0
      %v919 = vsel %vm350, %v806, 0
      %v922 = vsel %vm350, %v814, 0
      %v925 = vsel %vm350, %v822, 0
      %v928 = vsel %vm350, %v830, 0
      %v931 = vsel %vm350, %v838, 0
      %v934 = vsel %vm350, %v846, 0
      %v937 = vsel %vm350, %v854, 0
      %v940 = vsel %vm350, %v862, 0
      %v943 = vsel %vm350, %v870, 0
      %v946 = vsel %vm350, %v878, 0
      %v949 = vsel %vm350, %v886, 0
      %v952 = vsel %vm350, %v894, 0
      %v955 = vsel %vm350, %v902, 0
      %v958 = vsel %vm405, %v660, 0
      %960 = vmatprep.subr.bf16.mxu0 0
      %961 = vmatpush1.bf16.msra.mxu0 %v958
      %962 = vmatprep.subr.bf16.mxu0 0
      %963 = vmatpush1.bf16.msra.mxu0 0
      %964 = vmatprep.subr.bf16.mxu0 0
      %965 = vmatpush1.bf16.msra.mxu0 0
      %966 = vmatprep.subr.bf16.mxu0 0
      %967 = vmatpush1.bf16.msra.mxu0 0
      %968 = vmatprep.subr.bf16.mxu0 0
      %969 = vmatpush1.bf16.msra.mxu0 0
      %970 = vmatprep.subr.bf16.mxu0 0
      %971 = vmatpush1.bf16.msra.mxu0 0
      %972 = vmatprep.subr.bf16.mxu0 0
      %973 = vmatpush1.bf16.msra.mxu0 0
      %974 = vmatprep.subr.bf16.mxu0 0
      %975 = vmatpush1.bf16.msra.mxu0 0
      %976 = vmatprep.subr.bf16.mxu0 0
      %977 = vmatpush1.bf16.msra.mxu0 0
      %978 = vmatprep.subr.bf16.mxu0 0
      %979 = vmatpush1.bf16.msra.mxu0 0
      %980 = vmatprep.subr.bf16.mxu0 0
      %981 = vmatpush1.bf16.msra.mxu0 0
      %982 = vmatprep.subr.bf16.mxu0 0
      %983 = vmatpush1.bf16.msra.mxu0 0
      %984 = vmatprep.subr.bf16.mxu0 0
      %985 = vmatpush1.bf16.msra.mxu0 0
      %986 = vmatprep.subr.bf16.mxu0 0
      %987 = vmatpush1.bf16.msra.mxu0 0
      %988 = vmatprep.subr.bf16.mxu0 0
      %989 = vmatpush1.bf16.msra.mxu0 0
      %990 = vmatprep.subr.bf16.mxu0 0
      %991 = vmatpush1.bf16.msra.mxu0 0
      %992 = vmatprep.mubr.bf16.mxu0 0
      %993 = vmatmul.mubr.bf16.gmra.mrb[0].mxu0 %v904
      %v994 = vpop.f32.mrb[0].mxu0
      %v995 = vadd.f32 0.0, %v994
      %v996 = vpop.f32.mrb[0].mxu0
      %v997 = vpop.f32.mrb[0].mxu0
      %v998 = vadd.f32 0.0, %v997
      %v999 = vpop.f32.mrb[0].mxu0
      %1000 = vmatprep.mubr.bf16.mxu0 0
      %1001 = vmatmul.mubr.bf16.gmra.mrb[0].mxu0 %v907
      %v1002 = vpop.f32.mrb[0].mxu0
      %v1003 = vadd.f32 0.0, %v1002
      %v1004 = vpop.f32.mrb[0].mxu0
      %v1005 = vpop.f32.mrb[0].mxu0
      %v1006 = vadd.f32 0.0, %v1005
      %v1007 = vpop.f32.mrb[0].mxu0
      %1008 = vmatprep.mubr.bf16.mxu0 0
      %1009 = vmatmul.mubr.bf16.gmra.mrb[0].mxu0 %v910
      %v1010 = vpop.f32.mrb[0].mxu0
      %v1011 = vadd.f32 0.0, %v1010
      %v1012 = vpop.f32.mrb[0].mxu0
      %v1013 = vpop.f32.mrb[0].mxu0
      %v1014 = vadd.f32 0.0, %v1013
      %v1015 = vpop.f32.mrb[0].mxu0
      %1016 = vmatprep.mubr.bf16.mxu0 0
      %1017 = vmatmul.mubr.bf16.gmra.mrb[0].mxu0 %v913
      %v1018 = vpop.f32.mrb[0].mxu0
      %v1019 = vadd.f32 0.0, %v1018
      %v1020 = vpop.f32.mrb[0].mxu0
      %v1021 = vpop.f32.mrb[0].mxu0
      %v1022 = vadd.f32 0.0, %v1021
      %v1023 = vpop.f32.mrb[0].mxu0
      %1024 = vmatprep.mubr.bf16.mxu0 0
      %1025 = vmatmul.mubr.bf16.gmra.mrb[0].mxu0 %v916
      %v1026 = vpop.f32.mrb[0].mxu0
      %v1027 = vadd.f32 0.0, %v1026
      %v1028 = vpop.f32.mrb[0].mxu0
      %v1029 = vpop.f32.mrb[0].mxu0
      %v1030 = vadd.f32 0.0, %v1029
      %v1031 = vpop.f32.mrb[0].mxu0
      %1032 = vmatprep.mubr.bf16.mxu0 0
      %1033 = vmatmul.mubr.bf16.gmra.mrb[0].mxu0 %v919
      %v1034 = vpop.f32.mrb[0].mxu0
      %v1035 = vadd.f32 0.0, %v1034
      %v1036 = vpop.f32.mrb[0].mxu0
      %v1037 = vpop.f32.mrb[0].mxu0
      %v1038 = vadd.f32 0.0, %v1037
      %v1039 = vpop.f32.mrb[0].mxu0
      %1040 = vmatprep.mubr.bf16.mxu0 0
      %1041 = vmatmul.mubr.bf16.gmra.mrb[0].mxu0 %v922
      %v1042 = vpop.f32.mrb[0].mxu0
      %v1043 = vadd.f32 0.0, %v1042
      %v1044 = vpop.f32.mrb[0].mxu0
      %v1045 = vpop.f32.mrb[0].mxu0
      %v1046 = vadd.f32 0.0, %v1045
      %v1047 = vpop.f32.mrb[0].mxu0
      %1048 = vmatprep.mubr.bf16.mxu0 0
      %1049 = vmatmul.mubr.bf16.gmra.mrb[0].mxu0 %v925
      %v1050 = vpop.f32.mrb[0].mxu0
      %v1051 = vadd.f32 0.0, %v1050
      %v1052 = vpop.f32.mrb[0].mxu0
      %v1053 = vpop.f32.mrb[0].mxu0
      %v1054 = vadd.f32 0.0, %v1053
      %v1055 = vpop.f32.mrb[0].mxu0
      %1056 = vmatprep.mubr.bf16.mxu0 0
      %1057 = vmatmul.mubr.bf16.gmra.mrb[0].mxu0 %v928
      %v1058 = vpop.f32.mrb[0].mxu0
      %v1059 = vadd.f32 0.0, %v1058
      %v1060 = vpop.f32.mrb[0].mxu0
      %v1061 = vpop.f32.mrb[0].mxu0
      %v1062 = vadd.f32 0.0, %v1061
      %v1063 = vpop.f32.mrb[0].mxu0
      %1064 = vmatprep.mubr.bf16.mxu0 0
      %1065 = vmatmul.mubr.bf16.gmra.mrb[0].mxu0 %v931
      %v1066 = vpop.f32.mrb[0].mxu0
      %v1067 = vadd.f32 0.0, %v1066
      %v1068 = vpop.f32.mrb[0].mxu0
      %v1069 = vpop.f32.mrb[0].mxu0
      %v1070 = vadd.f32 0.0, %v1069
      %v1071 = vpop.f32.mrb[0].mxu0
      %1072 = vmatprep.mubr.bf16.mxu0 0
      %1073 = vmatmul.mubr.bf16.gmra.mrb[0].mxu0 %v934
      %v1074 = vpop.f32.mrb[0].mxu0
      %v1075 = vadd.f32 0.0, %v1074
      %v1076 = vpop.f32.mrb[0].mxu0
      %v1077 = vpop.f32.mrb[0].mxu0
      %v1078 = vadd.f32 0.0, %v1077
      %v1079 = vpop.f32.mrb[0].mxu0
      %1080 = vmatprep.mubr.bf16.mxu0 0
      %1081 = vmatmul.mubr.bf16.gmra.mrb[0].mxu0 %v937
      %v1082 = vpop.f32.mrb[0].mxu0
      %v1083 = vadd.f32 0.0, %v1082
      %v1084 = vpop.f32.mrb[0].mxu0
      %v1085 = vpop.f32.mrb[0].mxu0
      %v1086 = vadd.f32 0.0, %v1085
      %v1087 = vpop.f32.mrb[0].mxu0
      %1088 = vmatprep.mubr.bf16.mxu0 0
      %1089 = vmatmul.mubr.bf16.gmra.mrb[0].mxu0 %v940
      %v1090 = vpop.f32.mrb[0].mxu0
      %v1091 = vadd.f32 0.0, %v1090
      %v1092 = vpop.f32.mrb[0].mxu0
      %v1093 = vpop.f32.mrb[0].mxu0
      %v1094 = vadd.f32 0.0, %v1093
      %v1095 = vpop.f32.mrb[0].mxu0
      %1096 = vmatprep.mubr.bf16.mxu0 0
      %1097 = vmatmul.mubr.bf16.gmra.mrb[0].mxu0 %v943
      %v1098 = vpop.f32.mrb[0].mxu0
      %v1099 = vadd.f32 0.0, %v1098
      %v1100 = vpop.f32.mrb[0].mxu0
      %v1101 = vpop.f32.mrb[0].mxu0
      %v1102 = vadd.f32 0.0, %v1101
      %v1103 = vpop.f32.mrb[0].mxu0
      %1104 = vmatprep.mubr.bf16.mxu0 0
      %1105 = vmatmul.mubr.bf16.gmra.mrb[0].mxu0 %v946
      %v1106 = vpop.f32.mrb[0].mxu0
      %v1107 = vadd.f32 0.0, %v1106
      %v1108 = vpop.f32.mrb[0].mxu0
      %v1109 = vpop.f32.mrb[0].mxu0
      %v1110 = vadd.f32 0.0, %v1109
      %v1111 = vpop.f32.mrb[0].mxu0
      %1112 = vmatprep.mubr.bf16.mxu0 0
      %1113 = vmatmul.mubr.bf16.gmra.mrb[0].mxu0 %v949
      %v1114 = vpop.f32.mrb[0].mxu0
      %v1115 = vadd.f32 0.0, %v1114
      %v1116 = vpop.f32.mrb[0].mxu0
      %v1117 = vpop.f32.mrb[0].mxu0
      %v1118 = vadd.f32 0.0, %v1117
      %v1119 = vpop.f32.mrb[0].mxu0
      %1120 = vmatprep.mubr.bf16.mxu0 0
      %1121 = vmatmul.mubr.bf16.gmra.mrb[0].mxu0 %v952
      %v1122 = vpop.f32.mrb[0].mxu0
      %v1123 = vadd.f32 0.0, %v1122
      %v1124 = vpop.f32.mrb[0].mxu0
      %v1125 = vpop.f32.mrb[0].mxu0
      %v1126 = vadd.f32 0.0, %v1125
      %v1127 = vpop.f32.mrb[0].mxu0
      %1128 = vmatprep.mubr.bf16.mxu0 0
      %1129 = vmatmul.mubr.bf16.gmra.mrb[0].mxu0 %v955
      %v1130 = vpop.f32.mrb[0].mxu0
      %v1131 = vadd.f32 0.0, %v1130
      %v1132 = vpop.f32.mrb[0].mxu0
      %v1133 = vpop.f32.mrb[0].mxu0
      %v1134 = vadd.f32 0.0, %v1133
      %v1135 = vpop.f32.mrb[0].mxu0
      %1136 = vdwg.mxu0
      %v1137 = vld [vmem:[#allocation2] sm:$0xff]
      %v1138 = vld [vmem:[#allocation2 + $0x8] sm:$0xff]
      %v1139 = vld [vmem:[#allocation2 + $0x10] sm:$0xff]
      %v1140 = vld [vmem:[#allocation2 + $0x18] sm:$0xff]
      %v1141 = vld [vmem:[#allocation2 + $0x20] sm:$0xff]
      %v1142 = vld [vmem:[#allocation2 + $0x28] sm:$0xff]
      %v1143 = vld [vmem:[#allocation2 + $0x30] sm:$0xff]
      %v1144 = vld [vmem:[#allocation2 + $0x38] sm:$0xff]
      %v1145 = vld [vmem:[#allocation2 + $0x40] sm:$0xff]
      %v1146 = vld [vmem:[#allocation2 + $0x48] sm:$0xff]
      %v1147 = vld [vmem:[#allocation2 + $0x50] sm:$0xff]
      %v1148 = vld [vmem:[#allocation2 + $0x58] sm:$0xff]
      %v1149 = vld [vmem:[#allocation2 + $0x60] sm:$0xff]
      %v1150 = vld [vmem:[#allocation2 + $0x68] sm:$0xff]
      %v1151 = vld [vmem:[#allocation2 + $0x70] sm:$0xff]
      %v1152 = vld [vmem:[#allocation2 + $0x78] sm:$0xff]
      %v1153 = vld [vmem:[#allocation2 + $0x80] sm:$0xff]
      %v1154 = vld [vmem:[#allocation2 + $0x88] sm:$0xff]
      %v1155 = vld [vmem:[#allocation2 + $0x90] sm:$0xff]
      %v1156 = vld [vmem:[#allocation2 + $0x98] sm:$0xff]
      %v1157 = vld [vmem:[#allocation2 + $0xa0] sm:$0xff]
      %v1158 = vld [vmem:[#allocation2 + $0xa8] sm:$0xff]
      %v1159 = vld [vmem:[#allocation2 + $0xb0] sm:$0xff]
      %v1160 = vld [vmem:[#allocation2 + $0xb8] sm:$0xff]
      %v1161 = vld [vmem:[#allocation2 + $0xc0] sm:$0xff]
      %v1162 = vld [vmem:[#allocation2 + $0xc8] sm:$0xff]
      %v1163 = vld [vmem:[#allocation2 + $0xd0] sm:$0xff]
      %v1164 = vld [vmem:[#allocation2 + $0xd8] sm:$0xff]
      %v1165 = vld [vmem:[#allocation2 + $0xe0] sm:$0xff]
      %v1166 = vld [vmem:[#allocation2 + $0xe8] sm:$0xff]
      %v1167 = vld [vmem:[#allocation2 + $0xf0] sm:$0xff]
      %v1168 = vld [vmem:[#allocation2 + $0xf8] sm:$0xff]
      %v1169 = vld [vmem:[#allocation2 + $0x100] sm:$0xff]
      %v1170 = vld [vmem:[#allocation2 + $0x108] sm:$0xff]
      %v1171 = vld [vmem:[#allocation2 + $0x110] sm:$0xff]
      %v1172 = vld [vmem:[#allocation2 + $0x118] sm:$0xff]
      %v1173 = vadd.f32 %v1137, %v995
      %v1174 = vadd.f32 %v1138, %v998
      %v1175 = vadd.f32 %v1139, %v1003
      %v1176 = vadd.f32 %v1140, %v1006
      %v1177 = vadd.f32 %v1141, %v1011
      %v1178 = vadd.f32 %v1142, %v1014
      %v1179 = vadd.f32 %v1143, %v1019
      %v1180 = vadd.f32 %v1144, %v1022
      %v1181 = vadd.f32 %v1145, %v1027
      %v1182 = vadd.f32 %v1146, %v1030
      %v1183 = vadd.f32 %v1147, %v1035
      %v1184 = vadd.f32 %v1148, %v1038
      %v1185 = vadd.f32 %v1149, %v1043
      %v1186 = vadd.f32 %v1150, %v1046
      %v1187 = vadd.f32 %v1151, %v1051
      %v1188 = vadd.f32 %v1152, %v1054
      %v1189 = vadd.f32 %v1153, %v1059
      %v1190 = vadd.f32 %v1154, %v1062
      %v1191 = vadd.f32 %v1155, %v1067
      %v1192 = vadd.f32 %v1156, %v1070
      %v1193 = vadd.f32 %v1157, %v1075
      %v1194 = vadd.f32 %v1158, %v1078
      %v1195 = vadd.f32 %v1159, %v1083
      %v1196 = vadd.f32 %v1160, %v1086
      %v1197 = vadd.f32 %v1161, %v1091
      %v1198 = vadd.f32 %v1162, %v1094
      %v1199 = vadd.f32 %v1163, %v1099
      %v1200 = vadd.f32 %v1164, %v1102
      %v1201 = vadd.f32 %v1165, %v1107
      %v1202 = vadd.f32 %v1166, %v1110
      %v1203 = vadd.f32 %v1167, %v1115
      %v1204 = vadd.f32 %v1168, %v1118
      %v1205 = vadd.f32 %v1169, %v1123
      %v1206 = vadd.f32 %v1170, %v1126
      %v1207 = vadd.f32 %v1171, %v1131
      %v1208 = vadd.f32 %v1172, %v1134
      %1209 = vst [vmem:[#allocation2] sm:$0xff] %v1173
      %1210 = vst [vmem:[#allocation2 + $0x8] sm:$0xff] %v1174
      %1211 = vst [vmem:[#allocation2 + $0x10] sm:$0xff] %v1175
      %1212 = vst [vmem:[#allocation2 + $0x18] sm:$0xff] %v1176
      %1213 = vst [vmem:[#allocation2 + $0x20] sm:$0xff] %v1177
      %1214 = vst [vmem:[#allocation2 + $0x28] sm:$0xff] %v1178
      %1215 = vst [vmem:[#allocation2 + $0x30] sm:$0xff] %v1179
      %1216 = vst [vmem:[#allocation2 + $0x38] sm:$0xff] %v1180
      %1217 = vst [vmem:[#allocation2 + $0x40] sm:$0xff] %v1181
      %1218 = vst [vmem:[#allocation2 + $0x48] sm:$0xff] %v1182
      %1219 = vst [vmem:[#allocation2 + $0x50] sm:$0xff] %v1183
      %1220 = vst [vmem:[#allocation2 + $0x58] sm:$0xff] %v1184
      %1221 = vst [vmem:[#allocation2 + $0x60] sm:$0xff] %v1185
      %1222 = vst [vmem:[#allocation2 + $0x68] sm:$0xff] %v1186
      %1223 = vst [vmem:[#allocation2 + $0x70] sm:$0xff] %v1187
      %1224 = vst [vmem:[#allocation2 + $0x78] sm:$0xff] %v1188
      %1225 = vst [vmem:[#allocation2 + $0x80] sm:$0xff] %v1189
      %1226 = vst [vmem:[#allocation2 + $0x88] sm:$0xff] %v1190
      %1227 = vst [vmem:[#allocation2 + $0x90] sm:$0xff] %v1191
      %1228 = vst [vmem:[#allocation2 + $0x98] sm:$0xff] %v1192
      %1229 = vst [vmem:[#allocation2 + $0xa0] sm:$0xff] %v1193
      %1230 = vst [vmem:[#allocation2 + $0xa8] sm:$0xff] %v1194
      %1231 = vst [vmem:[#allocation2 + $0xb0] sm:$0xff] %v1195
      %1232 = vst [vmem:[#allocation2 + $0xb8] sm:$0xff] %v1196
      %1233 = vst [vmem:[#allocation2 + $0xc0] sm:$0xff] %v1197
      %1234 = vst [vmem:[#allocation2 + $0xc8] sm:$0xff] %v1198
      %1235 = vst [vmem:[#allocation2 + $0xd0] sm:$0xff] %v1199
      %1236 = vst [vmem:[#allocation2 + $0xd8] sm:$0xff] %v1200
      %1237 = vst [vmem:[#allocation2 + $0xe0] sm:$0xff] %v1201
      %1238 = vst [vmem:[#allocation2 + $0xe8] sm:$0xff] %v1202
      %1239 = vst [vmem:[#allocation2 + $0xf0] sm:$0xff] %v1203
      %1240 = vst [vmem:[#allocation2 + $0xf8] sm:$0xff] %v1204
      %1241 = vst [vmem:[#allocation2 + $0x100] sm:$0xff] %v1205
      %1242 = vst [vmem:[#allocation2 + $0x108] sm:$0xff] %v1206
      %1243 = vst [vmem:[#allocation2 + $0x110] sm:$0xff] %v1207
      %1244 = vst [vmem:[#allocation2 + $0x118] sm:$0xff] %v1208
      %v1245 = vld [vmem:[%s206] sm:$0xe]
      %v1246 = vld [vmem:[%s206 + $0x4] sm:$0xf]
      %v1247 = vld [vmem:[%s206 + $0x8] sm:$0xf]
      %v1248 = vld [vmem:[%s206 + $0xc] sm:$0xf]
      %v1249 = vld [vmem:[%s206 + $0x10] sm:$0xf]
      %v1250 = vld [vmem:[%s206 + $0x14] sm:$0xf]
      %v1251 = vld [vmem:[%s206 + $0x18] sm:$0xf]
      %v1252 = vld [vmem:[%s206 + $0x1c] sm:$0xf]
      %v1253 = vld [vmem:[%s206 + $0x20] sm:$0xf]
      %v1254 = vld [vmem:[%s206 + $0x24] sm:$0xf]
      %v1255 = vld [vmem:[%s206 + $0x28] sm:$0xf]
      %v1256 = vld [vmem:[%s206 + $0x2c] sm:$0xf]
      %v1257 = vld [vmem:[%s206 + $0x30] sm:$0xf]
      %v1258 = vld [vmem:[%s206 + $0x34] sm:$0xf]
      %v1259 = vld [vmem:[%s206 + $0x38] sm:$0xf]
      %v1260 = vld [vmem:[%s206 + $0x3c] sm:$0xf]
      %v1261 = vld [vmem:[%s206 + $0x40] sm:$0xf]
      %v1262 = vld [vmem:[%s206 + $0x44] sm:$0xf]
      %v1263 = vld [vmem:[%s206 + $0x48] sm:$0xf]
      %v1264 = vld [vmem:[%s206 + $0x4c] sm:$0xf]
      %v1265 = vld [vmem:[%s206 + $0x50] sm:$0xf]
      %v1266 = vld [vmem:[%s206 + $0x54] sm:$0xf]
      %v1267 = vld [vmem:[%s206 + $0x58] sm:$0xf]
      %v1268 = vld [vmem:[%s206 + $0x5c] sm:$0xf]
      %v1269 = vld [vmem:[%s206 + $0x60] sm:$0xf]
      %v1270 = vld [vmem:[%s206 + $0x64] sm:$0xf]
      %v1271 = vld [vmem:[%s206 + $0x68] sm:$0xf]
      %v1272 = vld [vmem:[%s206 + $0x6c] sm:$0xf]
      %v1273 = vld [vmem:[%s206 + $0x70] sm:$0xf]
      %v1274 = vld [vmem:[%s206 + $0x74] sm:$0xf]
      %v1275 = vld [vmem:[%s206 + $0x78] sm:$0xf]
      %v1276 = vld [vmem:[%s206 + $0x7c] sm:$0xf]
      %v1277 = vld [vmem:[%s206 + $0x80] sm:$0xf]
      %v1278 = vld [vmem:[%s206 + $0x84] sm:$0xf]
      %v1279 = vld [vmem:[%s206 + $0x88] sm:$0xf]
      %v1280 = vld [vmem:[%s206 + $0x8c] sm:$0xf]
      %v1281 = vld [vmem:[%s206 + $0x90] sm:$0x1]
      %s1282 = scalar_lea.vmem %s210, 4
      %v1283 = vld [vmem:[%s1282] sm:$0x3]
      %v1321 = vunpack.c.l.b16 %v1245
      %v1322 = vunpack.c.l.b16 %v1246
      %v1323 = vunpack.c.l.b16 %v1247
      %v1324 = vunpack.c.l.b16 %v1248
      %v1325 = vunpack.c.l.b16 %v1249
      %v1326 = vunpack.c.l.b16 %v1250
      %v1327 = vunpack.c.l.b16 %v1251
      %v1328 = vunpack.c.l.b16 %v1252
      %v1329 = vunpack.c.l.b16 %v1253
      %v1330 = vunpack.c.l.b16 %v1254
      %v1331 = vunpack.c.l.b16 %v1255
      %v1332 = vunpack.c.l.b16 %v1256
      %v1333 = vunpack.c.l.b16 %v1257
      %v1334 = vunpack.c.l.b16 %v1258
      %v1335 = vunpack.c.l.b16 %v1259
      %v1336 = vunpack.c.l.b16 %v1260
      %v1337 = vunpack.c.l.b16 %v1261
      %v1338 = vunpack.c.l.b16 %v1262
      %v1339 = vunpack.c.l.b16 %v1263
      %v1340 = vunpack.c.l.b16 %v1264
      %v1341 = vunpack.c.l.b16 %v1265
      %v1342 = vunpack.c.l.b16 %v1266
      %v1343 = vunpack.c.l.b16 %v1267
      %v1344 = vunpack.c.l.b16 %v1268
      %v1345 = vunpack.c.l.b16 %v1269
      %v1346 = vunpack.c.l.b16 %v1270
      %v1347 = vunpack.c.l.b16 %v1271
      %v1348 = vunpack.c.l.b16 %v1272
      %v1349 = vunpack.c.l.b16 %v1273
      %v1350 = vunpack.c.l.b16 %v1274
      %v1351 = vunpack.c.l.b16 %v1275
      %v1352 = vunpack.c.l.b16 %v1276
      %v1353 = vunpack.c.l.b16 %v1277
      %v1354 = vunpack.c.l.b16 %v1278
      %v1355 = vunpack.c.l.b16 %v1279
      %v1356 = vunpack.c.l.b16 %v1280
      %v1357 = vunpack.c.l.b16 %v1281
      %v1358 = vpack.c.b16 %v1322, %v1321
      %v1359 = vpack.c.b16 %v1324, %v1323
      %v1360 = vpack.c.b16 %v1326, %v1325
      %v1361 = vpack.c.b16 %v1328, %v1327
      %v1362 = vpack.c.b16 %v1330, %v1329
      %v1363 = vpack.c.b16 %v1332, %v1331
      %v1364 = vpack.c.b16 %v1334, %v1333
      %v1365 = vpack.c.b16 %v1336, %v1335
      %v1366 = vpack.c.b16 %v1338, %v1337
      %v1367 = vpack.c.b16 %v1340, %v1339
      %v1368 = vpack.c.b16 %v1342, %v1341
      %v1369 = vpack.c.b16 %v1344, %v1343
      %v1370 = vpack.c.b16 %v1346, %v1345
      %v1371 = vpack.c.b16 %v1348, %v1347
      %v1372 = vpack.c.b16 %v1350, %v1349
      %v1373 = vpack.c.b16 %v1352, %v1351
      %v1374 = vpack.c.b16 %v1354, %v1353
      %v1375 = vpack.c.b16 %v1356, %v1355
      %v1376 = vpack.c.b16 %v1357, %v1357
      %vm1377 = vcmask 1046528
      %v1378 = vrot.slane %v1358, 1
      %v1379 = vrot.slane %v1359, 1
      %v1380 = vsel %vm1377, %v1378, %v1379
      %v1381 = vrot.slane %v1360, 1
      %v1382 = vsel %vm1377, %v1379, %v1381
      %v1383 = vrot.slane %v1361, 1
      %v1384 = vsel %vm1377, %v1381, %v1383
      %v1385 = vrot.slane %v1362, 1
      %v1386 = vsel %vm1377, %v1383, %v1385
      %v1387 = vrot.slane %v1363, 1
      %v1388 = vsel %vm1377, %v1385, %v1387
      %v1389 = vrot.slane %v1364, 1
      %v1390 = vsel %vm1377, %v1387, %v1389
      %v1391 = vrot.slane %v1365, 1
      %v1392 = vsel %vm1377, %v1389, %v1391
      %v1393 = vrot.slane %v1366, 1
      %v1394 = vsel %vm1377, %v1391, %v1393
      %v1395 = vrot.slane %v1367, 1
      %v1396 = vsel %vm1377, %v1393, %v1395
      %v1397 = vrot.slane %v1368, 1
      %v1398 = vsel %vm1377, %v1395, %v1397
      %v1399 = vrot.slane %v1369, 1
      %v1400 = vsel %vm1377, %v1397, %v1399
      %v1401 = vrot.slane %v1370, 1
      %v1402 = vsel %vm1377, %v1399, %v1401
      %v1403 = vrot.slane %v1371, 1
      %v1404 = vsel %vm1377, %v1401, %v1403
      %v1405 = vrot.slane %v1372, 1
      %v1406 = vsel %vm1377, %v1403, %v1405
      %v1407 = vrot.slane %v1373, 1
      %v1408 = vsel %vm1377, %v1405, %v1407
      %v1409 = vrot.slane %v1374, 1
      %v1410 = vsel %vm1377, %v1407, %v1409
      %v1411 = vrot.slane %v1375, 1
      %v1412 = vsel %vm1377, %v1409, %v1411
      %v1413 = vrot.slane %v1376, 1
      %v1414 = vsel %vm1377, %v1411, %v1413
      %v1416 = vsel %vm350, %v1380, 0
      %v1419 = vsel %vm350, %v1382, 0
      %v1422 = vsel %vm350, %v1384, 0
      %v1425 = vsel %vm350, %v1386, 0
      %v1428 = vsel %vm350, %v1388, 0
      %v1431 = vsel %vm350, %v1390, 0
      %v1434 = vsel %vm350, %v1392, 0
      %v1437 = vsel %vm350, %v1394, 0
      %v1440 = vsel %vm350, %v1396, 0
      %v1443 = vsel %vm350, %v1398, 0
      %v1446 = vsel %vm350, %v1400, 0
      %v1449 = vsel %vm350, %v1402, 0
      %v1452 = vsel %vm350, %v1404, 0
      %v1455 = vsel %vm350, %v1406, 0
      %v1458 = vsel %vm350, %v1408, 0
      %v1461 = vsel %vm350, %v1410, 0
      %v1464 = vsel %vm350, %v1412, 0
      %v1467 = vsel %vm350, %v1414, 0
      %v1470 = vsel %vm405, %v1283, 0
      %1472 = vmatprep.subr.bf16.mxu0 0
      %1473 = vmatpush1.bf16.msra.mxu0 %v1470
      %1474 = vmatprep.subr.bf16.mxu0 0
      %1475 = vmatpush1.bf16.msra.mxu0 0
      %1476 = vmatprep.subr.bf16.mxu0 0
      %1477 = vmatpush1.bf16.msra.mxu0 0
      %1478 = vmatprep.subr.bf16.mxu0 0
      %1479 = vmatpush1.bf16.msra.mxu0 0
      %1480 = vmatprep.subr.bf16.mxu0 0
      %1481 = vmatpush1.bf16.msra.mxu0 0
      %1482 = vmatprep.subr.bf16.mxu0 0
      %1483 = vmatpush1.bf16.msra.mxu0 0
      %1484 = vmatprep.subr.bf16.mxu0 0
      %1485 = vmatpush1.bf16.msra.mxu0 0
      %1486 = vmatprep.subr.bf16.mxu0 0
      %1487 = vmatpush1.bf16.msra.mxu0 0
      %1488 = vmatprep.subr.bf16.mxu0 0
      %1489 = vmatpush1.bf16.msra.mxu0 0
      %1490 = vmatprep.subr.bf16.mxu0 0
      %1491 = vmatpush1.bf16.msra.mxu0 0
      %1492 = vmatprep.subr.bf16.mxu0 0
      %1493 = vmatpush1.bf16.msra.mxu0 0
      %1494 = vmatprep.subr.bf16.mxu0 0
      %1495 = vmatpush1.bf16.msra.mxu0 0
      %1496 = vmatprep.subr.bf16.mxu0 0
      %1497 = vmatpush1.bf16.msra.mxu0 0
      %1498 = vmatprep.subr.bf16.mxu0 0
      %1499 = vmatpush1.bf16.msra.mxu0 0
      %1500 = vmatprep.subr.bf16.mxu0 0
      %1501 = vmatpush1.bf16.msra.mxu0 0
      %1502 = vmatprep.subr.bf16.mxu0 0
      %1503 = vmatpush1.bf16.msra.mxu0 0
      %1504 = vmatprep.mubr.bf16.mxu0 0
      %1505 = vmatmul.mubr.bf16.gmra.mrb[0].mxu0 %v1416
      %v1506 = vpop.f32.mrb[0].mxu0
      %v1507 = vadd.f32 0.0, %v1506
      %v1508 = vpop.f32.mrb[0].mxu0
      %v1509 = vpop.f32.mrb[0].mxu0
      %v1510 = vadd.f32 0.0, %v1509
      %v1511 = vpop.f32.mrb[0].mxu0
      %1512 = vmatprep.mubr.bf16.mxu0 0
      %1513 = vmatmul.mubr.bf16.gmra.mrb[0].mxu0 %v1419
      %v1514 = vpop.f32.mrb[0].mxu0
      %v1515 = vadd.f32 0.0, %v1514
      %v1516 = vpop.f32.mrb[0].mxu0
      %v1517 = vpop.f32.mrb[0].mxu0
      %v1518 = vadd.f32 0.0, %v1517
      %v1519 = vpop.f32.mrb[0].mxu0
      %1520 = vmatprep.mubr.bf16.mxu0 0
      %1521 = vmatmul.mubr.bf16.gmra.mrb[0].mxu0 %v1422
      %v1522 = vpop.f32.mrb[0].mxu0
      %v1523 = vadd.f32 0.0, %v1522
      %v1524 = vpop.f32.mrb[0].mxu0
      %v1525 = vpop.f32.mrb[0].mxu0
      %v1526 = vadd.f32 0.0, %v1525
      %v1527 = vpop.f32.mrb[0].mxu0
      %1528 = vmatprep.mubr.bf16.mxu0 0
      %1529 = vmatmul.mubr.bf16.gmra.mrb[0].mxu0 %v1425
      %v1530 = vpop.f32.mrb[0].mxu0
      %v1531 = vadd.f32 0.0, %v1530
      %v1532 = vpop.f32.mrb[0].mxu0
      %v1533 = vpop.f32.mrb[0].mxu0
      %v1534 = vadd.f32 0.0, %v1533
      %v1535 = vpop.f32.mrb[0].mxu0
      %1536 = vmatprep.mubr.bf16.mxu0 0
      %1537 = vmatmul.mubr.bf16.gmra.mrb[0].mxu0 %v1428
      %v1538 = vpop.f32.mrb[0].mxu0
      %v1539 = vadd.f32 0.0, %v1538
      %v1540 = vpop.f32.mrb[0].mxu0
      %v1541 = vpop.f32.mrb[0].mxu0
      %v1542 = vadd.f32 0.0, %v1541
      %v1543 = vpop.f32.mrb[0].mxu0
      %1544 = vmatprep.mubr.bf16.mxu0 0
      %1545 = vmatmul.mubr.bf16.gmra.mrb[0].mxu0 %v1431
      %v1546 = vpop.f32.mrb[0].mxu0
      %v1547 = vadd.f32 0.0, %v1546
      %v1548 = vpop.f32.mrb[0].mxu0
      %v1549 = vpop.f32.mrb[0].mxu0
      %v1550 = vadd.f32 0.0, %v1549
      %v1551 = vpop.f32.mrb[0].mxu0
      %1552 = vmatprep.mubr.bf16.mxu0 0
      %1553 = vmatmul.mubr.bf16.gmra.mrb[0].mxu0 %v1434
      %v1554 = vpop.f32.mrb[0].mxu0
      %v1555 = vadd.f32 0.0, %v1554
      %v1556 = vpop.f32.mrb[0].mxu0
      %v1557 = vpop.f32.mrb[0].mxu0
      %v1558 = vadd.f32 0.0, %v1557
      %v1559 = vpop.f32.mrb[0].mxu0
      %1560 = vmatprep.mubr.bf16.mxu0 0
      %1561 = vmatmul.mubr.bf16.gmra.mrb[0].mxu0 %v1437
      %v1562 = vpop.f32.mrb[0].mxu0
      %v1563 = vadd.f32 0.0, %v1562
      %v1564 = vpop.f32.mrb[0].mxu0
      %v1565 = vpop.f32.mrb[0].mxu0
      %v1566 = vadd.f32 0.0, %v1565
      %v1567 = vpop.f32.mrb[0].mxu0
      %1568 = vmatprep.mubr.bf16.mxu0 0
      %1569 = vmatmul.mubr.bf16.gmra.mrb[0].mxu0 %v1440
      %v1570 = vpop.f32.mrb[0].mxu0
      %v1571 = vadd.f32 0.0, %v1570
      %v1572 = vpop.f32.mrb[0].mxu0
      %v1573 = vpop.f32.mrb[0].mxu0
      %v1574 = vadd.f32 0.0, %v1573
      %v1575 = vpop.f32.mrb[0].mxu0
      %1576 = vmatprep.mubr.bf16.mxu0 0
      %1577 = vmatmul.mubr.bf16.gmra.mrb[0].mxu0 %v1443
      %v1578 = vpop.f32.mrb[0].mxu0
      %v1579 = vadd.f32 0.0, %v1578
      %v1580 = vpop.f32.mrb[0].mxu0
      %v1581 = vpop.f32.mrb[0].mxu0
      %v1582 = vadd.f32 0.0, %v1581
      %v1583 = vpop.f32.mrb[0].mxu0
      %1584 = vmatprep.mubr.bf16.mxu0 0
      %1585 = vmatmul.mubr.bf16.gmra.mrb[0].mxu0 %v1446
      %v1586 = vpop.f32.mrb[0].mxu0
      %v1587 = vadd.f32 0.0, %v1586
      %v1588 = vpop.f32.mrb[0].mxu0
      %v1589 = vpop.f32.mrb[0].mxu0
      %v1590 = vadd.f32 0.0, %v1589
      %v1591 = vpop.f32.mrb[0].mxu0
      %1592 = vmatprep.mubr.bf16.mxu0 0
      %1593 = vmatmul.mubr.bf16.gmra.mrb[0].mxu0 %v1449
      %v1594 = vpop.f32.mrb[0].mxu0
      %v1595 = vadd.f32 0.0, %v1594
      %v1596 = vpop.f32.mrb[0].mxu0
      %v1597 = vpop.f32.mrb[0].mxu0
      %v1598 = vadd.f32 0.0, %v1597
      %v1599 = vpop.f32.mrb[0].mxu0
      %1600 = vmatprep.mubr.bf16.mxu0 0
      %1601 = vmatmul.mubr.bf16.gmra.mrb[0].mxu0 %v1452
      %v1602 = vpop.f32.mrb[0].mxu0
      %v1603 = vadd.f32 0.0, %v1602
      %v1604 = vpop.f32.mrb[0].mxu0
      %v1605 = vpop.f32.mrb[0].mxu0
      %v1606 = vadd.f32 0.0, %v1605
      %v1607 = vpop.f32.mrb[0].mxu0
      %1608 = vmatprep.mubr.bf16.mxu0 0
      %1609 = vmatmul.mubr.bf16.gmra.mrb[0].mxu0 %v1455
      %v1610 = vpop.f32.mrb[0].mxu0
      %v1611 = vadd.f32 0.0, %v1610
      %v1612 = vpop.f32.mrb[0].mxu0
      %v1613 = vpop.f32.mrb[0].mxu0
      %v1614 = vadd.f32 0.0, %v1613
      %v1615 = vpop.f32.mrb[0].mxu0
      %1616 = vmatprep.mubr.bf16.mxu0 0
      %1617 = vmatmul.mubr.bf16.gmra.mrb[0].mxu0 %v1458
      %v1618 = vpop.f32.mrb[0].mxu0
      %v1619 = vadd.f32 0.0, %v1618
      %v1620 = vpop.f32.mrb[0].mxu0
      %v1621 = vpop.f32.mrb[0].mxu0
      %v1622 = vadd.f32 0.0, %v1621
      %v1623 = vpop.f32.mrb[0].mxu0
      %1624 = vmatprep.mubr.bf16.mxu0 0
      %1625 = vmatmul.mubr.bf16.gmra.mrb[0].mxu0 %v1461
      %v1626 = vpop.f32.mrb[0].mxu0
      %v1627 = vadd.f32 0.0, %v1626
      %v1628 = vpop.f32.mrb[0].mxu0
      %v1629 = vpop.f32.mrb[0].mxu0
      %v1630 = vadd.f32 0.0, %v1629
      %v1631 = vpop.f32.mrb[0].mxu0
      %1632 = vmatprep.mubr.bf16.mxu0 0
      %1633 = vmatmul.mubr.bf16.gmra.mrb[0].mxu0 %v1464
      %v1634 = vpop.f32.mrb[0].mxu0
      %v1635 = vadd.f32 0.0, %v1634
      %v1636 = vpop.f32.mrb[0].mxu0
      %v1637 = vpop.f32.mrb[0].mxu0
      %v1638 = vadd.f32 0.0, %v1637
      %v1639 = vpop.f32.mrb[0].mxu0
      %1640 = vmatprep.mubr.bf16.mxu0 0
      %1641 = vmatmul.mubr.bf16.gmra.mrb[0].mxu0 %v1467
      %v1642 = vpop.f32.mrb[0].mxu0
      %v1643 = vadd.f32 0.0, %v1642
      %v1644 = vpop.f32.mrb[0].mxu0
      %v1645 = vpop.f32.mrb[0].mxu0
      %v1646 = vadd.f32 0.0, %v1645
      %v1647 = vpop.f32.mrb[0].mxu0
      %1648 = vdwg.mxu0
      %v1649 = vld [vmem:[#allocation2] sm:$0xff]
      %v1650 = vld [vmem:[#allocation2 + $0x8] sm:$0xff]
      %v1651 = vld [vmem:[#allocation2 + $0x10] sm:$0xff]
      %v1652 = vld [vmem:[#allocation2 + $0x18] sm:$0xff]
      %v1653 = vld [vmem:[#allocation2 + $0x20] sm:$0xff]
      %v1654 = vld [vmem:[#allocation2 + $0x28] sm:$0xff]
      %v1655 = vld [vmem:[#allocation2 + $0x30] sm:$0xff]
      %v1656 = vld [vmem:[#allocation2 + $0x38] sm:$0xff]
      %v1657 = vld [vmem:[#allocation2 + $0x40] sm:$0xff]
      %v1658 = vld [vmem:[#allocation2 + $0x48] sm:$0xff]
      %v1659 = vld [vmem:[#allocation2 + $0x50] sm:$0xff]
      %v1660 = vld [vmem:[#allocation2 + $0x58] sm:$0xff]
      %v1661 = vld [vmem:[#allocation2 + $0x60] sm:$0xff]
      %v1662 = vld [vmem:[#allocation2 + $0x68] sm:$0xff]
      %v1663 = vld [vmem:[#allocation2 + $0x70] sm:$0xff]
      %v1664 = vld [vmem:[#allocation2 + $0x78] sm:$0xff]
      %v1665 = vld [vmem:[#allocation2 + $0x80] sm:$0xff]
      %v1666 = vld [vmem:[#allocation2 + $0x88] sm:$0xff]
      %v1667 = vld [vmem:[#allocation2 + $0x90] sm:$0xff]
      %v1668 = vld [vmem:[#allocation2 + $0x98] sm:$0xff]
      %v1669 = vld [vmem:[#allocation2 + $0xa0] sm:$0xff]
      %v1670 = vld [vmem:[#allocation2 + $0xa8] sm:$0xff]
      %v1671 = vld [vmem:[#allocation2 + $0xb0] sm:$0xff]
      %v1672 = vld [vmem:[#allocation2 + $0xb8] sm:$0xff]
      %v1673 = vld [vmem:[#allocation2 + $0xc0] sm:$0xff]
      %v1674 = vld [vmem:[#allocation2 + $0xc8] sm:$0xff]
      %v1675 = vld [vmem:[#allocation2 + $0xd0] sm:$0xff]
      %v1676 = vld [vmem:[#allocation2 + $0xd8] sm:$0xff]
      %v1677 = vld [vmem:[#allocation2 + $0xe0] sm:$0xff]
      %v1678 = vld [vmem:[#allocation2 + $0xe8] sm:$0xff]
      %v1679 = vld [vmem:[#allocation2 + $0xf0] sm:$0xff]
      %v1680 = vld [vmem:[#allocation2 + $0xf8] sm:$0xff]
      %v1681 = vld [vmem:[#allocation2 + $0x100] sm:$0xff]
      %v1682 = vld [vmem:[#allocation2 + $0x108] sm:$0xff]
      %v1683 = vld [vmem:[#allocation2 + $0x110] sm:$0xff]
      %v1684 = vld [vmem:[#allocation2 + $0x118] sm:$0xff]
      %v1685 = vadd.f32 %v1649, %v1507
      %v1686 = vadd.f32 %v1650, %v1510
      %v1687 = vadd.f32 %v1651, %v1515
      %v1688 = vadd.f32 %v1652, %v1518
      %v1689 = vadd.f32 %v1653, %v1523
      %v1690 = vadd.f32 %v1654, %v1526
      %v1691 = vadd.f32 %v1655, %v1531
      %v1692 = vadd.f32 %v1656, %v1534
      %v1693 = vadd.f32 %v1657, %v1539
      %v1694 = vadd.f32 %v1658, %v1542
      %v1695 = vadd.f32 %v1659, %v1547
      %v1696 = vadd.f32 %v1660, %v1550
      %v1697 = vadd.f32 %v1661, %v1555
      %v1698 = vadd.f32 %v1662, %v1558
      %v1699 = vadd.f32 %v1663, %v1563
      %v1700 = vadd.f32 %v1664, %v1566
      %v1701 = vadd.f32 %v1665, %v1571
      %v1702 = vadd.f32 %v1666, %v1574
      %v1703 = vadd.f32 %v1667, %v1579
      %v1704 = vadd.f32 %v1668, %v1582
      %v1705 = vadd.f32 %v1669, %v1587
      %v1706 = vadd.f32 %v1670, %v1590
      %v1707 = vadd.f32 %v1671, %v1595
      %v1708 = vadd.f32 %v1672, %v1598
      %v1709 = vadd.f32 %v1673, %v1603
      %v1710 = vadd.f32 %v1674, %v1606
      %v1711 = vadd.f32 %v1675, %v1611
      %v1712 = vadd.f32 %v1676, %v1614
      %v1713 = vadd.f32 %v1677, %v1619
      %v1714 = vadd.f32 %v1678, %v1622
      %v1715 = vadd.f32 %v1679, %v1627
      %v1716 = vadd.f32 %v1680, %v1630
      %v1717 = vadd.f32 %v1681, %v1635
      %v1718 = vadd.f32 %v1682, %v1638
      %v1719 = vadd.f32 %v1683, %v1643
      %v1720 = vadd.f32 %v1684, %v1646
      %1721 = vst [vmem:[#allocation2] sm:$0xff] %v1685
      %1722 = vst [vmem:[#allocation2 + $0x8] sm:$0xff] %v1686
      %1723 = vst [vmem:[#allocation2 + $0x10] sm:$0xff] %v1687
      %1724 = vst [vmem:[#allocation2 + $0x18] sm:$0xff] %v1688
      %1725 = vst [vmem:[#allocation2 + $0x20] sm:$0xff] %v1689
      %1726 = vst [vmem:[#allocation2 + $0x28] sm:$0xff] %v1690
      %1727 = vst [vmem:[#allocation2 + $0x30] sm:$0xff] %v1691
      %1728 = vst [vmem:[#allocation2 + $0x38] sm:$0xff] %v1692
      %1729 = vst [vmem:[#allocation2 + $0x40] sm:$0xff] %v1693
      %1730 = vst [vmem:[#allocation2 + $0x48] sm:$0xff] %v1694
      %1731 = vst [vmem:[#allocation2 + $0x50] sm:$0xff] %v1695
      %1732 = vst [vmem:[#allocation2 + $0x58] sm:$0xff] %v1696
      %1733 = vst [vmem:[#allocation2 + $0x60] sm:$0xff] %v1697
      %1734 = vst [vmem:[#allocation2 + $0x68] sm:$0xff] %v1698
      %1735 = vst [vmem:[#allocation2 + $0x70] sm:$0xff] %v1699
      %1736 = vst [vmem:[#allocation2 + $0x78] sm:$0xff] %v1700
      %1737 = vst [vmem:[#allocation2 + $0x80] sm:$0xff] %v1701
      %1738 = vst [vmem:[#allocation2 + $0x88] sm:$0xff] %v1702
      %1739 = vst [vmem:[#allocation2 + $0x90] sm:$0xff] %v1703
      %1740 = vst [vmem:[#allocation2 + $0x98] sm:$0xff] %v1704
      %1741 = vst [vmem:[#allocation2 + $0xa0] sm:$0xff] %v1705
      %1742 = vst [vmem:[#allocation2 + $0xa8] sm:$0xff] %v1706
      %1743 = vst [vmem:[#allocation2 + $0xb0] sm:$0xff] %v1707
      %1744 = vst [vmem:[#allocation2 + $0xb8] sm:$0xff] %v1708
      %1745 = vst [vmem:[#allocation2 + $0xc0] sm:$0xff] %v1709
      %1746 = vst [vmem:[#allocation2 + $0xc8] sm:$0xff] %v1710
      %1747 = vst [vmem:[#allocation2 + $0xd0] sm:$0xff] %v1711
      %1748 = vst [vmem:[#allocation2 + $0xd8] sm:$0xff] %v1712
      %1749 = vst [vmem:[#allocation2 + $0xe0] sm:$0xff] %v1713
      %1750 = vst [vmem:[#allocation2 + $0xe8] sm:$0xff] %v1714
      %1751 = vst [vmem:[#allocation2 + $0xf0] sm:$0xff] %v1715
      %1752 = vst [vmem:[#allocation2 + $0xf8] sm:$0xff] %v1716
      %1753 = vst [vmem:[#allocation2 + $0x100] sm:$0xff] %v1717
      %1754 = vst [vmem:[#allocation2 + $0x108] sm:$0xff] %v1718
      %1755 = vst [vmem:[#allocation2 + $0x110] sm:$0xff] %v1719
      %1756 = vst [vmem:[#allocation2 + $0x118] sm:$0xff] %v1720
      %v1757 = vld [vmem:[%s206 + $0x8] sm:$0xe]
      %v1758 = vld [vmem:[%s206 + $0xc] sm:$0xf]
      %v1759 = vld [vmem:[%s206 + $0x10] sm:$0xf]
      %v1760 = vld [vmem:[%s206 + $0x14] sm:$0xf]
      %v1761 = vld [vmem:[%s206 + $0x18] sm:$0xf]
      %v1762 = vld [vmem:[%s206 + $0x1c] sm:$0xf]
      %v1763 = vld [vmem:[%s206 + $0x20] sm:$0xf]
      %v1764 = vld [vmem:[%s206 + $0x24] sm:$0xf]
      %v1765 = vld [vmem:[%s206 + $0x28] sm:$0xf]
      %v1766 = vld [vmem:[%s206 + $0x2c] sm:$0xf]
      %v1767 = vld [vmem:[%s206 + $0x30] sm:$0xf]
      %v1768 = vld [vmem:[%s206 + $0x34] sm:$0xf]
      %v1769 = vld [vmem:[%s206 + $0x38] sm:$0xf]
      %v1770 = vld [vmem:[%s206 + $0x3c] sm:$0xf]
      %v1771 = vld [vmem:[%s206 + $0x40] sm:$0xf]
      %v1772 = vld [vmem:[%s206 + $0x44] sm:$0xf]
      %v1773 = vld [vmem:[%s206 + $0x48] sm:$0xf]
      %v1774 = vld [vmem:[%s206 + $0x4c] sm:$0xf]
      %v1775 = vld [vmem:[%s206 + $0x50] sm:$0xf]
      %v1776 = vld [vmem:[%s206 + $0x54] sm:$0xf]
      %v1777 = vld [vmem:[%s206 + $0x58] sm:$0xf]
      %v1778 = vld [vmem:[%s206 + $0x5c] sm:$0xf]
      %v1779 = vld [vmem:[%s206 + $0x60] sm:$0xf]
      %v1780 = vld [vmem:[%s206 + $0x64] sm:$0xf]
      %v1781 = vld [vmem:[%s206 + $0x68] sm:$0xf]
      %v1782 = vld [vmem:[%s206 + $0x6c] sm:$0xf]
      %v1783 = vld [vmem:[%s206 + $0x70] sm:$0xf]
      %v1784 = vld [vmem:[%s206 + $0x74] sm:$0xf]
      %v1785 = vld [vmem:[%s206 + $0x78] sm:$0xf]
      %v1786 = vld [vmem:[%s206 + $0x7c] sm:$0xf]
      %v1787 = vld [vmem:[%s206 + $0x80] sm:$0xf]
      %v1788 = vld [vmem:[%s206 + $0x84] sm:$0xf]
      %v1789 = vld [vmem:[%s206 + $0x88] sm:$0xf]
      %v1790 = vld [vmem:[%s206 + $0x8c] sm:$0xf]
      %v1791 = vld [vmem:[%s206 + $0x90] sm:$0xf]
      %v1792 = vld [vmem:[%s206 + $0x94] sm:$0xf]
      %v1793 = vld [vmem:[%s206 + $0x98] sm:$0x1]
      %s1794 = scalar_lea.vmem %s210, 6
      %v1795 = vld [vmem:[%s1794] sm:$0x3]
      %v1833 = vunpack.c.l.b16 %v1757
      %v1834 = vunpack.c.l.b16 %v1758
      %v1835 = vunpack.c.l.b16 %v1759
      %v1836 = vunpack.c.l.b16 %v1760
      %v1837 = vunpack.c.l.b16 %v1761
      %v1838 = vunpack.c.l.b16 %v1762
      %v1839 = vunpack.c.l.b16 %v1763
      %v1840 = vunpack.c.l.b16 %v1764
      %v1841 = vunpack.c.l.b16 %v1765
      %v1842 = vunpack.c.l.b16 %v1766
      %v1843 = vunpack.c.l.b16 %v1767
      %v1844 = vunpack.c.l.b16 %v1768
      %v1845 = vunpack.c.l.b16 %v1769
      %v1846 = vunpack.c.l.b16 %v1770
      %v1847 = vunpack.c.l.b16 %v1771
      %v1848 = vunpack.c.l.b16 %v1772
      %v1849 = vunpack.c.l.b16 %v1773
      %v1850 = vunpack.c.l.b16 %v1774
      %v1851 = vunpack.c.l.b16 %v1775
      %v1852 = vunpack.c.l.b16 %v1776
      %v1853 = vunpack.c.l.b16 %v1777
      %v1854 = vunpack.c.l.b16 %v1778
      %v1855 = vunpack.c.l.b16 %v1779
      %v1856 = vunpack.c.l.b16 %v1780
      %v1857 = vunpack.c.l.b16 %v1781
      %v1858 = vunpack.c.l.b16 %v1782
      %v1859 = vunpack.c.l.b16 %v1783
      %v1860 = vunpack.c.l.b16 %v1784
      %v1861 = vunpack.c.l.b16 %v1785
      %v1862 = vunpack.c.l.b16 %v1786
      %v1863 = vunpack.c.l.b16 %v1787
      %v1864 = vunpack.c.l.b16 %v1788
      %v1865 = vunpack.c.l.b16 %v1789
      %v1866 = vunpack.c.l.b16 %v1790
      %v1867 = vunpack.c.l.b16 %v1791
      %v1868 = vunpack.c.l.b16 %v1792
      %v1869 = vunpack.c.l.b16 %v1793
      %v1870 = vpack.c.b16 %v1834, %v1833
      %v1871 = vpack.c.b16 %v1836, %v1835
      %v1872 = vpack.c.b16 %v1838, %v1837
      %v1873 = vpack.c.b16 %v1840, %v1839
      %v1874 = vpack.c.b16 %v1842, %v1841
      %v1875 = vpack.c.b16 %v1844, %v1843
      %v1876 = vpack.c.b16 %v1846, %v1845
      %v1877 = vpack.c.b16 %v1848, %v1847
      %v1878 = vpack.c.b16 %v1850, %v1849
      %v1879 = vpack.c.b16 %v1852, %v1851
      %v1880 = vpack.c.b16 %v1854, %v1853
      %v1881 = vpack.c.b16 %v1856, %v1855
      %v1882 = vpack.c.b16 %v1858, %v1857
      %v1883 = vpack.c.b16 %v1860, %v1859
      %v1884 = vpack.c.b16 %v1862, %v1861
      %v1885 = vpack.c.b16 %v1864, %v1863
      %v1886 = vpack.c.b16 %v1866, %v1865
      %v1887 = vpack.c.b16 %v1868, %v1867
      %v1888 = vpack.c.b16 %v1869, %v1869
      %v1889 = vrot.slane %v1870, 1
      %v1890 = vrot.slane %v1871, 1
      %v1891 = vsel %vm1377, %v1889, %v1890
      %v1892 = vrot.slane %v1872, 1
      %v1893 = vsel %vm1377, %v1890, %v1892
      %v1894 = vrot.slane %v1873, 1
      %v1895 = vsel %vm1377, %v1892, %v1894
      %v1896 = vrot.slane %v1874, 1
      %v1897 = vsel %vm1377, %v1894, %v1896
      %v1898 = vrot.slane %v1875, 1
      %v1899 = vsel %vm1377, %v1896, %v1898
      %v1900 = vrot.slane %v1876, 1
      %v1901 = vsel %vm1377, %v1898, %v1900
      %v1902 = vrot.slane %v1877, 1
      %v1903 = vsel %vm1377, %v1900, %v1902
      %v1904 = vrot.slane %v1878, 1
      %v1905 = vsel %vm1377, %v1902, %v1904
      %v1906 = vrot.slane %v1879, 1
      %v1907 = vsel %vm1377, %v1904, %v1906
      %v1908 = vrot.slane %v1880, 1
      %v1909 = vsel %vm1377, %v1906, %v1908
      %v1910 = vrot.slane %v1881, 1
      %v1911 = vsel %vm1377, %v1908, %v1910
      %v1912 = vrot.slane %v1882, 1
      %v1913 = vsel %vm1377, %v1910, %v1912
      %v1914 = vrot.slane %v1883, 1
      %v1915 = vsel %vm1377, %v1912, %v1914
      %v1916 = vrot.slane %v1884, 1
      %v1917 = vsel %vm1377, %v1914, %v1916
      %v1918 = vrot.slane %v1885, 1
      %v1919 = vsel %vm1377, %v1916, %v1918
      %v1920 = vrot.slane %v1886, 1
      %v1921 = vsel %vm1377, %v1918, %v1920
      %v1922 = vrot.slane %v1887, 1
      %v1923 = vsel %vm1377, %v1920, %v1922
      %v1924 = vrot.slane %v1888, 1
      %v1925 = vsel %vm1377, %v1922, %v1924
      %v1927 = vsel %vm350, %v1891, 0
      %v1930 = vsel %vm350, %v1893, 0
      %v1933 = vsel %vm350, %v1895, 0
      %v1936 = vsel %vm350, %v1897, 0
      %v1939 = vsel %vm350, %v1899, 0
      %v1942 = vsel %vm350, %v1901, 0
      %v1945 = vsel %vm350, %v1903, 0
      %v1948 = vsel %vm350, %v1905, 0
      %v1951 = vsel %vm350, %v1907, 0
      %v1954 = vsel %vm350, %v1909, 0
      %v1957 = vsel %vm350, %v1911, 0
      %v1960 = vsel %vm350, %v1913, 0
      %v1963 = vsel %vm350, %v1915, 0
      %v1966 = vsel %vm350, %v1917, 0
      %v1969 = vsel %vm350, %v1919, 0
      %v1972 = vsel %vm350, %v1921, 0
      %v1975 = vsel %vm350, %v1923, 0
      %v1978 = vsel %vm350, %v1925, 0
      %v1981 = vsel %vm405, %v1795, 0
      %1983 = vmatprep.subr.bf16.mxu0 0
      %1984 = vmatpush1.bf16.msra.mxu0 %v1981
      %1985 = vmatprep.subr.bf16.mxu0 0
      %1986 = vmatpush1.bf16.msra.mxu0 0
      %1987 = vmatprep.subr.bf16.mxu0 0
      %1988 = vmatpush1.bf16.msra.mxu0 0
      %1989 = vmatprep.subr.bf16.mxu0 0
      %1990 = vmatpush1.bf16.msra.mxu0 0
      %1991 = vmatprep.subr.bf16.mxu0 0
      %1992 = vmatpush1.bf16.msra.mxu0 0
      %1993 = vmatprep.subr.bf16.mxu0 0
      %1994 = vmatpush1.bf16.msra.mxu0 0
      %1995 = vmatprep.subr.bf16.mxu0 0
      %1996 = vmatpush1.bf16.msra.mxu0 0
      %1997 = vmatprep.subr.bf16.mxu0 0
      %1998 = vmatpush1.bf16.msra.mxu0 0
      %1999 = vmatprep.subr.bf16.mxu0 0
      %2000 = vmatpush1.bf16.msra.mxu0 0
      %2001 = vmatprep.subr.bf16.mxu0 0
      %2002 = vmatpush1.bf16.msra.mxu0 0
      %2003 = vmatprep.subr.bf16.mxu0 0
      %2004 = vmatpush1.bf16.msra.mxu0 0
      %2005 = vmatprep.subr.bf16.mxu0 0
      %2006 = vmatpush1.bf16.msra.mxu0 0
      %2007 = vmatprep.subr.bf16.mxu0 0
      %2008 = vmatpush1.bf16.msra.mxu0 0
      %2009 = vmatprep.subr.bf16.mxu0 0
      %2010 = vmatpush1.bf16.msra.mxu0 0
      %2011 = vmatprep.subr.bf16.mxu0 0
      %2012 = vmatpush1.bf16.msra.mxu0 0
      %2013 = vmatprep.subr.bf16.mxu0 0
      %2014 = vmatpush1.bf16.msra.mxu0 0
      %2015 = vmatprep.mubr.bf16.mxu0 0
      %2016 = vmatmul.mubr.bf16.gmra.mrb[0].mxu0 %v1927
      %v2017 = vpop.f32.mrb[0].mxu0
      %v2018 = vadd.f32 0.0, %v2017
      %v2019 = vpop.f32.mrb[0].mxu0
      %v2020 = vpop.f32.mrb[0].mxu0
      %v2021 = vadd.f32 0.0, %v2020
      %v2022 = vpop.f32.mrb[0].mxu0
      %2023 = vmatprep.mubr.bf16.mxu0 0
      %2024 = vmatmul.mubr.bf16.gmra.mrb[0].mxu0 %v1930
      %v2025 = vpop.f32.mrb[0].mxu0
      %v2026 = vadd.f32 0.0, %v2025
      %v2027 = vpop.f32.mrb[0].mxu0
      %v2028 = vpop.f32.mrb[0].mxu0
      %v2029 = vadd.f32 0.0, %v2028
      %v2030 = vpop.f32.mrb[0].mxu0
      %2031 = vmatprep.mubr.bf16.mxu0 0
      %2032 = vmatmul.mubr.bf16.gmra.mrb[0].mxu0 %v1933
      %v2033 = vpop.f32.mrb[0].mxu0
      %v2034 = vadd.f32 0.0, %v2033
      %v2035 = vpop.f32.mrb[0].mxu0
      %v2036 = vpop.f32.mrb[0].mxu0
      %v2037 = vadd.f32 0.0, %v2036
      %v2038 = vpop.f32.mrb[0].mxu0
      %2039 = vmatprep.mubr.bf16.mxu0 0
      %2040 = vmatmul.mubr.bf16.gmra.mrb[0].mxu0 %v1936
      %v2041 = vpop.f32.mrb[0].mxu0
      %v2042 = vadd.f32 0.0, %v2041
      %v2043 = vpop.f32.mrb[0].mxu0
      %v2044 = vpop.f32.mrb[0].mxu0
      %v2045 = vadd.f32 0.0, %v2044
      %v2046 = vpop.f32.mrb[0].mxu0
      %2047 = vmatprep.mubr.bf16.mxu0 0
      %2048 = vmatmul.mubr.bf16.gmra.mrb[0].mxu0 %v1939
      %v2049 = vpop.f32.mrb[0].mxu0
      %v2050 = vadd.f32 0.0, %v2049
      %v2051 = vpop.f32.mrb[0].mxu0
      %v2052 = vpop.f32.mrb[0].mxu0
      %v2053 = vadd.f32 0.0, %v2052
      %v2054 = vpop.f32.mrb[0].mxu0
      %2055 = vmatprep.mubr.bf16.mxu0 0
      %2056 = vmatmul.mubr.bf16.gmra.mrb[0].mxu0 %v1942
      %v2057 = vpop.f32.mrb[0].mxu0
      %v2058 = vadd.f32 0.0, %v2057
      %v2059 = vpop.f32.mrb[0].mxu0
      %v2060 = vpop.f32.mrb[0].mxu0
      %v2061 = vadd.f32 0.0, %v2060
      %v2062 = vpop.f32.mrb[0].mxu0
      %2063 = vmatprep.mubr.bf16.mxu0 0
      %2064 = vmatmul.mubr.bf16.gmra.mrb[0].mxu0 %v1945
      %v2065 = vpop.f32.mrb[0].mxu0
      %v2066 = vadd.f32 0.0, %v2065
      %v2067 = vpop.f32.mrb[0].mxu0
      %v2068 = vpop.f32.mrb[0].mxu0
      %v2069 = vadd.f32 0.0, %v2068
      %v2070 = vpop.f32.mrb[0].mxu0
      %2071 = vmatprep.mubr.bf16.mxu0 0
      %2072 = vmatmul.mubr.bf16.gmra.mrb[0].mxu0 %v1948
      %v2073 = vpop.f32.mrb[0].mxu0
      %v2074 = vadd.f32 0.0, %v2073
      %v2075 = vpop.f32.mrb[0].mxu0
      %v2076 = vpop.f32.mrb[0].mxu0
      %v2077 = vadd.f32 0.0, %v2076
      %v2078 = vpop.f32.mrb[0].mxu0
      %2079 = vmatprep.mubr.bf16.mxu0 0
      %2080 = vmatmul.mubr.bf16.gmra.mrb[0].mxu0 %v1951
      %v2081 = vpop.f32.mrb[0].mxu0
      %v2082 = vadd.f32 0.0, %v2081
      %v2083 = vpop.f32.mrb[0].mxu0
      %v2084 = vpop.f32.mrb[0].mxu0
      %v2085 = vadd.f32 0.0, %v2084
      %v2086 = vpop.f32.mrb[0].mxu0
      %2087 = vmatprep.mubr.bf16.mxu0 0
      %2088 = vmatmul.mubr.bf16.gmra.mrb[0].mxu0 %v1954
      %v2089 = vpop.f32.mrb[0].mxu0
      %v2090 = vadd.f32 0.0, %v2089
      %v2091 = vpop.f32.mrb[0].mxu0
      %v2092 = vpop.f32.mrb[0].mxu0
      %v2093 = vadd.f32 0.0, %v2092
      %v2094 = vpop.f32.mrb[0].mxu0
      %2095 = vmatprep.mubr.bf16.mxu0 0
      %2096 = vmatmul.mubr.bf16.gmra.mrb[0].mxu0 %v1957
      %v2097 = vpop.f32.mrb[0].mxu0
      %v2098 = vadd.f32 0.0, %v2097
      %v2099 = vpop.f32.mrb[0].mxu0
      %v2100 = vpop.f32.mrb[0].mxu0
      %v2101 = vadd.f32 0.0, %v2100
      %v2102 = vpop.f32.mrb[0].mxu0
      %2103 = vmatprep.mubr.bf16.mxu0 0
      %2104 = vmatmul.mubr.bf16.gmra.mrb[0].mxu0 %v1960
      %v2105 = vpop.f32.mrb[0].mxu0
      %v2106 = vadd.f32 0.0, %v2105
      %v2107 = vpop.f32.mrb[0].mxu0
      %v2108 = vpop.f32.mrb[0].mxu0
      %v2109 = vadd.f32 0.0, %v2108
      %v2110 = vpop.f32.mrb[0].mxu0
      %2111 = vmatprep.mubr.bf16.mxu0 0
      %2112 = vmatmul.mubr.bf16.gmra.mrb[0].mxu0 %v1963
      %v2113 = vpop.f32.mrb[0].mxu0
      %v2114 = vadd.f32 0.0, %v2113
      %v2115 = vpop.f32.mrb[0].mxu0
      %v2116 = vpop.f32.mrb[0].mxu0
      %v2117 = vadd.f32 0.0, %v2116
      %v2118 = vpop.f32.mrb[0].mxu0
      %2119 = vmatprep.mubr.bf16.mxu0 0
      %2120 = vmatmul.mubr.bf16.gmra.mrb[0].mxu0 %v1966
      %v2121 = vpop.f32.mrb[0].mxu0
      %v2122 = vadd.f32 0.0, %v2121
      %v2123 = vpop.f32.mrb[0].mxu0
      %v2124 = vpop.f32.mrb[0].mxu0
      %v2125 = vadd.f32 0.0, %v2124
      %v2126 = vpop.f32.mrb[0].mxu0
      %2127 = vmatprep.mubr.bf16.mxu0 0
      %2128 = vmatmul.mubr.bf16.gmra.mrb[0].mxu0 %v1969
      %v2129 = vpop.f32.mrb[0].mxu0
      %v2130 = vadd.f32 0.0, %v2129
      %v2131 = vpop.f32.mrb[0].mxu0
      %v2132 = vpop.f32.mrb[0].mxu0
      %v2133 = vadd.f32 0.0, %v2132
      %v2134 = vpop.f32.mrb[0].mxu0
      %2135 = vmatprep.mubr.bf16.mxu0 0
      %2136 = vmatmul.mubr.bf16.gmra.mrb[0].mxu0 %v1972
      %v2137 = vpop.f32.mrb[0].mxu0
      %v2138 = vadd.f32 0.0, %v2137
      %v2139 = vpop.f32.mrb[0].mxu0
      %v2140 = vpop.f32.mrb[0].mxu0
      %v2141 = vadd.f32 0.0, %v2140
      %v2142 = vpop.f32.mrb[0].mxu0
      %2143 = vmatprep.mubr.bf16.mxu0 0
      %2144 = vmatmul.mubr.bf16.gmra.mrb[0].mxu0 %v1975
      %v2145 = vpop.f32.mrb[0].mxu0
      %v2146 = vadd.f32 0.0, %v2145
      %v2147 = vpop.f32.mrb[0].mxu0
      %v2148 = vpop.f32.mrb[0].mxu0
      %v2149 = vadd.f32 0.0, %v2148
      %v2150 = vpop.f32.mrb[0].mxu0
      %2151 = vmatprep.mubr.bf16.mxu0 0
      %2152 = vmatmul.mubr.bf16.gmra.mrb[0].mxu0 %v1978
      %v2153 = vpop.f32.mrb[0].mxu0
      %v2154 = vadd.f32 0.0, %v2153
      %v2155 = vpop.f32.mrb[0].mxu0
      %v2156 = vpop.f32.mrb[0].mxu0
      %v2157 = vadd.f32 0.0, %v2156
      %v2158 = vpop.f32.mrb[0].mxu0
      %2159 = vdwg.mxu0
      %v2160 = vld [vmem:[#allocation2] sm:$0xff]
      %v2161 = vld [vmem:[#allocation2 + $0x8] sm:$0xff]
      %v2162 = vld [vmem:[#allocation2 + $0x10] sm:$0xff]
      %v2163 = vld [vmem:[#allocation2 + $0x18] sm:$0xff]
      %v2164 = vld [vmem:[#allocation2 + $0x20] sm:$0xff]
      %v2165 = vld [vmem:[#allocation2 + $0x28] sm:$0xff]
      %v2166 = vld [vmem:[#allocation2 + $0x30] sm:$0xff]
      %v2167 = vld [vmem:[#allocation2 + $0x38] sm:$0xff]
      %v2168 = vld [vmem:[#allocation2 + $0x40] sm:$0xff]
      %v2169 = vld [vmem:[#allocation2 + $0x48] sm:$0xff]
      %v2170 = vld [vmem:[#allocation2 + $0x50] sm:$0xff]
      %v2171 = vld [vmem:[#allocation2 + $0x58] sm:$0xff]
      %v2172 = vld [vmem:[#allocation2 + $0x60] sm:$0xff]
      %v2173 = vld [vmem:[#allocation2 + $0x68] sm:$0xff]
      %v2174 = vld [vmem:[#allocation2 + $0x70] sm:$0xff]
      %v2175 = vld [vmem:[#allocation2 + $0x78] sm:$0xff]
      %v2176 = vld [vmem:[#allocation2 + $0x80] sm:$0xff]
      %v2177 = vld [vmem:[#allocation2 + $0x88] sm:$0xff]
      %v2178 = vld [vmem:[#allocation2 + $0x90] sm:$0xff]
      %v2179 = vld [vmem:[#allocation2 + $0x98] sm:$0xff]
      %v2180 = vld [vmem:[#allocation2 + $0xa0] sm:$0xff]
      %v2181 = vld [vmem:[#allocation2 + $0xa8] sm:$0xff]
      %v2182 = vld [vmem:[#allocation2 + $0xb0] sm:$0xff]
      %v2183 = vld [vmem:[#allocation2 + $0xb8] sm:$0xff]
      %v2184 = vld [vmem:[#allocation2 + $0xc0] sm:$0xff]
      %v2185 = vld [vmem:[#allocation2 + $0xc8] sm:$0xff]
      %v2186 = vld [vmem:[#allocation2 + $0xd0] sm:$0xff]
      %v2187 = vld [vmem:[#allocation2 + $0xd8] sm:$0xff]
      %v2188 = vld [vmem:[#allocation2 + $0xe0] sm:$0xff]
      %v2189 = vld [vmem:[#allocation2 + $0xe8] sm:$0xff]
      %v2190 = vld [vmem:[#allocation2 + $0xf0] sm:$0xff]
      %v2191 = vld [vmem:[#allocation2 + $0xf8] sm:$0xff]
      %v2192 = vld [vmem:[#allocation2 + $0x100] sm:$0xff]
      %v2193 = vld [vmem:[#allocation2 + $0x108] sm:$0xff]
      %v2194 = vld [vmem:[#allocation2 + $0x110] sm:$0xff]
      %v2195 = vld [vmem:[#allocation2 + $0x118] sm:$0xff]
      %v2196 = vadd.f32 %v2160, %v2018
      %v2197 = vadd.f32 %v2161, %v2021
      %v2198 = vadd.f32 %v2162, %v2026
      %v2199 = vadd.f32 %v2163, %v2029
      %v2200 = vadd.f32 %v2164, %v2034
      %v2201 = vadd.f32 %v2165, %v2037
      %v2202 = vadd.f32 %v2166, %v2042
      %v2203 = vadd.f32 %v2167, %v2045
      %v2204 = vadd.f32 %v2168, %v2050
      %v2205 = vadd.f32 %v2169, %v2053
      %v2206 = vadd.f32 %v2170, %v2058
      %v2207 = vadd.f32 %v2171, %v2061
      %v2208 = vadd.f32 %v2172, %v2066
      %v2209 = vadd.f32 %v2173, %v2069
      %v2210 = vadd.f32 %v2174, %v2074
      %v2211 = vadd.f32 %v2175, %v2077
      %v2212 = vadd.f32 %v2176, %v2082
      %v2213 = vadd.f32 %v2177, %v2085
      %v2214 = vadd.f32 %v2178, %v2090
      %v2215 = vadd.f32 %v2179, %v2093
      %v2216 = vadd.f32 %v2180, %v2098
      %v2217 = vadd.f32 %v2181, %v2101
      %v2218 = vadd.f32 %v2182, %v2106
      %v2219 = vadd.f32 %v2183, %v2109
      %v2220 = vadd.f32 %v2184, %v2114
      %v2221 = vadd.f32 %v2185, %v2117
      %v2222 = vadd.f32 %v2186, %v2122
      %v2223 = vadd.f32 %v2187, %v2125
      %v2224 = vadd.f32 %v2188, %v2130
      %v2225 = vadd.f32 %v2189, %v2133
      %v2226 = vadd.f32 %v2190, %v2138
      %v2227 = vadd.f32 %v2191, %v2141
      %v2228 = vadd.f32 %v2192, %v2146
      %v2229 = vadd.f32 %v2193, %v2149
      %v2230 = vadd.f32 %v2194, %v2154
      %v2231 = vadd.f32 %v2195, %v2157
      %2232 = vst [vmem:[#allocation2] sm:$0xff] %v2196
      %2233 = vst [vmem:[#allocation2 + $0x8] sm:$0xff] %v2197
      %2234 = vst [vmem:[#allocation2 + $0x10] sm:$0xff] %v2198
      %2235 = vst [vmem:[#allocation2 + $0x18] sm:$0xff] %v2199
      %2236 = vst [vmem:[#allocation2 + $0x20] sm:$0xff] %v2200
      %2237 = vst [vmem:[#allocation2 + $0x28] sm:$0xff] %v2201
      %2238 = vst [vmem:[#allocation2 + $0x30] sm:$0xff] %v2202
      %2239 = vst [vmem:[#allocation2 + $0x38] sm:$0xff] %v2203
      %2240 = vst [vmem:[#allocation2 + $0x40] sm:$0xff] %v2204
      %2241 = vst [vmem:[#allocation2 + $0x48] sm:$0xff] %v2205
      %2242 = vst [vmem:[#allocation2 + $0x50] sm:$0xff] %v2206
      %2243 = vst [vmem:[#allocation2 + $0x58] sm:$0xff] %v2207
      %2244 = vst [vmem:[#allocation2 + $0x60] sm:$0xff] %v2208
      %2245 = vst [vmem:[#allocation2 + $0x68] sm:$0xff] %v2209
      %2246 = vst [vmem:[#allocation2 + $0x70] sm:$0xff] %v2210
      %2247 = vst [vmem:[#allocation2 + $0x78] sm:$0xff] %v2211
      %2248 = vst [vmem:[#allocation2 + $0x80] sm:$0xff] %v2212
      %2249 = vst [vmem:[#allocation2 + $0x88] sm:$0xff] %v2213
      %2250 = vst [vmem:[#allocation2 + $0x90] sm:$0xff] %v2214
      %2251 = vst [vmem:[#allocation2 + $0x98] sm:$0xff] %v2215
      %2252 = vst [vmem:[#allocation2 + $0xa0] sm:$0xff] %v2216
      %2253 = vst [vmem:[#allocation2 + $0xa8] sm:$0xff] %v2217
      %2254 = vst [vmem:[#allocation2 + $0xb0] sm:$0xff] %v2218
      %2255 = vst [vmem:[#allocation2 + $0xb8] sm:$0xff] %v2219
      %2256 = vst [vmem:[#allocation2 + $0xc0] sm:$0xff] %v2220
      %2257 = vst [vmem:[#allocation2 + $0xc8] sm:$0xff] %v2221
      %2258 = vst [vmem:[#allocation2 + $0xd0] sm:$0xff] %v2222
      %2259 = vst [vmem:[#allocation2 + $0xd8] sm:$0xff] %v2223
      %2260 = vst [vmem:[#allocation2 + $0xe0] sm:$0xff] %v2224
      %2261 = vst [vmem:[#allocation2 + $0xe8] sm:$0xff] %v2225
      %2262 = vst [vmem:[#allocation2 + $0xf0] sm:$0xff] %v2226
      %2263 = vst [vmem:[#allocation2 + $0xf8] sm:$0xff] %v2227
      %2264 = vst [vmem:[#allocation2 + $0x100] sm:$0xff] %v2228
      %2265 = vst [vmem:[#allocation2 + $0x108] sm:$0xff] %v2229
      %2266 = vst [vmem:[#allocation2 + $0x110] sm:$0xff] %v2230
      %2267 = vst [vmem:[#allocation2 + $0x118] sm:$0xff] %v2231
      %v2268 = vld [vmem:[%s206 + $0x8] sm:$0xe]
      %v2269 = vld [vmem:[%s206 + $0xc] sm:$0xf]
      %v2270 = vld [vmem:[%s206 + $0x10] sm:$0xf]
      %v2271 = vld [vmem:[%s206 + $0x14] sm:$0xf]
      %v2272 = vld [vmem:[%s206 + $0x18] sm:$0xf]
      %v2273 = vld [vmem:[%s206 + $0x1c] sm:$0xf]
      %v2274 = vld [vmem:[%s206 + $0x20] sm:$0xf]
      %v2275 = vld [vmem:[%s206 + $0x24] sm:$0xf]
      %v2276 = vld [vmem:[%s206 + $0x28] sm:$0xf]
      %v2277 = vld [vmem:[%s206 + $0x2c] sm:$0xf]
      %v2278 = vld [vmem:[%s206 + $0x30] sm:$0xf]
      %v2279 = vld [vmem:[%s206 + $0x34] sm:$0xf]
      %v2280 = vld [vmem:[%s206 + $0x38] sm:$0xf]
      %v2281 = vld [vmem:[%s206 + $0x3c] sm:$0xf]
      %v2282 = vld [vmem:[%s206 + $0x40] sm:$0xf]
      %v2283 = vld [vmem:[%s206 + $0x44] sm:$0xf]
      %v2284 = vld [vmem:[%s206 + $0x48] sm:$0xf]
      %v2285 = vld [vmem:[%s206 + $0x4c] sm:$0xf]
      %v2286 = vld [vmem:[%s206 + $0x50] sm:$0xf]
      %v2287 = vld [vmem:[%s206 + $0x54] sm:$0xf]
      %v2288 = vld [vmem:[%s206 + $0x58] sm:$0xf]
      %v2289 = vld [vmem:[%s206 + $0x5c] sm:$0xf]
      %v2290 = vld [vmem:[%s206 + $0x60] sm:$0xf]
      %v2291 = vld [vmem:[%s206 + $0x64] sm:$0xf]
      %v2292 = vld [vmem:[%s206 + $0x68] sm:$0xf]
      %v2293 = vld [vmem:[%s206 + $0x6c] sm:$0xf]
      %v2294 = vld [vmem:[%s206 + $0x70] sm:$0xf]
      %v2295 = vld [vmem:[%s206 + $0x74] sm:$0xf]
      %v2296 = vld [vmem:[%s206 + $0x78] sm:$0xf]
      %v2297 = vld [vmem:[%s206 + $0x7c] sm:$0xf]
      %v2298 = vld [vmem:[%s206 + $0x80] sm:$0xf]
      %v2299 = vld [vmem:[%s206 + $0x84] sm:$0xf]
      %v2300 = vld [vmem:[%s206 + $0x88] sm:$0xf]
      %v2301 = vld [vmem:[%s206 + $0x8c] sm:$0xf]
      %v2302 = vld [vmem:[%s206 + $0x90] sm:$0xf]
      %v2303 = vld [vmem:[%s206 + $0x94] sm:$0xf]
      %v2304 = vld [vmem:[%s206 + $0x98] sm:$0x3]
      %s2305 = scalar_lea.vmem %s210, 8
      %v2306 = vld [vmem:[%s2305] sm:$0x3]
      %v2344 = vunpack.c.l.b16 %v2268
      %v2345 = vunpack.c.l.b16 %v2269
      %v2346 = vunpack.c.l.b16 %v2270
      %v2347 = vunpack.c.l.b16 %v2271
      %v2348 = vunpack.c.l.b16 %v2272
      %v2349 = vunpack.c.l.b16 %v2273
      %v2350 = vunpack.c.l.b16 %v2274
      %v2351 = vunpack.c.l.b16 %v2275
      %v2352 = vunpack.c.l.b16 %v2276
      %v2353 = vunpack.c.l.b16 %v2277
      %v2354 = vunpack.c.l.b16 %v2278
      %v2355 = vunpack.c.l.b16 %v2279
      %v2356 = vunpack.c.l.b16 %v2280
      %v2357 = vunpack.c.l.b16 %v2281
      %v2358 = vunpack.c.l.b16 %v2282
      %v2359 = vunpack.c.l.b16 %v2283
      %v2360 = vunpack.c.l.b16 %v2284
      %v2361 = vunpack.c.l.b16 %v2285
      %v2362 = vunpack.c.l.b16 %v2286
      %v2363 = vunpack.c.l.b16 %v2287
      %v2364 = vunpack.c.l.b16 %v2288
      %v2365 = vunpack.c.l.b16 %v2289
      %v2366 = vunpack.c.l.b16 %v2290
      %v2367 = vunpack.c.l.b16 %v2291
      %v2368 = vunpack.c.l.b16 %v2292
      %v2369 = vunpack.c.l.b16 %v2293
      %v2370 = vunpack.c.l.b16 %v2294
      %v2371 = vunpack.c.l.b16 %v2295
      %v2372 = vunpack.c.l.b16 %v2296
      %v2373 = vunpack.c.l.b16 %v2297
      %v2374 = vunpack.c.l.b16 %v2298
      %v2375 = vunpack.c.l.b16 %v2299
      %v2376 = vunpack.c.l.b16 %v2300
      %v2377 = vunpack.c.l.b16 %v2301
      %v2378 = vunpack.c.l.b16 %v2302
      %v2379 = vunpack.c.l.b16 %v2303
      %v2380 = vunpack.c.l.b16 %v2304
      %v2381 = vpack.c.b16 %v2345, %v2344
      %v2382 = vpack.c.b16 %v2347, %v2346
      %v2383 = vpack.c.b16 %v2349, %v2348
      %v2384 = vpack.c.b16 %v2351, %v2350
      %v2385 = vpack.c.b16 %v2353, %v2352
      %v2386 = vpack.c.b16 %v2355, %v2354
      %v2387 = vpack.c.b16 %v2357, %v2356
      %v2388 = vpack.c.b16 %v2359, %v2358
      %v2389 = vpack.c.b16 %v2361, %v2360
      %v2390 = vpack.c.b16 %v2363, %v2362
      %v2391 = vpack.c.b16 %v2365, %v2364
      %v2392 = vpack.c.b16 %v2367, %v2366
      %v2393 = vpack.c.b16 %v2369, %v2368
      %v2394 = vpack.c.b16 %v2371, %v2370
      %v2395 = vpack.c.b16 %v2373, %v2372
      %v2396 = vpack.c.b16 %v2375, %v2374
      %v2397 = vpack.c.b16 %v2377, %v2376
      %v2398 = vpack.c.b16 %v2379, %v2378
      %v2399 = vpack.c.b16 %v2380, %v2380
      %vm2400 = vsmask.f32 6400
      %v2402 = vshrl.u32 %v2381, 16
      %v2404 = vrot.slane %v2402, 1
      %v2405 = vshll.u32 %v2381, 16
      %v2407 = vrot.slane %v2405, 2
      %v2408 = vor.u32 %v2404, %v2407
      %v2410 = vshrl.u32 %v2382, 16
      %v2412 = vrot.slane %v2410, 1
      %v2413 = vshll.u32 %v2382, 16
      %v2415 = vrot.slane %v2413, 2
      %v2416 = vor.u32 %v2412, %v2415
      %v2417 = vsel %vm2400, %v2408, %v2416
      %v2419 = vshrl.u32 %v2383, 16
      %v2421 = vrot.slane %v2419, 1
      %v2422 = vshll.u32 %v2383, 16
      %v2424 = vrot.slane %v2422, 2
      %v2425 = vor.u32 %v2421, %v2424
      %v2426 = vsel %vm2400, %v2416, %v2425
      %v2428 = vshrl.u32 %v2384, 16
      %v2430 = vrot.slane %v2428, 1
      %v2431 = vshll.u32 %v2384, 16
      %v2433 = vrot.slane %v2431, 2
      %v2434 = vor.u32 %v2430, %v2433
      %v2435 = vsel %vm2400, %v2425, %v2434
      %v2437 = vshrl.u32 %v2385, 16
      %v2439 = vrot.slane %v2437, 1
      %v2440 = vshll.u32 %v2385, 16
      %v2442 = vrot.slane %v2440, 2
      %v2443 = vor.u32 %v2439, %v2442
      %v2444 = vsel %vm2400, %v2434, %v2443
      %v2446 = vshrl.u32 %v2386, 16
      %v2448 = vrot.slane %v2446, 1
      %v2449 = vshll.u32 %v2386, 16
      %v2451 = vrot.slane %v2449, 2
      %v2452 = vor.u32 %v2448, %v2451
      %v2453 = vsel %vm2400, %v2443, %v2452
      %v2455 = vshrl.u32 %v2387, 16
      %v2457 = vrot.slane %v2455, 1
      %v2458 = vshll.u32 %v2387, 16
      %v2460 = vrot.slane %v2458, 2
      %v2461 = vor.u32 %v2457, %v2460
      %v2462 = vsel %vm2400, %v2452, %v2461
      %v2464 = vshrl.u32 %v2388, 16
      %v2466 = vrot.slane %v2464, 1
      %v2467 = vshll.u32 %v2388, 16
      %v2469 = vrot.slane %v2467, 2
      %v2470 = vor.u32 %v2466, %v2469
      %v2471 = vsel %vm2400, %v2461, %v2470
      %v2473 = vshrl.u32 %v2389, 16
      %v2475 = vrot.slane %v2473, 1
      %v2476 = vshll.u32 %v2389, 16
      %v2478 = vrot.slane %v2476, 2
      %v2479 = vor.u32 %v2475, %v2478
      %v2480 = vsel %vm2400, %v2470, %v2479
      %v2482 = vshrl.u32 %v2390, 16
      %v2484 = vrot.slane %v2482, 1
      %v2485 = vshll.u32 %v2390, 16
      %v2487 = vrot.slane %v2485, 2
      %v2488 = vor.u32 %v2484, %v2487
      %v2489 = vsel %vm2400, %v2479, %v2488
      %v2491 = vshrl.u32 %v2391, 16
      %v2493 = vrot.slane %v2491, 1
      %v2494 = vshll.u32 %v2391, 16
      %v2496 = vrot.slane %v2494, 2
      %v2497 = vor.u32 %v2493, %v2496
      %v2498 = vsel %vm2400, %v2488, %v2497
      %v2500 = vshrl.u32 %v2392, 16
      %v2502 = vrot.slane %v2500, 1
      %v2503 = vshll.u32 %v2392, 16
      %v2505 = vrot.slane %v2503, 2
      %v2506 = vor.u32 %v2502, %v2505
      %v2507 = vsel %vm2400, %v2497, %v2506
      %v2509 = vshrl.u32 %v2393, 16
      %v2511 = vrot.slane %v2509, 1
      %v2512 = vshll.u32 %v2393, 16
      %v2514 = vrot.slane %v2512, 2
      %v2515 = vor.u32 %v2511, %v2514
      %v2516 = vsel %vm2400, %v2506, %v2515
      %v2518 = vshrl.u32 %v2394, 16
      %v2520 = vrot.slane %v2518, 1
      %v2521 = vshll.u32 %v2394, 16
      %v2523 = vrot.slane %v2521, 2
      %v2524 = vor.u32 %v2520, %v2523
      %v2525 = vsel %vm2400, %v2515, %v2524
      %v2527 = vshrl.u32 %v2395, 16
      %v2529 = vrot.slane %v2527, 1
      %v2530 = vshll.u32 %v2395, 16
      %v2532 = vrot.slane %v2530, 2
      %v2533 = vor.u32 %v2529, %v2532
      %v2534 = vsel %vm2400, %v2524, %v2533
      %v2536 = vshrl.u32 %v2396, 16
      %v2538 = vrot.slane %v2536, 1
      %v2539 = vshll.u32 %v2396, 16
      %v2541 = vrot.slane %v2539, 2
      %v2542 = vor.u32 %v2538, %v2541
      %v2543 = vsel %vm2400, %v2533, %v2542
      %v2545 = vshrl.u32 %v2397, 16
      %v2547 = vrot.slane %v2545, 1
      %v2548 = vshll.u32 %v2397, 16
      %v2550 = vrot.slane %v2548, 2
      %v2551 = vor.u32 %v2547, %v2550
      %v2552 = vsel %vm2400, %v2542, %v2551
      %v2554 = vshrl.u32 %v2398, 16
      %v2556 = vrot.slane %v2554, 1
      %v2557 = vshll.u32 %v2398, 16
      %v2559 = vrot.slane %v2557, 2
      %v2560 = vor.u32 %v2556, %v2559
      %v2561 = vsel %vm2400, %v2551, %v2560
      %v2563 = vshrl.u32 %v2399, 16
      %v2565 = vrot.slane %v2563, 1
      %v2566 = vshll.u32 %v2399, 16
      %v2568 = vrot.slane %v2566, 2
      %v2569 = vor.u32 %v2565, %v2568
      %v2570 = vsel %vm2400, %v2560, %v2569
      %v2572 = vsel %vm350, %v2417, 0
      %v2575 = vsel %vm350, %v2426, 0
      %v2578 = vsel %vm350, %v2435, 0
      %v2581 = vsel %vm350, %v2444, 0
      %v2584 = vsel %vm350, %v2453, 0
      %v2587 = vsel %vm350, %v2462, 0
      %v2590 = vsel %vm350, %v2471, 0
      %v2593 = vsel %vm350, %v2480, 0
      %v2596 = vsel %vm350, %v2489, 0
      %v2599 = vsel %vm350, %v2498, 0
      %v2602 = vsel %vm350, %v2507, 0
      %v2605 = vsel %vm350, %v2516, 0
      %v2608 = vsel %vm350, %v2525, 0
      %v2611 = vsel %vm350, %v2534, 0
      %v2614 = vsel %vm350, %v2543, 0
      %v2617 = vsel %vm350, %v2552, 0
      %v2620 = vsel %vm350, %v2561, 0
      %v2623 = vsel %vm350, %v2570, 0
      %v2626 = vsel %vm405, %v2306, 0
      %2628 = vmatprep.subr.bf16.mxu0 0
      %2629 = vmatpush1.bf16.msra.mxu0 %v2626
      %2630 = vmatprep.subr.bf16.mxu0 0
      %2631 = vmatpush1.bf16.msra.mxu0 0
      %2632 = vmatprep.subr.bf16.mxu0 0
      %2633 = vmatpush1.bf16.msra.mxu0 0
      %2634 = vmatprep.subr.bf16.mxu0 0
      %2635 = vmatpush1.bf16.msra.mxu0 0
      %2636 = vmatprep.subr.bf16.mxu0 0
      %2637 = vmatpush1.bf16.msra.mxu0 0
      %2638 = vmatprep.subr.bf16.mxu0 0
      %2639 = vmatpush1.bf16.msra.mxu0 0
      %2640 = vmatprep.subr.bf16.mxu0 0
      %2641 = vmatpush1.bf16.msra.mxu0 0
      %2642 = vmatprep.subr.bf16.mxu0 0
      %2643 = vmatpush1.bf16.msra.mxu0 0
      %2644 = vmatprep.subr.bf16.mxu0 0
      %2645 = vmatpush1.bf16.msra.mxu0 0
      %2646 = vmatprep.subr.bf16.mxu0 0
      %2647 = vmatpush1.bf16.msra.mxu0 0
      %2648 = vmatprep.subr.bf16.mxu0 0
      %2649 = vmatpush1.bf16.msra.mxu0 0
      %2650 = vmatprep.subr.bf16.mxu0 0
      %2651 = vmatpush1.bf16.msra.mxu0 0
      %2652 = vmatprep.subr.bf16.mxu0 0
      %2653 = vmatpush1.bf16.msra.mxu0 0
      %2654 = vmatprep.subr.bf16.mxu0 0
      %2655 = vmatpush1.bf16.msra.mxu0 0
      %2656 = vmatprep.subr.bf16.mxu0 0
      %2657 = vmatpush1.bf16.msra.mxu0 0
      %2658 = vmatprep.subr.bf16.mxu0 0
      %2659 = vmatpush1.bf16.msra.mxu0 0
      %2660 = vmatprep.mubr.bf16.mxu0 0
      %2661 = vmatmul.mubr.bf16.gmra.mrb[0].mxu0 %v2572
      %v2662 = vpop.f32.mrb[0].mxu0
      %v2663 = vadd.f32 0.0, %v2662
      %v2664 = vpop.f32.mrb[0].mxu0
      %v2665 = vpop.f32.mrb[0].mxu0
      %v2666 = vadd.f32 0.0, %v2665
      %v2667 = vpop.f32.mrb[0].mxu0
      %2668 = vmatprep.mubr.bf16.mxu0 0
      %2669 = vmatmul.mubr.bf16.gmra.mrb[0].mxu0 %v2575
      %v2670 = vpop.f32.mrb[0].mxu0
      %v2671 = vadd.f32 0.0, %v2670
      %v2672 = vpop.f32.mrb[0].mxu0
      %v2673 = vpop.f32.mrb[0].mxu0
      %v2674 = vadd.f32 0.0, %v2673
      %v2675 = vpop.f32.mrb[0].mxu0
      %2676 = vmatprep.mubr.bf16.mxu0 0
      %2677 = vmatmul.mubr.bf16.gmra.mrb[0].mxu0 %v2578
      %v2678 = vpop.f32.mrb[0].mxu0
      %v2679 = vadd.f32 0.0, %v2678
      %v2680 = vpop.f32.mrb[0].mxu0
      %v2681 = vpop.f32.mrb[0].mxu0
      %v2682 = vadd.f32 0.0, %v2681
      %v2683 = vpop.f32.mrb[0].mxu0
      %2684 = vmatprep.mubr.bf16.mxu0 0
      %2685 = vmatmul.mubr.bf16.gmra.mrb[0].mxu0 %v2581
      %v2686 = vpop.f32.mrb[0].mxu0
      %v2687 = vadd.f32 0.0, %v2686
      %v2688 = vpop.f32.mrb[0].mxu0
      %v2689 = vpop.f32.mrb[0].mxu0
      %v2690 = vadd.f32 0.0, %v2689
      %v2691 = vpop.f32.mrb[0].mxu0
      %2692 = vmatprep.mubr.bf16.mxu0 0
      %2693 = vmatmul.mubr.bf16.gmra.mrb[0].mxu0 %v2584
      %v2694 = vpop.f32.mrb[0].mxu0
      %v2695 = vadd.f32 0.0, %v2694
      %v2696 = vpop.f32.mrb[0].mxu0
      %v2697 = vpop.f32.mrb[0].mxu0
      %v2698 = vadd.f32 0.0, %v2697
      %v2699 = vpop.f32.mrb[0].mxu0
      %2700 = vmatprep.mubr.bf16.mxu0 0
      %2701 = vmatmul.mubr.bf16.gmra.mrb[0].mxu0 %v2587
      %v2702 = vpop.f32.mrb[0].mxu0
      %v2703 = vadd.f32 0.0, %v2702
      %v2704 = vpop.f32.mrb[0].mxu0
      %v2705 = vpop.f32.mrb[0].mxu0
      %v2706 = vadd.f32 0.0, %v2705
      %v2707 = vpop.f32.mrb[0].mxu0
      %2708 = vmatprep.mubr.bf16.mxu0 0
      %2709 = vmatmul.mubr.bf16.gmra.mrb[0].mxu0 %v2590
      %v2710 = vpop.f32.mrb[0].mxu0
      %v2711 = vadd.f32 0.0, %v2710
      %v2712 = vpop.f32.mrb[0].mxu0
      %v2713 = vpop.f32.mrb[0].mxu0
      %v2714 = vadd.f32 0.0, %v2713
      %v2715 = vpop.f32.mrb[0].mxu0
      %2716 = vmatprep.mubr.bf16.mxu0 0
      %2717 = vmatmul.mubr.bf16.gmra.mrb[0].mxu0 %v2593
      %v2718 = vpop.f32.mrb[0].mxu0
      %v2719 = vadd.f32 0.0, %v2718
      %v2720 = vpop.f32.mrb[0].mxu0
      %v2721 = vpop.f32.mrb[0].mxu0
      %v2722 = vadd.f32 0.0, %v2721
      %v2723 = vpop.f32.mrb[0].mxu0
      %2724 = vmatprep.mubr.bf16.mxu0 0
      %2725 = vmatmul.mubr.bf16.gmra.mrb[0].mxu0 %v2596
      %v2726 = vpop.f32.mrb[0].mxu0
      %v2727 = vadd.f32 0.0, %v2726
      %v2728 = vpop.f32.mrb[0].mxu0
      %v2729 = vpop.f32.mrb[0].mxu0
      %v2730 = vadd.f32 0.0, %v2729
      %v2731 = vpop.f32.mrb[0].mxu0
      %2732 = vmatprep.mubr.bf16.mxu0 0
      %2733 = vmatmul.mubr.bf16.gmra.mrb[0].mxu0 %v2599
      %v2734 = vpop.f32.mrb[0].mxu0
      %v2735 = vadd.f32 0.0, %v2734
      %v2736 = vpop.f32.mrb[0].mxu0
      %v2737 = vpop.f32.mrb[0].mxu0
      %v2738 = vadd.f32 0.0, %v2737
      %v2739 = vpop.f32.mrb[0].mxu0
      %2740 = vmatprep.mubr.bf16.mxu0 0
      %2741 = vmatmul.mubr.bf16.gmra.mrb[0].mxu0 %v2602
      %v2742 = vpop.f32.mrb[0].mxu0
      %v2743 = vadd.f32 0.0, %v2742
      %v2744 = vpop.f32.mrb[0].mxu0
      %v2745 = vpop.f32.mrb[0].mxu0
      %v2746 = vadd.f32 0.0, %v2745
      %v2747 = vpop.f32.mrb[0].mxu0
      %2748 = vmatprep.mubr.bf16.mxu0 0
      %2749 = vmatmul.mubr.bf16.gmra.mrb[0].mxu0 %v2605
      %v2750 = vpop.f32.mrb[0].mxu0
      %v2751 = vadd.f32 0.0, %v2750
      %v2752 = vpop.f32.mrb[0].mxu0
      %v2753 = vpop.f32.mrb[0].mxu0
      %v2754 = vadd.f32 0.0, %v2753
      %v2755 = vpop.f32.mrb[0].mxu0
      %2756 = vmatprep.mubr.bf16.mxu0 0
      %2757 = vmatmul.mubr.bf16.gmra.mrb[0].mxu0 %v2608
      %v2758 = vpop.f32.mrb[0].mxu0
      %v2759 = vadd.f32 0.0, %v2758
      %v2760 = vpop.f32.mrb[0].mxu0
      %v2761 = vpop.f32.mrb[0].mxu0
      %v2762 = vadd.f32 0.0, %v2761
      %v2763 = vpop.f32.mrb[0].mxu0
      %2764 = vmatprep.mubr.bf16.mxu0 0
      %2765 = vmatmul.mubr.bf16.gmra.mrb[0].mxu0 %v2611
      %v2766 = vpop.f32.mrb[0].mxu0
      %v2767 = vadd.f32 0.0, %v2766
      %v2768 = vpop.f32.mrb[0].mxu0
      %v2769 = vpop.f32.mrb[0].mxu0
      %v2770 = vadd.f32 0.0, %v2769
      %v2771 = vpop.f32.mrb[0].mxu0
      %2772 = vmatprep.mubr.bf16.mxu0 0
      %2773 = vmatmul.mubr.bf16.gmra.mrb[0].mxu0 %v2614
      %v2774 = vpop.f32.mrb[0].mxu0
      %v2775 = vadd.f32 0.0, %v2774
      %v2776 = vpop.f32.mrb[0].mxu0
      %v2777 = vpop.f32.mrb[0].mxu0
      %v2778 = vadd.f32 0.0, %v2777
      %v2779 = vpop.f32.mrb[0].mxu0
      %2780 = vmatprep.mubr.bf16.mxu0 0
      %2781 = vmatmul.mubr.bf16.gmra.mrb[0].mxu0 %v2617
      %v2782 = vpop.f32.mrb[0].mxu0
      %v2783 = vadd.f32 0.0, %v2782
      %v2784 = vpop.f32.mrb[0].mxu0
      %v2785 = vpop.f32.mrb[0].mxu0
      %v2786 = vadd.f32 0.0, %v2785
      %v2787 = vpop.f32.mrb[0].mxu0
      %2788 = vmatprep.mubr.bf16.mxu0 0
      %2789 = vmatmul.mubr.bf16.gmra.mrb[0].mxu0 %v2620
      %v2790 = vpop.f32.mrb[0].mxu0
      %v2791 = vadd.f32 0.0, %v2790
      %v2792 = vpop.f32.mrb[0].mxu0
      %v2793 = vpop.f32.mrb[0].mxu0
      %v2794 = vadd.f32 0.0, %v2793
      %v2795 = vpop.f32.mrb[0].mxu0
      %2796 = vmatprep.mubr.bf16.mxu0 0
      %2797 = vmatmul.mubr.bf16.gmra.mrb[0].mxu0 %v2623
      %v2798 = vpop.f32.mrb[0].mxu0
      %v2799 = vadd.f32 0.0, %v2798
      %v2800 = vpop.f32.mrb[0].mxu0
      %v2801 = vpop.f32.mrb[0].mxu0
      %v2802 = vadd.f32 0.0, %v2801
      %v2803 = vpop.f32.mrb[0].mxu0
      %2804 = vdwg.mxu0
      %v2805 = vld [vmem:[#allocation2] sm:$0xff]
      %v2806 = vld [vmem:[#allocation2 + $0x8] sm:$0xff]
      %v2807 = vld [vmem:[#allocation2 + $0x10] sm:$0xff]
      %v2808 = vld [vmem:[#allocation2 + $0x18] sm:$0xff]
      %v2809 = vld [vmem:[#allocation2 + $0x20] sm:$0xff]
      %v2810 = vld [vmem:[#allocation2 + $0x28] sm:$0xff]
      %v2811 = vld [vmem:[#allocation2 + $0x30] sm:$0xff]
      %v2812 = vld [vmem:[#allocation2 + $0x38] sm:$0xff]
      %v2813 = vld [vmem:[#allocation2 + $0x40] sm:$0xff]
      %v2814 = vld [vmem:[#allocation2 + $0x48] sm:$0xff]
      %v2815 = vld [vmem:[#allocation2 + $0x50] sm:$0xff]
      %v2816 = vld [vmem:[#allocation2 + $0x58] sm:$0xff]
      %v2817 = vld [vmem:[#allocation2 + $0x60] sm:$0xff]
      %v2818 = vld [vmem:[#allocation2 + $0x68] sm:$0xff]
      %v2819 = vld [vmem:[#allocation2 + $0x70] sm:$0xff]
      %v2820 = vld [vmem:[#allocation2 + $0x78] sm:$0xff]
      %v2821 = vld [vmem:[#allocation2 + $0x80] sm:$0xff]
      %v2822 = vld [vmem:[#allocation2 + $0x88] sm:$0xff]
      %v2823 = vld [vmem:[#allocation2 + $0x90] sm:$0xff]
      %v2824 = vld [vmem:[#allocation2 + $0x98] sm:$0xff]
      %v2825 = vld [vmem:[#allocation2 + $0xa0] sm:$0xff]
      %v2826 = vld [vmem:[#allocation2 + $0xa8] sm:$0xff]
      %v2827 = vld [vmem:[#allocation2 + $0xb0] sm:$0xff]
      %v2828 = vld [vmem:[#allocation2 + $0xb8] sm:$0xff]
      %v2829 = vld [vmem:[#allocation2 + $0xc0] sm:$0xff]
      %v2830 = vld [vmem:[#allocation2 + $0xc8] sm:$0xff]
      %v2831 = vld [vmem:[#allocation2 + $0xd0] sm:$0xff]
      %v2832 = vld [vmem:[#allocation2 + $0xd8] sm:$0xff]
      %v2833 = vld [vmem:[#allocation2 + $0xe0] sm:$0xff]
      %v2834 = vld [vmem:[#allocation2 + $0xe8] sm:$0xff]
      %v2835 = vld [vmem:[#allocation2 + $0xf0] sm:$0xff]
      %v2836 = vld [vmem:[#allocation2 + $0xf8] sm:$0xff]
      %v2837 = vld [vmem:[#allocation2 + $0x100] sm:$0xff]
      %v2838 = vld [vmem:[#allocation2 + $0x108] sm:$0xff]
      %v2839 = vld [vmem:[#allocation2 + $0x110] sm:$0xff]
      %v2840 = vld [vmem:[#allocation2 + $0x118] sm:$0xff]
      %v2841 = vadd.f32 %v2805, %v2663
      %v2842 = vadd.f32 %v2806, %v2666
      %v2843 = vadd.f32 %v2807, %v2671
      %v2844 = vadd.f32 %v2808, %v2674
      %v2845 = vadd.f32 %v2809, %v2679
      %v2846 = vadd.f32 %v2810, %v2682
      %v2847 = vadd.f32 %v2811, %v2687
      %v2848 = vadd.f32 %v2812, %v2690
      %v2849 = vadd.f32 %v2813, %v2695
      %v2850 = vadd.f32 %v2814, %v2698
      %v2851 = vadd.f32 %v2815, %v2703
      %v2852 = vadd.f32 %v2816, %v2706
      %v2853 = vadd.f32 %v2817, %v2711
      %v2854 = vadd.f32 %v2818, %v2714
      %v2855 = vadd.f32 %v2819, %v2719
      %v2856 = vadd.f32 %v2820, %v2722
      %v2857 = vadd.f32 %v2821, %v2727
      %v2858 = vadd.f32 %v2822, %v2730
      %v2859 = vadd.f32 %v2823, %v2735
      %v2860 = vadd.f32 %v2824, %v2738
      %v2861 = vadd.f32 %v2825, %v2743
      %v2862 = vadd.f32 %v2826, %v2746
      %v2863 = vadd.f32 %v2827, %v2751
      %v2864 = vadd.f32 %v2828, %v2754
      %v2865 = vadd.f32 %v2829, %v2759
      %v2866 = vadd.f32 %v2830, %v2762
      %v2867 = vadd.f32 %v2831, %v2767
      %v2868 = vadd.f32 %v2832, %v2770
      %v2869 = vadd.f32 %v2833, %v2775
      %v2870 = vadd.f32 %v2834, %v2778
      %v2871 = vadd.f32 %v2835, %v2783
      %v2872 = vadd.f32 %v2836, %v2786
      %v2873 = vadd.f32 %v2837, %v2791
      %v2874 = vadd.f32 %v2838, %v2794
      %v2875 = vadd.f32 %v2839, %v2799
      %v2876 = vadd.f32 %v2840, %v2802
      %2877 = vst [vmem:[#allocation2] sm:$0xff] %v2841
      %2878 = vst [vmem:[#allocation2 + $0x8] sm:$0xff] %v2842
      %2879 = vst [vmem:[#allocation2 + $0x10] sm:$0xff] %v2843
      %2880 = vst [vmem:[#allocation2 + $0x18] sm:$0xff] %v2844
      %2881 = vst [vmem:[#allocation2 + $0x20] sm:$0xff] %v2845
      %2882 = vst [vmem:[#allocation2 + $0x28] sm:$0xff] %v2846
      %2883 = vst [vmem:[#allocation2 + $0x30] sm:$0xff] %v2847
      %2884 = vst [vmem:[#allocation2 + $0x38] sm:$0xff] %v2848
      %2885 = vst [vmem:[#allocation2 + $0x40] sm:$0xff] %v2849
      %2886 = vst [vmem:[#allocation2 + $0x48] sm:$0xff] %v2850
      %2887 = vst [vmem:[#allocation2 + $0x50] sm:$0xff] %v2851
      %2888 = vst [vmem:[#allocation2 + $0x58] sm:$0xff] %v2852
      %2889 = vst [vmem:[#allocation2 + $0x60] sm:$0xff] %v2853
      %2890 = vst [vmem:[#allocation2 + $0x68] sm:$0xff] %v2854
      %2891 = vst [vmem:[#allocation2 + $0x70] sm:$0xff] %v2855
      %2892 = vst [vmem:[#allocation2 + $0x78] sm:$0xff] %v2856
      %2893 = vst [vmem:[#allocation2 + $0x80] sm:$0xff] %v2857
      %2894 = vst [vmem:[#allocation2 + $0x88] sm:$0xff] %v2858
      %2895 = vst [vmem:[#allocation2 + $0x90] sm:$0xff] %v2859
      %2896 = vst [vmem:[#allocation2 + $0x98] sm:$0xff] %v2860
      %2897 = vst [vmem:[#allocation2 + $0xa0] sm:$0xff] %v2861
      %2898 = vst [vmem:[#allocation2 + $0xa8] sm:$0xff] %v2862
      %2899 = vst [vmem:[#allocation2 + $0xb0] sm:$0xff] %v2863
      %2900 = vst [vmem:[#allocation2 + $0xb8] sm:$0xff] %v2864
      %2901 = vst [vmem:[#allocation2 + $0xc0] sm:$0xff] %v2865
      %2902 = vst [vmem:[#allocation2 + $0xc8] sm:$0xff] %v2866
      %2903 = vst [vmem:[#allocation2 + $0xd0] sm:$0xff] %v2867
      %2904 = vst [vmem:[#allocation2 + $0xd8] sm:$0xff] %v2868
      %2905 = vst [vmem:[#allocation2 + $0xe0] sm:$0xff] %v2869
      %2906 = vst [vmem:[#allocation2 + $0xe8] sm:$0xff] %v2870
      %2907 = vst [vmem:[#allocation2 + $0xf0] sm:$0xff] %v2871
      %2908 = vst [vmem:[#allocation2 + $0xf8] sm:$0xff] %v2872
      %2909 = vst [vmem:[#allocation2 + $0x100] sm:$0xff] %v2873
      %2910 = vst [vmem:[#allocation2 + $0x108] sm:$0xff] %v2874
      %2911 = vst [vmem:[#allocation2 + $0x110] sm:$0xff] %v2875
      %2912 = vst [vmem:[#allocation2 + $0x118] sm:$0xff] %v2876
      %v2913 = vld [vmem:[%s206 + $0x8] sm:$0xc]
      %v2914 = vld [vmem:[%s206 + $0xc] sm:$0xf]
      %v2915 = vld [vmem:[%s206 + $0x10] sm:$0xf]
      %v2916 = vld [vmem:[%s206 + $0x14] sm:$0xf]
      %v2917 = vld [vmem:[%s206 + $0x18] sm:$0xf]
      %v2918 = vld [vmem:[%s206 + $0x1c] sm:$0xf]
      %v2919 = vld [vmem:[%s206 + $0x20] sm:$0xf]
      %v2920 = vld [vmem:[%s206 + $0x24] sm:$0xf]
      %v2921 = vld [vmem:[%s206 + $0x28] sm:$0xf]
      %v2922 = vld [vmem:[%s206 + $0x2c] sm:$0xf]
      %v2923 = vld [vmem:[%s206 + $0x30] sm:$0xf]
      %v2924 = vld [vmem:[%s206 + $0x34] sm:$0xf]
      %v2925 = vld [vmem:[%s206 + $0x38] sm:$0xf]
      %v2926 = vld [vmem:[%s206 + $0x3c] sm:$0xf]
      %v2927 = vld [vmem:[%s206 + $0x40] sm:$0xf]
      %v2928 = vld [vmem:[%s206 + $0x44] sm:$0xf]
      %v2929 = vld [vmem:[%s206 + $0x48] sm:$0xf]
      %v2930 = vld [vmem:[%s206 + $0x4c] sm:$0xf]
      %v2931 = vld [vmem:[%s206 + $0x50] sm:$0xf]
      %v2932 = vld [vmem:[%s206 + $0x54] sm:$0xf]
      %v2933 = vld [vmem:[%s206 + $0x58] sm:$0xf]
      %v2934 = vld [vmem:[%s206 + $0x5c] sm:$0xf]
      %v2935 = vld [vmem:[%s206 + $0x60] sm:$0xf]
      %v2936 = vld [vmem:[%s206 + $0x64] sm:$0xf]
      %v2937 = vld [vmem:[%s206 + $0x68] sm:$0xf]
      %v2938 = vld [vmem:[%s206 + $0x6c] sm:$0xf]
      %v2939 = vld [vmem:[%s206 + $0x70] sm:$0xf]
      %v2940 = vld [vmem:[%s206 + $0x74] sm:$0xf]
      %v2941 = vld [vmem:[%s206 + $0x78] sm:$0xf]
      %v2942 = vld [vmem:[%s206 + $0x7c] sm:$0xf]
      %v2943 = vld [vmem:[%s206 + $0x80] sm:$0xf]
      %v2944 = vld [vmem:[%s206 + $0x84] sm:$0xf]
      %v2945 = vld [vmem:[%s206 + $0x88] sm:$0xf]
      %v2946 = vld [vmem:[%s206 + $0x8c] sm:$0xf]
      %v2947 = vld [vmem:[%s206 + $0x90] sm:$0xf]
      %v2948 = vld [vmem:[%s206 + $0x94] sm:$0xf]
      %v2949 = vld [vmem:[%s206 + $0x98] sm:$0x3]
      %s2950 = scalar_lea.vmem %s210, 10
      %v2951 = vld [vmem:[%s2950] sm:$0x3]
      %v2989 = vunpack.c.l.b16 %v2913
      %v2990 = vunpack.c.l.b16 %v2914
      %v2991 = vunpack.c.l.b16 %v2915
      %v2992 = vunpack.c.l.b16 %v2916
      %v2993 = vunpack.c.l.b16 %v2917
      %v2994 = vunpack.c.l.b16 %v2918
      %v2995 = vunpack.c.l.b16 %v2919
      %v2996 = vunpack.c.l.b16 %v2920
      %v2997 = vunpack.c.l.b16 %v2921
      %v2998 = vunpack.c.l.b16 %v2922
      %v2999 = vunpack.c.l.b16 %v2923
      %v3000 = vunpack.c.l.b16 %v2924
      %v3001 = vunpack.c.l.b16 %v2925
      %v3002 = vunpack.c.l.b16 %v2926
      %v3003 = vunpack.c.l.b16 %v2927
      %v3004 = vunpack.c.l.b16 %v2928
      %v3005 = vunpack.c.l.b16 %v2929
      %v3006 = vunpack.c.l.b16 %v2930
      %v3007 = vunpack.c.l.b16 %v2931
      %v3008 = vunpack.c.l.b16 %v2932
      %v3009 = vunpack.c.l.b16 %v2933
      %v3010 = vunpack.c.l.b16 %v2934
      %v3011 = vunpack.c.l.b16 %v2935
      %v3012 = vunpack.c.l.b16 %v2936
      %v3013 = vunpack.c.l.b16 %v2937
      %v3014 = vunpack.c.l.b16 %v2938
      %v3015 = vunpack.c.l.b16 %v2939
      %v3016 = vunpack.c.l.b16 %v2940
      %v3017 = vunpack.c.l.b16 %v2941
      %v3018 = vunpack.c.l.b16 %v2942
      %v3019 = vunpack.c.l.b16 %v2943
      %v3020 = vunpack.c.l.b16 %v2944
      %v3021 = vunpack.c.l.b16 %v2945
      %v3022 = vunpack.c.l.b16 %v2946
      %v3023 = vunpack.c.l.b16 %v2947
      %v3024 = vunpack.c.l.b16 %v2948
      %v3025 = vunpack.c.l.b16 %v2949
      %v3026 = vpack.c.b16 %v2990, %v2989
      %v3027 = vpack.c.b16 %v2992, %v2991
      %v3028 = vpack.c.b16 %v2994, %v2993
      %v3029 = vpack.c.b16 %v2996, %v2995
      %v3030 = vpack.c.b16 %v2998, %v2997
      %v3031 = vpack.c.b16 %v3000, %v2999
      %v3032 = vpack.c.b16 %v3002, %v3001
      %v3033 = vpack.c.b16 %v3004, %v3003
      %v3034 = vpack.c.b16 %v3006, %v3005
      %v3035 = vpack.c.b16 %v3008, %v3007
      %v3036 = vpack.c.b16 %v3010, %v3009
      %v3037 = vpack.c.b16 %v3012, %v3011
      %v3038 = vpack.c.b16 %v3014, %v3013
      %v3039 = vpack.c.b16 %v3016, %v3015
      %v3040 = vpack.c.b16 %v3018, %v3017
      %v3041 = vpack.c.b16 %v3020, %v3019
      %v3042 = vpack.c.b16 %v3022, %v3021
      %v3043 = vpack.c.b16 %v3024, %v3023
      %v3044 = vpack.c.b16 %v3025, %v3025
      %vm3045 = vcmask 1045504
      %v3046 = vrot.slane %v3026, 2
      %v3047 = vrot.slane %v3027, 2
      %v3048 = vsel %vm3045, %v3046, %v3047
      %v3049 = vrot.slane %v3028, 2
      %v3050 = vsel %vm3045, %v3047, %v3049
      %v3051 = vrot.slane %v3029, 2
      %v3052 = vsel %vm3045, %v3049, %v3051
      %v3053 = vrot.slane %v3030, 2
      %v3054 = vsel %vm3045, %v3051, %v3053
      %v3055 = vrot.slane %v3031, 2
      %v3056 = vsel %vm3045, %v3053, %v3055
      %v3057 = vrot.slane %v3032, 2
      %v3058 = vsel %vm3045, %v3055, %v3057
      %v3059 = vrot.slane %v3033, 2
      %v3060 = vsel %vm3045, %v3057, %v3059
      %v3061 = vrot.slane %v3034, 2
      %v3062 = vsel %vm3045, %v3059, %v3061
      %v3063 = vrot.slane %v3035, 2
      %v3064 = vsel %vm3045, %v3061, %v3063
      %v3065 = vrot.slane %v3036, 2
      %v3066 = vsel %vm3045, %v3063, %v3065
      %v3067 = vrot.slane %v3037, 2
      %v3068 = vsel %vm3045, %v3065, %v3067
      %v3069 = vrot.slane %v3038, 2
      %v3070 = vsel %vm3045, %v3067, %v3069
      %v3071 = vrot.slane %v3039, 2
      %v3072 = vsel %vm3045, %v3069, %v3071
      %v3073 = vrot.slane %v3040, 2
      %v3074 = vsel %vm3045, %v3071, %v3073
      %v3075 = vrot.slane %v3041, 2
      %v3076 = vsel %vm3045, %v3073, %v3075
      %v3077 = vrot.slane %v3042, 2
      %v3078 = vsel %vm3045, %v3075, %v3077
      %v3079 = vrot.slane %v3043, 2
      %v3080 = vsel %vm3045, %v3077, %v3079
      %v3081 = vrot.slane %v3044, 2
      %v3082 = vsel %vm3045, %v3079, %v3081
      %v3084 = vsel %vm350, %v3048, 0
      %v3087 = vsel %vm350, %v3050, 0
      %v3090 = vsel %vm350, %v3052, 0
      %v3093 = vsel %vm350, %v3054, 0
      %v3096 = vsel %vm350, %v3056, 0
      %v3099 = vsel %vm350, %v3058, 0
      %v3102 = vsel %vm350, %v3060, 0
      %v3105 = vsel %vm350, %v3062, 0
      %v3108 = vsel %vm350, %v3064, 0
      %v3111 = vsel %vm350, %v3066, 0
      %v3114 = vsel %vm350, %v3068, 0
      %v3117 = vsel %vm350, %v3070, 0
      %v3120 = vsel %vm350, %v3072, 0
      %v3123 = vsel %vm350, %v3074, 0
      %v3126 = vsel %vm350, %v3076, 0
      %v3129 = vsel %vm350, %v3078, 0
      %v3132 = vsel %vm350, %v3080, 0
      %v3135 = vsel %vm350, %v3082, 0
      %v3138 = vsel %vm405, %v2951, 0
      %3140 = vmatprep.subr.bf16.mxu0 0
      %3141 = vmatpush1.bf16.msra.mxu0 %v3138
      %3142 = vmatprep.subr.bf16.mxu0 0
      %3143 = vmatpush1.bf16.msra.mxu0 0
      %3144 = vmatprep.subr.bf16.mxu0 0
      %3145 = vmatpush1.bf16.msra.mxu0 0
      %3146 = vmatprep.subr.bf16.mxu0 0
      %3147 = vmatpush1.bf16.msra.mxu0 0
      %3148 = vmatprep.subr.bf16.mxu0 0
      %3149 = vmatpush1.bf16.msra.mxu0 0
      %3150 = vmatprep.subr.bf16.mxu0 0
      %3151 = vmatpush1.bf16.msra.mxu0 0
      %3152 = vmatprep.subr.bf16.mxu0 0
      %3153 = vmatpush1.bf16.msra.mxu0 0
      %3154 = vmatprep.subr.bf16.mxu0 0
      %3155 = vmatpush1.bf16.msra.mxu0 0
      %3156 = vmatprep.subr.bf16.mxu0 0
      %3157 = vmatpush1.bf16.msra.mxu0 0
      %3158 = vmatprep.subr.bf16.mxu0 0
      %3159 = vmatpush1.bf16.msra.mxu0 0
      %3160 = vmatprep.subr.bf16.mxu0 0
      %3161 = vmatpush1.bf16.msra.mxu0 0
      %3162 = vmatprep.subr.bf16.mxu0 0
      %3163 = vmatpush1.bf16.msra.mxu0 0
      %3164 = vmatprep.subr.bf16.mxu0 0
      %3165 = vmatpush1.bf16.msra.mxu0 0
      %3166 = vmatprep.subr.bf16.mxu0 0
      %3167 = vmatpush1.bf16.msra.mxu0 0
      %3168 = vmatprep.subr.bf16.mxu0 0
      %3169 = vmatpush1.bf16.msra.mxu0 0
      %3170 = vmatprep.subr.bf16.mxu0 0
      %3171 = vmatpush1.bf16.msra.mxu0 0
      %3172 = vmatprep.mubr.bf16.mxu0 0
      %3173 = vmatmul.mubr.bf16.gmra.mrb[0].mxu0 %v3084
      %v3174 = vpop.f32.mrb[0].mxu0
      %v3175 = vadd.f32 0.0, %v3174
      %v3176 = vpop.f32.mrb[0].mxu0
      %v3177 = vpop.f32.mrb[0].mxu0
      %v3178 = vadd.f32 0.0, %v3177
      %v3179 = vpop.f32.mrb[0].mxu0
      %3180 = vmatprep.mubr.bf16.mxu0 0
      %3181 = vmatmul.mubr.bf16.gmra.mrb[0].mxu0 %v3087
      %v3182 = vpop.f32.mrb[0].mxu0
      %v3183 = vadd.f32 0.0, %v3182
      %v3184 = vpop.f32.mrb[0].mxu0
      %v3185 = vpop.f32.mrb[0].mxu0
      %v3186 = vadd.f32 0.0, %v3185
      %v3187 = vpop.f32.mrb[0].mxu0
      %3188 = vmatprep.mubr.bf16.mxu0 0
      %3189 = vmatmul.mubr.bf16.gmra.mrb[0].mxu0 %v3090
      %v3190 = vpop.f32.mrb[0].mxu0
      %v3191 = vadd.f32 0.0, %v3190
      %v3192 = vpop.f32.mrb[0].mxu0
      %v3193 = vpop.f32.mrb[0].mxu0
      %v3194 = vadd.f32 0.0, %v3193
      %v3195 = vpop.f32.mrb[0].mxu0
      %3196 = vmatprep.mubr.bf16.mxu0 0
      %3197 = vmatmul.mubr.bf16.gmra.mrb[0].mxu0 %v3093
      %v3198 = vpop.f32.mrb[0].mxu0
      %v3199 = vadd.f32 0.0, %v3198
      %v3200 = vpop.f32.mrb[0].mxu0
      %v3201 = vpop.f32.mrb[0].mxu0
      %v3202 = vadd.f32 0.0, %v3201
      %v3203 = vpop.f32.mrb[0].mxu0
      %3204 = vmatprep.mubr.bf16.mxu0 0
      %3205 = vmatmul.mubr.bf16.gmra.mrb[0].mxu0 %v3096
      %v3206 = vpop.f32.mrb[0].mxu0
      %v3207 = vadd.f32 0.0, %v3206
      %v3208 = vpop.f32.mrb[0].mxu0
      %v3209 = vpop.f32.mrb[0].mxu0
      %v3210 = vadd.f32 0.0, %v3209
      %v3211 = vpop.f32.mrb[0].mxu0
      %3212 = vmatprep.mubr.bf16.mxu0 0
      %3213 = vmatmul.mubr.bf16.gmra.mrb[0].mxu0 %v3099
      %v3214 = vpop.f32.mrb[0].mxu0
      %v3215 = vadd.f32 0.0, %v3214
      %v3216 = vpop.f32.mrb[0].mxu0
      %v3217 = vpop.f32.mrb[0].mxu0
      %v3218 = vadd.f32 0.0, %v3217
      %v3219 = vpop.f32.mrb[0].mxu0
      %3220 = vmatprep.mubr.bf16.mxu0 0
      %3221 = vmatmul.mubr.bf16.gmra.mrb[0].mxu0 %v3102
      %v3222 = vpop.f32.mrb[0].mxu0
      %v3223 = vadd.f32 0.0, %v3222
      %v3224 = vpop.f32.mrb[0].mxu0
      %v3225 = vpop.f32.mrb[0].mxu0
      %v3226 = vadd.f32 0.0, %v3225
      %v3227 = vpop.f32.mrb[0].mxu0
      %3228 = vmatprep.mubr.bf16.mxu0 0
      %3229 = vmatmul.mubr.bf16.gmra.mrb[0].mxu0 %v3105
      %v3230 = vpop.f32.mrb[0].mxu0
      %v3231 = vadd.f32 0.0, %v3230
      %v3232 = vpop.f32.mrb[0].mxu0
      %v3233 = vpop.f32.mrb[0].mxu0
      %v3234 = vadd.f32 0.0, %v3233
      %v3235 = vpop.f32.mrb[0].mxu0
      %3236 = vmatprep.mubr.bf16.mxu0 0
      %3237 = vmatmul.mubr.bf16.gmra.mrb[0].mxu0 %v3108
      %v3238 = vpop.f32.mrb[0].mxu0
      %v3239 = vadd.f32 0.0, %v3238
      %v3240 = vpop.f32.mrb[0].mxu0
      %v3241 = vpop.f32.mrb[0].mxu0
      %v3242 = vadd.f32 0.0, %v3241
      %v3243 = vpop.f32.mrb[0].mxu0
      %3244 = vmatprep.mubr.bf16.mxu0 0
      %3245 = vmatmul.mubr.bf16.gmra.mrb[0].mxu0 %v3111
      %v3246 = vpop.f32.mrb[0].mxu0
      %v3247 = vadd.f32 0.0, %v3246
      %v3248 = vpop.f32.mrb[0].mxu0
      %v3249 = vpop.f32.mrb[0].mxu0
      %v3250 = vadd.f32 0.0, %v3249
      %v3251 = vpop.f32.mrb[0].mxu0
      %3252 = vmatprep.mubr.bf16.mxu0 0
      %3253 = vmatmul.mubr.bf16.gmra.mrb[0].mxu0 %v3114
      %v3254 = vpop.f32.mrb[0].mxu0
      %v3255 = vadd.f32 0.0, %v3254
      %v3256 = vpop.f32.mrb[0].mxu0
      %v3257 = vpop.f32.mrb[0].mxu0
      %v3258 = vadd.f32 0.0, %v3257
      %v3259 = vpop.f32.mrb[0].mxu0
      %3260 = vmatprep.mubr.bf16.mxu0 0
      %3261 = vmatmul.mubr.bf16.gmra.mrb[0].mxu0 %v3117
      %v3262 = vpop.f32.mrb[0].mxu0
      %v3263 = vadd.f32 0.0, %v3262
      %v3264 = vpop.f32.mrb[0].mxu0
      %v3265 = vpop.f32.mrb[0].mxu0
      %v3266 = vadd.f32 0.0, %v3265
      %v3267 = vpop.f32.mrb[0].mxu0
      %3268 = vmatprep.mubr.bf16.mxu0 0
      %3269 = vmatmul.mubr.bf16.gmra.mrb[0].mxu0 %v3120
      %v3270 = vpop.f32.mrb[0].mxu0
      %v3271 = vadd.f32 0.0, %v3270
      %v3272 = vpop.f32.mrb[0].mxu0
      %v3273 = vpop.f32.mrb[0].mxu0
      %v3274 = vadd.f32 0.0, %v3273
      %v3275 = vpop.f32.mrb[0].mxu0
      %3276 = vmatprep.mubr.bf16.mxu0 0
      %3277 = vmatmul.mubr.bf16.gmra.mrb[0].mxu0 %v3123
      %v3278 = vpop.f32.mrb[0].mxu0
      %v3279 = vadd.f32 0.0, %v3278
      %v3280 = vpop.f32.mrb[0].mxu0
      %v3281 = vpop.f32.mrb[0].mxu0
      %v3282 = vadd.f32 0.0, %v3281
      %v3283 = vpop.f32.mrb[0].mxu0
      %3284 = vmatprep.mubr.bf16.mxu0 0
      %3285 = vmatmul.mubr.bf16.gmra.mrb[0].mxu0 %v3126
      %v3286 = vpop.f32.mrb[0].mxu0
      %v3287 = vadd.f32 0.0, %v3286
      %v3288 = vpop.f32.mrb[0].mxu0
      %v3289 = vpop.f32.mrb[0].mxu0
      %v3290 = vadd.f32 0.0, %v3289
      %v3291 = vpop.f32.mrb[0].mxu0
      %3292 = vmatprep.mubr.bf16.mxu0 0
      %3293 = vmatmul.mubr.bf16.gmra.mrb[0].mxu0 %v3129
      %v3294 = vpop.f32.mrb[0].mxu0
      %v3295 = vadd.f32 0.0, %v3294
      %v3296 = vpop.f32.mrb[0].mxu0
      %v3297 = vpop.f32.mrb[0].mxu0
      %v3298 = vadd.f32 0.0, %v3297
      %v3299 = vpop.f32.mrb[0].mxu0
      %3300 = vmatprep.mubr.bf16.mxu0 0
      %3301 = vmatmul.mubr.bf16.gmra.mrb[0].mxu0 %v3132
      %v3302 = vpop.f32.mrb[0].mxu0
      %v3303 = vadd.f32 0.0, %v3302
      %v3304 = vpop.f32.mrb[0].mxu0
      %v3305 = vpop.f32.mrb[0].mxu0
      %v3306 = vadd.f32 0.0, %v3305
      %v3307 = vpop.f32.mrb[0].mxu0
      %3308 = vmatprep.mubr.bf16.mxu0 0
      %3309 = vmatmul.mubr.bf16.gmra.mrb[0].mxu0 %v3135
      %v3310 = vpop.f32.mrb[0].mxu0
      %v3311 = vadd.f32 0.0, %v3310
      %v3312 = vpop.f32.mrb[0].mxu0
      %v3313 = vpop.f32.mrb[0].mxu0
      %v3314 = vadd.f32 0.0, %v3313
      %v3315 = vpop.f32.mrb[0].mxu0
      %3316 = vdwg.mxu0
      %v3317 = vld [vmem:[#allocation2] sm:$0xff]
      %v3318 = vld [vmem:[#allocation2 + $0x8] sm:$0xff]
      %v3319 = vld [vmem:[#allocation2 + $0x10] sm:$0xff]
      %v3320 = vld [vmem:[#allocation2 + $0x18] sm:$0xff]
      %v3321 = vld [vmem:[#allocation2 + $0x20] sm:$0xff]
      %v3322 = vld [vmem:[#allocation2 + $0x28] sm:$0xff]
      %v3323 = vld [vmem:[#allocation2 + $0x30] sm:$0xff]
      %v3324 = vld [vmem:[#allocation2 + $0x38] sm:$0xff]
      %v3325 = vld [vmem:[#allocation2 + $0x40] sm:$0xff]
      %v3326 = vld [vmem:[#allocation2 + $0x48] sm:$0xff]
      %v3327 = vld [vmem:[#allocation2 + $0x50] sm:$0xff]
      %v3328 = vld [vmem:[#allocation2 + $0x58] sm:$0xff]
      %v3329 = vld [vmem:[#allocation2 + $0x60] sm:$0xff]
      %v3330 = vld [vmem:[#allocation2 + $0x68] sm:$0xff]
      %v3331 = vld [vmem:[#allocation2 + $0x70] sm:$0xff]
      %v3332 = vld [vmem:[#allocation2 + $0x78] sm:$0xff]
      %v3333 = vld [vmem:[#allocation2 + $0x80] sm:$0xff]
      %v3334 = vld [vmem:[#allocation2 + $0x88] sm:$0xff]
      %v3335 = vld [vmem:[#allocation2 + $0x90] sm:$0xff]
      %v3336 = vld [vmem:[#allocation2 + $0x98] sm:$0xff]
      %v3337 = vld [vmem:[#allocation2 + $0xa0] sm:$0xff]
      %v3338 = vld [vmem:[#allocation2 + $0xa8] sm:$0xff]
      %v3339 = vld [vmem:[#allocation2 + $0xb0] sm:$0xff]
      %v3340 = vld [vmem:[#allocation2 + $0xb8] sm:$0xff]
      %v3341 = vld [vmem:[#allocation2 + $0xc0] sm:$0xff]
      %v3342 = vld [vmem:[#allocation2 + $0xc8] sm:$0xff]
      %v3343 = vld [vmem:[#allocation2 + $0xd0] sm:$0xff]
      %v3344 = vld [vmem:[#allocation2 + $0xd8] sm:$0xff]
      %v3345 = vld [vmem:[#allocation2 + $0xe0] sm:$0xff]
      %v3346 = vld [vmem:[#allocation2 + $0xe8] sm:$0xff]
      %v3347 = vld [vmem:[#allocation2 + $0xf0] sm:$0xff]
      %v3348 = vld [vmem:[#allocation2 + $0xf8] sm:$0xff]
      %v3349 = vld [vmem:[#allocation2 + $0x100] sm:$0xff]
      %v3350 = vld [vmem:[#allocation2 + $0x108] sm:$0xff]
      %v3351 = vld [vmem:[#allocation2 + $0x110] sm:$0xff]
      %v3352 = vld [vmem:[#allocation2 + $0x118] sm:$0xff]
      %v3353 = vadd.f32 %v3317, %v3175
      %v3354 = vadd.f32 %v3318, %v3178
      %v3355 = vadd.f32 %v3319, %v3183
      %v3356 = vadd.f32 %v3320, %v3186
      %v3357 = vadd.f32 %v3321, %v3191
      %v3358 = vadd.f32 %v3322, %v3194
      %v3359 = vadd.f32 %v3323, %v3199
      %v3360 = vadd.f32 %v3324, %v3202
      %v3361 = vadd.f32 %v3325, %v3207
      %v3362 = vadd.f32 %v3326, %v3210
      %v3363 = vadd.f32 %v3327, %v3215
      %v3364 = vadd.f32 %v3328, %v3218
      %v3365 = vadd.f32 %v3329, %v3223
      %v3366 = vadd.f32 %v3330, %v3226
      %v3367 = vadd.f32 %v3331, %v3231
      %v3368 = vadd.f32 %v3332, %v3234
      %v3369 = vadd.f32 %v3333, %v3239
      %v3370 = vadd.f32 %v3334, %v3242
      %v3371 = vadd.f32 %v3335, %v3247
      %v3372 = vadd.f32 %v3336, %v3250
      %v3373 = vadd.f32 %v3337, %v3255
      %v3374 = vadd.f32 %v3338, %v3258
      %v3375 = vadd.f32 %v3339, %v3263
      %v3376 = vadd.f32 %v3340, %v3266
      %v3377 = vadd.f32 %v3341, %v3271
      %v3378 = vadd.f32 %v3342, %v3274
      %v3379 = vadd.f32 %v3343, %v3279
      %v3380 = vadd.f32 %v3344, %v3282
      %v3381 = vadd.f32 %v3345, %v3287
      %v3382 = vadd.f32 %v3346, %v3290
      %v3383 = vadd.f32 %v3347, %v3295
      %v3384 = vadd.f32 %v3348, %v3298
      %v3385 = vadd.f32 %v3349, %v3303
      %v3386 = vadd.f32 %v3350, %v3306
      %v3387 = vadd.f32 %v3351, %v3311
      %v3388 = vadd.f32 %v3352, %v3314
      %3389 = vst [vmem:[#allocation2] sm:$0xff] %v3353
      %3390 = vst [vmem:[#allocation2 + $0x8] sm:$0xff] %v3354
      %3391 = vst [vmem:[#allocation2 + $0x10] sm:$0xff] %v3355
      %3392 = vst [vmem:[#allocation2 + $0x18] sm:$0xff] %v3356
      %3393 = vst [vmem:[#allocation2 + $0x20] sm:$0xff] %v3357
      %3394 = vst [vmem:[#allocation2 + $0x28] sm:$0xff] %v3358
      %3395 = vst [vmem:[#allocation2 + $0x30] sm:$0xff] %v3359
      %3396 = vst [vmem:[#allocation2 + $0x38] sm:$0xff] %v3360
      %3397 = vst [vmem:[#allocation2 + $0x40] sm:$0xff] %v3361
      %3398 = vst [vmem:[#allocation2 + $0x48] sm:$0xff] %v3362
      %3399 = vst [vmem:[#allocation2 + $0x50] sm:$0xff] %v3363
      %3400 = vst [vmem:[#allocation2 + $0x58] sm:$0xff] %v3364
      %3401 = vst [vmem:[#allocation2 + $0x60] sm:$0xff] %v3365
      %3402 = vst [vmem:[#allocation2 + $0x68] sm:$0xff] %v3366
      %3403 = vst [vmem:[#allocation2 + $0x70] sm:$0xff] %v3367
      %3404 = vst [vmem:[#allocation2 + $0x78] sm:$0xff] %v3368
      %3405 = vst [vmem:[#allocation2 + $0x80] sm:$0xff] %v3369
      %3406 = vst [vmem:[#allocation2 + $0x88] sm:$0xff] %v3370
      %3407 = vst [vmem:[#allocation2 + $0x90] sm:$0xff] %v3371
      %3408 = vst [vmem:[#allocation2 + $0x98] sm:$0xff] %v3372
      %3409 = vst [vmem:[#allocation2 + $0xa0] sm:$0xff] %v3373
      %3410 = vst [vmem:[#allocation2 + $0xa8] sm:$0xff] %v3374
      %3411 = vst [vmem:[#allocation2 + $0xb0] sm:$0xff] %v3375
      %3412 = vst [vmem:[#allocation2 + $0xb8] sm:$0xff] %v3376
      %3413 = vst [vmem:[#allocation2 + $0xc0] sm:$0xff] %v3377
      %3414 = vst [vmem:[#allocation2 + $0xc8] sm:$0xff] %v3378
      %3415 = vst [vmem:[#allocation2 + $0xd0] sm:$0xff] %v3379
      %3416 = vst [vmem:[#allocation2 + $0xd8] sm:$0xff] %v3380
      %3417 = vst [vmem:[#allocation2 + $0xe0] sm:$0xff] %v3381
      %3418 = vst [vmem:[#allocation2 + $0xe8] sm:$0xff] %v3382
      %3419 = vst [vmem:[#allocation2 + $0xf0] sm:$0xff] %v3383
      %3420 = vst [vmem:[#allocation2 + $0xf8] sm:$0xff] %v3384
      %3421 = vst [vmem:[#allocation2 + $0x100] sm:$0xff] %v3385
      %3422 = vst [vmem:[#allocation2 + $0x108] sm:$0xff] %v3386
      %3423 = vst [vmem:[#allocation2 + $0x110] sm:$0xff] %v3387
      %3424 = vst [vmem:[#allocation2 + $0x118] sm:$0xff] %v3388
      %v3425 = vld [vmem:[%s206 + $0x10] sm:$0xc]
      %v3426 = vld [vmem:[%s206 + $0x14] sm:$0xf]
      %v3427 = vld [vmem:[%s206 + $0x18] sm:$0xf]
      %v3428 = vld [vmem:[%s206 + $0x1c] sm:$0xf]
      %v3429 = vld [vmem:[%s206 + $0x20] sm:$0xf]
      %v3430 = vld [vmem:[%s206 + $0x24] sm:$0xf]
      %v3431 = vld [vmem:[%s206 + $0x28] sm:$0xf]
      %v3432 = vld [vmem:[%s206 + $0x2c] sm:$0xf]
      %v3433 = vld [vmem:[%s206 + $0x30] sm:$0xf]
      %v3434 = vld [vmem:[%s206 + $0x34] sm:$0xf]
      %v3435 = vld [vmem:[%s206 + $0x38] sm:$0xf]
      %v3436 = vld [vmem:[%s206 + $0x3c] sm:$0xf]
      %v3437 = vld [vmem:[%s206 + $0x40] sm:$0xf]
      %v3438 = vld [vmem:[%s206 + $0x44] sm:$0xf]
      %v3439 = vld [vmem:[%s206 + $0x48] sm:$0xf]
      %v3440 = vld [vmem:[%s206 + $0x4c] sm:$0xf]
      %v3441 = vld [vmem:[%s206 + $0x50] sm:$0xf]
      %v3442 = vld [vmem:[%s206 + $0x54] sm:$0xf]
      %v3443 = vld [vmem:[%s206 + $0x58] sm:$0xf]
      %v3444 = vld [vmem:[%s206 + $0x5c] sm:$0xf]
      %v3445 = vld [vmem:[%s206 + $0x60] sm:$0xf]
      %v3446 = vld [vmem:[%s206 + $0x64] sm:$0xf]
      %v3447 = vld [vmem:[%s206 + $0x68] sm:$0xf]
      %v3448 = vld [vmem:[%s206 + $0x6c] sm:$0xf]
      %v3449 = vld [vmem:[%s206 + $0x70] sm:$0xf]
      %v3450 = vld [vmem:[%s206 + $0x74] sm:$0xf]
      %v3451 = vld [vmem:[%s206 + $0x78] sm:$0xf]
      %v3452 = vld [vmem:[%s206 + $0x7c] sm:$0xf]
      %v3453 = vld [vmem:[%s206 + $0x80] sm:$0xf]
      %v3454 = vld [vmem:[%s206 + $0x84] sm:$0xf]
      %v3455 = vld [vmem:[%s206 + $0x88] sm:$0xf]
      %v3456 = vld [vmem:[%s206 + $0x8c] sm:$0xf]
      %v3457 = vld [vmem:[%s206 + $0x90] sm:$0xf]
      %v3458 = vld [vmem:[%s206 + $0x94] sm:$0xf]
      %v3459 = vld [vmem:[%s206 + $0x98] sm:$0xf]
      %v3460 = vld [vmem:[%s206 + $0x9c] sm:$0xf]
      %v3461 = vld [vmem:[%s206 + $0xa0] sm:$0x3]
      %s3462 = scalar_lea.vmem %s210, 12
      %v3463 = vld [vmem:[%s3462] sm:$0x3]
      %v3501 = vunpack.c.l.b16 %v3425
      %v3502 = vunpack.c.l.b16 %v3426
      %v3503 = vunpack.c.l.b16 %v3427
      %v3504 = vunpack.c.l.b16 %v3428
      %v3505 = vunpack.c.l.b16 %v3429
      %v3506 = vunpack.c.l.b16 %v3430
      %v3507 = vunpack.c.l.b16 %v3431
      %v3508 = vunpack.c.l.b16 %v3432
      %v3509 = vunpack.c.l.b16 %v3433
      %v3510 = vunpack.c.l.b16 %v3434
      %v3511 = vunpack.c.l.b16 %v3435
      %v3512 = vunpack.c.l.b16 %v3436
      %v3513 = vunpack.c.l.b16 %v3437
      %v3514 = vunpack.c.l.b16 %v3438
      %v3515 = vunpack.c.l.b16 %v3439
      %v3516 = vunpack.c.l.b16 %v3440
      %v3517 = vunpack.c.l.b16 %v3441
      %v3518 = vunpack.c.l.b16 %v3442
      %v3519 = vunpack.c.l.b16 %v3443
      %v3520 = vunpack.c.l.b16 %v3444
      %v3521 = vunpack.c.l.b16 %v3445
      %v3522 = vunpack.c.l.b16 %v3446
      %v3523 = vunpack.c.l.b16 %v3447
      %v3524 = vunpack.c.l.b16 %v3448
      %v3525 = vunpack.c.l.b16 %v3449
      %v3526 = vunpack.c.l.b16 %v3450
      %v3527 = vunpack.c.l.b16 %v3451
      %v3528 = vunpack.c.l.b16 %v3452
      %v3529 = vunpack.c.l.b16 %v3453
      %v3530 = vunpack.c.l.b16 %v3454
      %v3531 = vunpack.c.l.b16 %v3455
      %v3532 = vunpack.c.l.b16 %v3456
      %v3533 = vunpack.c.l.b16 %v3457
      %v3534 = vunpack.c.l.b16 %v3458
      %v3535 = vunpack.c.l.b16 %v3459
      %v3536 = vunpack.c.l.b16 %v3460
      %v3537 = vunpack.c.l.b16 %v3461
      %v3538 = vpack.c.b16 %v3502, %v3501
      %v3539 = vpack.c.b16 %v3504, %v3503
      %v3540 = vpack.c.b16 %v3506, %v3505
      %v3541 = vpack.c.b16 %v3508, %v3507
      %v3542 = vpack.c.b16 %v3510, %v3509
      %v3543 = vpack.c.b16 %v3512, %v3511
      %v3544 = vpack.c.b16 %v3514, %v3513
      %v3545 = vpack.c.b16 %v3516, %v3515
      %v3546 = vpack.c.b16 %v3518, %v3517
      %v3547 = vpack.c.b16 %v3520, %v3519
      %v3548 = vpack.c.b16 %v3522, %v3521
      %v3549 = vpack.c.b16 %v3524, %v3523
      %v3550 = vpack.c.b16 %v3526, %v3525
      %v3551 = vpack.c.b16 %v3528, %v3527
      %v3552 = vpack.c.b16 %v3530, %v3529
      %v3553 = vpack.c.b16 %v3532, %v3531
      %v3554 = vpack.c.b16 %v3534, %v3533
      %v3555 = vpack.c.b16 %v3536, %v3535
      %v3556 = vpack.c.b16 %v3537, %v3537
      %v3557 = vrot.slane %v3538, 2
      %v3558 = vrot.slane %v3539, 2
      %v3559 = vsel %vm3045, %v3557, %v3558
      %v3560 = vrot.slane %v3540, 2
      %v3561 = vsel %vm3045, %v3558, %v3560
      %v3562 = vrot.slane %v3541, 2
      %v3563 = vsel %vm3045, %v3560, %v3562
      %v3564 = vrot.slane %v3542, 2
      %v3565 = vsel %vm3045, %v3562, %v3564
      %v3566 = vrot.slane %v3543, 2
      %v3567 = vsel %vm3045, %v3564, %v3566
      %v3568 = vrot.slane %v3544, 2
      %v3569 = vsel %vm3045, %v3566, %v3568
      %v3570 = vrot.slane %v3545, 2
      %v3571 = vsel %vm3045, %v3568, %v3570
      %v3572 = vrot.slane %v3546, 2
      %v3573 = vsel %vm3045, %v3570, %v3572
      %v3574 = vrot.slane %v3547, 2
      %v3575 = vsel %vm3045, %v3572, %v3574
      %v3576 = vrot.slane %v3548, 2
      %v3577 = vsel %vm3045, %v3574, %v3576
      %v3578 = vrot.slane %v3549, 2
      %v3579 = vsel %vm3045, %v3576, %v3578
      %v3580 = vrot.slane %v3550, 2
      %v3581 = vsel %vm3045, %v3578, %v3580
      %v3582 = vrot.slane %v3551, 2
      %v3583 = vsel %vm3045, %v3580, %v3582
      %v3584 = vrot.slane %v3552, 2
      %v3585 = vsel %vm3045, %v3582, %v3584
      %v3586 = vrot.slane %v3553, 2
      %v3587 = vsel %vm3045, %v3584, %v3586
      %v3588 = vrot.slane %v3554, 2
      %v3589 = vsel %vm3045, %v3586, %v3588
      %v3590 = vrot.slane %v3555, 2
      %v3591 = vsel %vm3045, %v3588, %v3590
      %v3592 = vrot.slane %v3556, 2
      %v3593 = vsel %vm3045, %v3590, %v3592
      %v3595 = vsel %vm350, %v3559, 0
      %v3598 = vsel %vm350, %v3561, 0
      %v3601 = vsel %vm350, %v3563, 0
      %v3604 = vsel %vm350, %v3565, 0
      %v3607 = vsel %vm350, %v3567, 0
      %v3610 = vsel %vm350, %v3569, 0
      %v3613 = vsel %vm350, %v3571, 0
      %v3616 = vsel %vm350, %v3573, 0
      %v3619 = vsel %vm350, %v3575, 0
      %v3622 = vsel %vm350, %v3577, 0
      %v3625 = vsel %vm350, %v3579, 0
      %v3628 = vsel %vm350, %v3581, 0
      %v3631 = vsel %vm350, %v3583, 0
      %v3634 = vsel %vm350, %v3585, 0
      %v3637 = vsel %vm350, %v3587, 0
      %v3640 = vsel %vm350, %v3589, 0
      %v3643 = vsel %vm350, %v3591, 0
      %v3646 = vsel %vm350, %v3593, 0
      %v3649 = vsel %vm405, %v3463, 0
      %3651 = vmatprep.subr.bf16.mxu0 0
      %3652 = vmatpush1.bf16.msra.mxu0 %v3649
      %3653 = vmatprep.subr.bf16.mxu0 0
      %3654 = vmatpush1.bf16.msra.mxu0 0
      %3655 = vmatprep.subr.bf16.mxu0 0
      %3656 = vmatpush1.bf16.msra.mxu0 0
      %3657 = vmatprep.subr.bf16.mxu0 0
      %3658 = vmatpush1.bf16.msra.mxu0 0
      %3659 = vmatprep.subr.bf16.mxu0 0
      %3660 = vmatpush1.bf16.msra.mxu0 0
      %3661 = vmatprep.subr.bf16.mxu0 0
      %3662 = vmatpush1.bf16.msra.mxu0 0
      %3663 = vmatprep.subr.bf16.mxu0 0
      %3664 = vmatpush1.bf16.msra.mxu0 0
      %3665 = vmatprep.subr.bf16.mxu0 0
      %3666 = vmatpush1.bf16.msra.mxu0 0
      %3667 = vmatprep.subr.bf16.mxu0 0
      %3668 = vmatpush1.bf16.msra.mxu0 0
      %3669 = vmatprep.subr.bf16.mxu0 0
      %3670 = vmatpush1.bf16.msra.mxu0 0
      %3671 = vmatprep.subr.bf16.mxu0 0
      %3672 = vmatpush1.bf16.msra.mxu0 0
      %3673 = vmatprep.subr.bf16.mxu0 0
      %3674 = vmatpush1.bf16.msra.mxu0 0
      %3675 = vmatprep.subr.bf16.mxu0 0
      %3676 = vmatpush1.bf16.msra.mxu0 0
      %3677 = vmatprep.subr.bf16.mxu0 0
      %3678 = vmatpush1.bf16.msra.mxu0 0
      %3679 = vmatprep.subr.bf16.mxu0 0
      %3680 = vmatpush1.bf16.msra.mxu0 0
      %3681 = vmatprep.subr.bf16.mxu0 0
      %3682 = vmatpush1.bf16.msra.mxu0 0
      %3683 = vmatprep.mubr.bf16.mxu0 0
      %3684 = vmatmul.mubr.bf16.gmra.mrb[0].mxu0 %v3595
      %v3685 = vpop.f32.mrb[0].mxu0
      %v3686 = vadd.f32 0.0, %v3685
      %v3687 = vpop.f32.mrb[0].mxu0
      %v3688 = vpop.f32.mrb[0].mxu0
      %v3689 = vadd.f32 0.0, %v3688
      %v3690 = vpop.f32.mrb[0].mxu0
      %3691 = vmatprep.mubr.bf16.mxu0 0
      %3692 = vmatmul.mubr.bf16.gmra.mrb[0].mxu0 %v3598
      %v3693 = vpop.f32.mrb[0].mxu0
      %v3694 = vadd.f32 0.0, %v3693
      %v3695 = vpop.f32.mrb[0].mxu0
      %v3696 = vpop.f32.mrb[0].mxu0
      %v3697 = vadd.f32 0.0, %v3696
      %v3698 = vpop.f32.mrb[0].mxu0
      %3699 = vmatprep.mubr.bf16.mxu0 0
      %3700 = vmatmul.mubr.bf16.gmra.mrb[0].mxu0 %v3601
      %v3701 = vpop.f32.mrb[0].mxu0
      %v3702 = vadd.f32 0.0, %v3701
      %v3703 = vpop.f32.mrb[0].mxu0
      %v3704 = vpop.f32.mrb[0].mxu0
      %v3705 = vadd.f32 0.0, %v3704
      %v3706 = vpop.f32.mrb[0].mxu0
      %3707 = vmatprep.mubr.bf16.mxu0 0
      %3708 = vmatmul.mubr.bf16.gmra.mrb[0].mxu0 %v3604
      %v3709 = vpop.f32.mrb[0].mxu0
      %v3710 = vadd.f32 0.0, %v3709
      %v3711 = vpop.f32.mrb[0].mxu0
      %v3712 = vpop.f32.mrb[0].mxu0
      %v3713 = vadd.f32 0.0, %v3712
      %v3714 = vpop.f32.mrb[0].mxu0
      %3715 = vmatprep.mubr.bf16.mxu0 0
      %3716 = vmatmul.mubr.bf16.gmra.mrb[0].mxu0 %v3607
      %v3717 = vpop.f32.mrb[0].mxu0
      %v3718 = vadd.f32 0.0, %v3717
      %v3719 = vpop.f32.mrb[0].mxu0
      %v3720 = vpop.f32.mrb[0].mxu0
      %v3721 = vadd.f32 0.0, %v3720
      %v3722 = vpop.f32.mrb[0].mxu0
      %3723 = vmatprep.mubr.bf16.mxu0 0
      %3724 = vmatmul.mubr.bf16.gmra.mrb[0].mxu0 %v3610
      %v3725 = vpop.f32.mrb[0].mxu0
      %v3726 = vadd.f32 0.0, %v3725
      %v3727 = vpop.f32.mrb[0].mxu0
      %v3728 = vpop.f32.mrb[0].mxu0
      %v3729 = vadd.f32 0.0, %v3728
      %v3730 = vpop.f32.mrb[0].mxu0
      %3731 = vmatprep.mubr.bf16.mxu0 0
      %3732 = vmatmul.mubr.bf16.gmra.mrb[0].mxu0 %v3613
      %v3733 = vpop.f32.mrb[0].mxu0
      %v3734 = vadd.f32 0.0, %v3733
      %v3735 = vpop.f32.mrb[0].mxu0
      %v3736 = vpop.f32.mrb[0].mxu0
      %v3737 = vadd.f32 0.0, %v3736
      %v3738 = vpop.f32.mrb[0].mxu0
      %3739 = vmatprep.mubr.bf16.mxu0 0
      %3740 = vmatmul.mubr.bf16.gmra.mrb[0].mxu0 %v3616
      %v3741 = vpop.f32.mrb[0].mxu0
      %v3742 = vadd.f32 0.0, %v3741
      %v3743 = vpop.f32.mrb[0].mxu0
      %v3744 = vpop.f32.mrb[0].mxu0
      %v3745 = vadd.f32 0.0, %v3744
      %v3746 = vpop.f32.mrb[0].mxu0
      %3747 = vmatprep.mubr.bf16.mxu0 0
      %3748 = vmatmul.mubr.bf16.gmra.mrb[0].mxu0 %v3619
      %v3749 = vpop.f32.mrb[0].mxu0
      %v3750 = vadd.f32 0.0, %v3749
      %v3751 = vpop.f32.mrb[0].mxu0
      %v3752 = vpop.f32.mrb[0].mxu0
      %v3753 = vadd.f32 0.0, %v3752
      %v3754 = vpop.f32.mrb[0].mxu0
      %3755 = vmatprep.mubr.bf16.mxu0 0
      %3756 = vmatmul.mubr.bf16.gmra.mrb[0].mxu0 %v3622
      %v3757 = vpop.f32.mrb[0].mxu0
      %v3758 = vadd.f32 0.0, %v3757
      %v3759 = vpop.f32.mrb[0].mxu0
      %v3760 = vpop.f32.mrb[0].mxu0
      %v3761 = vadd.f32 0.0, %v3760
      %v3762 = vpop.f32.mrb[0].mxu0
      %3763 = vmatprep.mubr.bf16.mxu0 0
      %3764 = vmatmul.mubr.bf16.gmra.mrb[0].mxu0 %v3625
      %v3765 = vpop.f32.mrb[0].mxu0
      %v3766 = vadd.f32 0.0, %v3765
      %v3767 = vpop.f32.mrb[0].mxu0
      %v3768 = vpop.f32.mrb[0].mxu0
      %v3769 = vadd.f32 0.0, %v3768
      %v3770 = vpop.f32.mrb[0].mxu0
      %3771 = vmatprep.mubr.bf16.mxu0 0
      %3772 = vmatmul.mubr.bf16.gmra.mrb[0].mxu0 %v3628
      %v3773 = vpop.f32.mrb[0].mxu0
      %v3774 = vadd.f32 0.0, %v3773
      %v3775 = vpop.f32.mrb[0].mxu0
      %v3776 = vpop.f32.mrb[0].mxu0
      %v3777 = vadd.f32 0.0, %v3776
      %v3778 = vpop.f32.mrb[0].mxu0
      %3779 = vmatprep.mubr.bf16.mxu0 0
      %3780 = vmatmul.mubr.bf16.gmra.mrb[0].mxu0 %v3631
      %v3781 = vpop.f32.mrb[0].mxu0
      %v3782 = vadd.f32 0.0, %v3781
      %v3783 = vpop.f32.mrb[0].mxu0
      %v3784 = vpop.f32.mrb[0].mxu0
      %v3785 = vadd.f32 0.0, %v3784
      %v3786 = vpop.f32.mrb[0].mxu0
      %3787 = vmatprep.mubr.bf16.mxu0 0
      %3788 = vmatmul.mubr.bf16.gmra.mrb[0].mxu0 %v3634
      %v3789 = vpop.f32.mrb[0].mxu0
      %v3790 = vadd.f32 0.0, %v3789
      %v3791 = vpop.f32.mrb[0].mxu0
      %v3792 = vpop.f32.mrb[0].mxu0
      %v3793 = vadd.f32 0.0, %v3792
      %v3794 = vpop.f32.mrb[0].mxu0
      %3795 = vmatprep.mubr.bf16.mxu0 0
      %3796 = vmatmul.mubr.bf16.gmra.mrb[0].mxu0 %v3637
      %v3797 = vpop.f32.mrb[0].mxu0
      %v3798 = vadd.f32 0.0, %v3797
      %v3799 = vpop.f32.mrb[0].mxu0
      %v3800 = vpop.f32.mrb[0].mxu0
      %v3801 = vadd.f32 0.0, %v3800
      %v3802 = vpop.f32.mrb[0].mxu0
      %3803 = vmatprep.mubr.bf16.mxu0 0
      %3804 = vmatmul.mubr.bf16.gmra.mrb[0].mxu0 %v3640
      %v3805 = vpop.f32.mrb[0].mxu0
      %v3806 = vadd.f32 0.0, %v3805
      %v3807 = vpop.f32.mrb[0].mxu0
      %v3808 = vpop.f32.mrb[0].mxu0
      %v3809 = vadd.f32 0.0, %v3808
      %v3810 = vpop.f32.mrb[0].mxu0
      %3811 = vmatprep.mubr.bf16.mxu0 0
      %3812 = vmatmul.mubr.bf16.gmra.mrb[0].mxu0 %v3643
      %v3813 = vpop.f32.mrb[0].mxu0
      %v3814 = vadd.f32 0.0, %v3813
      %v3815 = vpop.f32.mrb[0].mxu0
      %v3816 = vpop.f32.mrb[0].mxu0
      %v3817 = vadd.f32 0.0, %v3816
      %v3818 = vpop.f32.mrb[0].mxu0
      %3819 = vmatprep.mubr.bf16.mxu0 0
      %3820 = vmatmul.mubr.bf16.gmra.mrb[0].mxu0 %v3646
      %v3821 = vpop.f32.mrb[0].mxu0
      %v3822 = vadd.f32 0.0, %v3821
      %v3823 = vpop.f32.mrb[0].mxu0
      %v3824 = vpop.f32.mrb[0].mxu0
      %v3825 = vadd.f32 0.0, %v3824
      %v3826 = vpop.f32.mrb[0].mxu0
      %3827 = vdwg.mxu0
      %v3828 = vld [vmem:[#allocation2] sm:$0xff]
      %v3829 = vld [vmem:[#allocation2 + $0x8] sm:$0xff]
      %v3830 = vld [vmem:[#allocation2 + $0x10] sm:$0xff]
      %v3831 = vld [vmem:[#allocation2 + $0x18] sm:$0xff]
      %v3832 = vld [vmem:[#allocation2 + $0x20] sm:$0xff]
      %v3833 = vld [vmem:[#allocation2 + $0x28] sm:$0xff]
      %v3834 = vld [vmem:[#allocation2 + $0x30] sm:$0xff]
      %v3835 = vld [vmem:[#allocation2 + $0x38] sm:$0xff]
      %v3836 = vld [vmem:[#allocation2 + $0x40] sm:$0xff]
      %v3837 = vld [vmem:[#allocation2 + $0x48] sm:$0xff]
      %v3838 = vld [vmem:[#allocation2 + $0x50] sm:$0xff]
      %v3839 = vld [vmem:[#allocation2 + $0x58] sm:$0xff]
      %v3840 = vld [vmem:[#allocation2 + $0x60] sm:$0xff]
      %v3841 = vld [vmem:[#allocation2 + $0x68] sm:$0xff]
      %v3842 = vld [vmem:[#allocation2 + $0x70] sm:$0xff]
      %v3843 = vld [vmem:[#allocation2 + $0x78] sm:$0xff]
      %v3844 = vld [vmem:[#allocation2 + $0x80] sm:$0xff]
      %v3845 = vld [vmem:[#allocation2 + $0x88] sm:$0xff]
      %v3846 = vld [vmem:[#allocation2 + $0x90] sm:$0xff]
      %v3847 = vld [vmem:[#allocation2 + $0x98] sm:$0xff]
      %v3848 = vld [vmem:[#allocation2 + $0xa0] sm:$0xff]
      %v3849 = vld [vmem:[#allocation2 + $0xa8] sm:$0xff]
      %v3850 = vld [vmem:[#allocation2 + $0xb0] sm:$0xff]
      %v3851 = vld [vmem:[#allocation2 + $0xb8] sm:$0xff]
      %v3852 = vld [vmem:[#allocation2 + $0xc0] sm:$0xff]
      %v3853 = vld [vmem:[#allocation2 + $0xc8] sm:$0xff]
      %v3854 = vld [vmem:[#allocation2 + $0xd0] sm:$0xff]
      %v3855 = vld [vmem:[#allocation2 + $0xd8] sm:$0xff]
      %v3856 = vld [vmem:[#allocation2 + $0xe0] sm:$0xff]
      %v3857 = vld [vmem:[#allocation2 + $0xe8] sm:$0xff]
      %v3858 = vld [vmem:[#allocation2 + $0xf0] sm:$0xff]
      %v3859 = vld [vmem:[#allocation2 + $0xf8] sm:$0xff]
      %v3860 = vld [vmem:[#allocation2 + $0x100] sm:$0xff]
      %v3861 = vld [vmem:[#allocation2 + $0x108] sm:$0xff]
      %v3862 = vld [vmem:[#allocation2 + $0x110] sm:$0xff]
      %v3863 = vld [vmem:[#allocation2 + $0x118] sm:$0xff]
      %v3864 = vadd.f32 %v3828, %v3686
      %v3865 = vadd.f32 %v3829, %v3689
      %v3866 = vadd.f32 %v3830, %v3694
      %v3867 = vadd.f32 %v3831, %v3697
      %v3868 = vadd.f32 %v3832, %v3702
      %v3869 = vadd.f32 %v3833, %v3705
      %v3870 = vadd.f32 %v3834, %v3710
      %v3871 = vadd.f32 %v3835, %v3713
      %v3872 = vadd.f32 %v3836, %v3718
      %v3873 = vadd.f32 %v3837, %v3721
      %v3874 = vadd.f32 %v3838, %v3726
      %v3875 = vadd.f32 %v3839, %v3729
      %v3876 = vadd.f32 %v3840, %v3734
      %v3877 = vadd.f32 %v3841, %v3737
      %v3878 = vadd.f32 %v3842, %v3742
      %v3879 = vadd.f32 %v3843, %v3745
      %v3880 = vadd.f32 %v3844, %v3750
      %v3881 = vadd.f32 %v3845, %v3753
      %v3882 = vadd.f32 %v3846, %v3758
      %v3883 = vadd.f32 %v3847, %v3761
      %v3884 = vadd.f32 %v3848, %v3766
      %v3885 = vadd.f32 %v3849, %v3769
      %v3886 = vadd.f32 %v3850, %v3774
      %v3887 = vadd.f32 %v3851, %v3777
      %v3888 = vadd.f32 %v3852, %v3782
      %v3889 = vadd.f32 %v3853, %v3785
      %v3890 = vadd.f32 %v3854, %v3790
      %v3891 = vadd.f32 %v3855, %v3793
      %v3892 = vadd.f32 %v3856, %v3798
      %v3893 = vadd.f32 %v3857, %v3801
      %v3894 = vadd.f32 %v3858, %v3806
      %v3895 = vadd.f32 %v3859, %v3809
      %v3896 = vadd.f32 %v3860, %v3814
      %v3897 = vadd.f32 %v3861, %v3817
      %v3898 = vadd.f32 %v3862, %v3822
      %v3899 = vadd.f32 %v3863, %v3825
      %3900 = vst [vmem:[#allocation2] sm:$0xff] %v3864
      %3901 = vst [vmem:[#allocation2 + $0x8] sm:$0xff] %v3865
      %3902 = vst [vmem:[#allocation2 + $0x10] sm:$0xff] %v3866
      %3903 = vst [vmem:[#allocation2 + $0x18] sm:$0xff] %v3867
      %3904 = vst [vmem:[#allocation2 + $0x20] sm:$0xff] %v3868
      %3905 = vst [vmem:[#allocation2 + $0x28] sm:$0xff] %v3869
      %3906 = vst [vmem:[#allocation2 + $0x30] sm:$0xff] %v3870
      %3907 = vst [vmem:[#allocation2 + $0x38] sm:$0xff] %v3871
      %3908 = vst [vmem:[#allocation2 + $0x40] sm:$0xff] %v3872
      %3909 = vst [vmem:[#allocation2 + $0x48] sm:$0xff] %v3873
      %3910 = vst [vmem:[#allocation2 + $0x50] sm:$0xff] %v3874
      %3911 = vst [vmem:[#allocation2 + $0x58] sm:$0xff] %v3875
      %3912 = vst [vmem:[#allocation2 + $0x60] sm:$0xff] %v3876
      %3913 = vst [vmem:[#allocation2 + $0x68] sm:$0xff] %v3877
      %3914 = vst [vmem:[#allocation2 + $0x70] sm:$0xff] %v3878
      %3915 = vst [vmem:[#allocation2 + $0x78] sm:$0xff] %v3879
      %3916 = vst [vmem:[#allocation2 + $0x80] sm:$0xff] %v3880
      %3917 = vst [vmem:[#allocation2 + $0x88] sm:$0xff] %v3881
      %3918 = vst [vmem:[#allocation2 + $0x90] sm:$0xff] %v3882
      %3919 = vst [vmem:[#allocation2 + $0x98] sm:$0xff] %v3883
      %3920 = vst [vmem:[#allocation2 + $0xa0] sm:$0xff] %v3884
      %3921 = vst [vmem:[#allocation2 + $0xa8] sm:$0xff] %v3885
      %3922 = vst [vmem:[#allocation2 + $0xb0] sm:$0xff] %v3886
      %3923 = vst [vmem:[#allocation2 + $0xb8] sm:$0xff] %v3887
      %3924 = vst [vmem:[#allocation2 + $0xc0] sm:$0xff] %v3888
      %3925 = vst [vmem:[#allocation2 + $0xc8] sm:$0xff] %v3889
      %3926 = vst [vmem:[#allocation2 + $0xd0] sm:$0xff] %v3890
      %3927 = vst [vmem:[#allocation2 + $0xd8] sm:$0xff] %v3891
      %3928 = vst [vmem:[#allocation2 + $0xe0] sm:$0xff] %v3892
      %3929 = vst [vmem:[#allocation2 + $0xe8] sm:$0xff] %v3893
      %3930 = vst [vmem:[#allocation2 + $0xf0] sm:$0xff] %v3894
      %3931 = vst [vmem:[#allocation2 + $0xf8] sm:$0xff] %v3895
      %3932 = vst [vmem:[#allocation2 + $0x100] sm:$0xff] %v3896
      %3933 = vst [vmem:[#allocation2 + $0x108] sm:$0xff] %v3897
      %3934 = vst [vmem:[#allocation2 + $0x110] sm:$0xff] %v3898
      %3935 = vst [vmem:[#allocation2 + $0x118] sm:$0xff] %v3899
      %v3936 = vld [vmem:[%s206 + $0x10] sm:$0xc]
      %v3937 = vld [vmem:[%s206 + $0x14] sm:$0xf]
      %v3938 = vld [vmem:[%s206 + $0x18] sm:$0xf]
      %v3939 = vld [vmem:[%s206 + $0x1c] sm:$0xf]
      %v3940 = vld [vmem:[%s206 + $0x20] sm:$0xf]
      %v3941 = vld [vmem:[%s206 + $0x24] sm:$0xf]
      %v3942 = vld [vmem:[%s206 + $0x28] sm:$0xf]
      %v3943 = vld [vmem:[%s206 + $0x2c] sm:$0xf]
      %v3944 = vld [vmem:[%s206 + $0x30] sm:$0xf]
      %v3945 = vld [vmem:[%s206 + $0x34] sm:$0xf]
      %v3946 = vld [vmem:[%s206 + $0x38] sm:$0xf]
      %v3947 = vld [vmem:[%s206 + $0x3c] sm:$0xf]
      %v3948 = vld [vmem:[%s206 + $0x40] sm:$0xf]
      %v3949 = vld [vmem:[%s206 + $0x44] sm:$0xf]
      %v3950 = vld [vmem:[%s206 + $0x48] sm:$0xf]
      %v3951 = vld [vmem:[%s206 + $0x4c] sm:$0xf]
      %v3952 = vld [vmem:[%s206 + $0x50] sm:$0xf]
      %v3953 = vld [vmem:[%s206 + $0x54] sm:$0xf]
      %v3954 = vld [vmem:[%s206 + $0x58] sm:$0xf]
      %v3955 = vld [vmem:[%s206 + $0x5c] sm:$0xf]
      %v3956 = vld [vmem:[%s206 + $0x60] sm:$0xf]
      %v3957 = vld [vmem:[%s206 + $0x64] sm:$0xf]
      %v3958 = vld [vmem:[%s206 + $0x68] sm:$0xf]
      %v3959 = vld [vmem:[%s206 + $0x6c] sm:$0xf]
      %v3960 = vld [vmem:[%s206 + $0x70] sm:$0xf]
      %v3961 = vld [vmem:[%s206 + $0x74] sm:$0xf]
      %v3962 = vld [vmem:[%s206 + $0x78] sm:$0xf]
      %v3963 = vld [vmem:[%s206 + $0x7c] sm:$0xf]
      %v3964 = vld [vmem:[%s206 + $0x80] sm:$0xf]
      %v3965 = vld [vmem:[%s206 + $0x84] sm:$0xf]
      %v3966 = vld [vmem:[%s206 + $0x88] sm:$0xf]
      %v3967 = vld [vmem:[%s206 + $0x8c] sm:$0xf]
      %v3968 = vld [vmem:[%s206 + $0x90] sm:$0xf]
      %v3969 = vld [vmem:[%s206 + $0x94] sm:$0xf]
      %v3970 = vld [vmem:[%s206 + $0x98] sm:$0xf]
      %v3971 = vld [vmem:[%s206 + $0x9c] sm:$0xf]
      %v3972 = vld [vmem:[%s206 + $0xa0] sm:$0x7]
      %s3973 = scalar_lea.vmem %s210, 14
      %v3974 = vld [vmem:[%s3973] sm:$0x3]
      %v4012 = vunpack.c.l.b16 %v3936
      %v4013 = vunpack.c.l.b16 %v3937
      %v4014 = vunpack.c.l.b16 %v3938
      %v4015 = vunpack.c.l.b16 %v3939
      %v4016 = vunpack.c.l.b16 %v3940
      %v4017 = vunpack.c.l.b16 %v3941
      %v4018 = vunpack.c.l.b16 %v3942
      %v4019 = vunpack.c.l.b16 %v3943
      %v4020 = vunpack.c.l.b16 %v3944
      %v4021 = vunpack.c.l.b16 %v3945
      %v4022 = vunpack.c.l.b16 %v3946
      %v4023 = vunpack.c.l.b16 %v3947
      %v4024 = vunpack.c.l.b16 %v3948
      %v4025 = vunpack.c.l.b16 %v3949
      %v4026 = vunpack.c.l.b16 %v3950
      %v4027 = vunpack.c.l.b16 %v3951
      %v4028 = vunpack.c.l.b16 %v3952
      %v4029 = vunpack.c.l.b16 %v3953
      %v4030 = vunpack.c.l.b16 %v3954
      %v4031 = vunpack.c.l.b16 %v3955
      %v4032 = vunpack.c.l.b16 %v3956
      %v4033 = vunpack.c.l.b16 %v3957
      %v4034 = vunpack.c.l.b16 %v3958
      %v4035 = vunpack.c.l.b16 %v3959
      %v4036 = vunpack.c.l.b16 %v3960
      %v4037 = vunpack.c.l.b16 %v3961
      %v4038 = vunpack.c.l.b16 %v3962
      %v4039 = vunpack.c.l.b16 %v3963
      %v4040 = vunpack.c.l.b16 %v3964
      %v4041 = vunpack.c.l.b16 %v3965
      %v4042 = vunpack.c.l.b16 %v3966
      %v4043 = vunpack.c.l.b16 %v3967
      %v4044 = vunpack.c.l.b16 %v3968
      %v4045 = vunpack.c.l.b16 %v3969
      %v4046 = vunpack.c.l.b16 %v3970
      %v4047 = vunpack.c.l.b16 %v3971
      %v4048 = vunpack.c.l.b16 %v3972
      %v4049 = vpack.c.b16 %v4013, %v4012
      %v4050 = vpack.c.b16 %v4015, %v4014
      %v4051 = vpack.c.b16 %v4017, %v4016
      %v4052 = vpack.c.b16 %v4019, %v4018
      %v4053 = vpack.c.b16 %v4021, %v4020
      %v4054 = vpack.c.b16 %v4023, %v4022
      %v4055 = vpack.c.b16 %v4025, %v4024
      %v4056 = vpack.c.b16 %v4027, %v4026
      %v4057 = vpack.c.b16 %v4029, %v4028
      %v4058 = vpack.c.b16 %v4031, %v4030
      %v4059 = vpack.c.b16 %v4033, %v4032
      %v4060 = vpack.c.b16 %v4035, %v4034
      %v4061 = vpack.c.b16 %v4037, %v4036
      %v4062 = vpack.c.b16 %v4039, %v4038
      %v4063 = vpack.c.b16 %v4041, %v4040
      %v4064 = vpack.c.b16 %v4043, %v4042
      %v4065 = vpack.c.b16 %v4045, %v4044
      %v4066 = vpack.c.b16 %v4047, %v4046
      %v4067 = vpack.c.b16 %v4048, %v4048
      %vm4068 = vsmask.f32 5376
      %v4070 = vshrl.u32 %v4049, 16
      %v4072 = vrot.slane %v4070, 2
      %v4073 = vshll.u32 %v4049, 16
      %v4075 = vrot.slane %v4073, 3
      %v4076 = vor.u32 %v4072, %v4075
      %v4078 = vshrl.u32 %v4050, 16
      %v4080 = vrot.slane %v4078, 2
      %v4081 = vshll.u32 %v4050, 16
      %v4083 = vrot.slane %v4081, 3
      %v4084 = vor.u32 %v4080, %v4083
      %v4085 = vsel %vm4068, %v4076, %v4084
      %v4087 = vshrl.u32 %v4051, 16
      %v4089 = vrot.slane %v4087, 2
      %v4090 = vshll.u32 %v4051, 16
      %v4092 = vrot.slane %v4090, 3
      %v4093 = vor.u32 %v4089, %v4092
      %v4094 = vsel %vm4068, %v4084, %v4093
      %v4096 = vshrl.u32 %v4052, 16
      %v4098 = vrot.slane %v4096, 2
      %v4099 = vshll.u32 %v4052, 16
      %v4101 = vrot.slane %v4099, 3
      %v4102 = vor.u32 %v4098, %v4101
      %v4103 = vsel %vm4068, %v4093, %v4102
      %v4105 = vshrl.u32 %v4053, 16
      %v4107 = vrot.slane %v4105, 2
      %v4108 = vshll.u32 %v4053, 16
      %v4110 = vrot.slane %v4108, 3
      %v4111 = vor.u32 %v4107, %v4110
      %v4112 = vsel %vm4068, %v4102, %v4111
      %v4114 = vshrl.u32 %v4054, 16
      %v4116 = vrot.slane %v4114, 2
      %v4117 = vshll.u32 %v4054, 16
      %v4119 = vrot.slane %v4117, 3
      %v4120 = vor.u32 %v4116, %v4119
      %v4121 = vsel %vm4068, %v4111, %v4120
      %v4123 = vshrl.u32 %v4055, 16
      %v4125 = vrot.slane %v4123, 2
      %v4126 = vshll.u32 %v4055, 16
      %v4128 = vrot.slane %v4126, 3
      %v4129 = vor.u32 %v4125, %v4128
      %v4130 = vsel %vm4068, %v4120, %v4129
      %v4132 = vshrl.u32 %v4056, 16
      %v4134 = vrot.slane %v4132, 2
      %v4135 = vshll.u32 %v4056, 16
      %v4137 = vrot.slane %v4135, 3
      %v4138 = vor.u32 %v4134, %v4137
      %v4139 = vsel %vm4068, %v4129, %v4138
      %v4141 = vshrl.u32 %v4057, 16
      %v4143 = vrot.slane %v4141, 2
      %v4144 = vshll.u32 %v4057, 16
      %v4146 = vrot.slane %v4144, 3
      %v4147 = vor.u32 %v4143, %v4146
      %v4148 = vsel %vm4068, %v4138, %v4147
      %v4150 = vshrl.u32 %v4058, 16
      %v4152 = vrot.slane %v4150, 2
      %v4153 = vshll.u32 %v4058, 16
      %v4155 = vrot.slane %v4153, 3
      %v4156 = vor.u32 %v4152, %v4155
      %v4157 = vsel %vm4068, %v4147, %v4156
      %v4159 = vshrl.u32 %v4059, 16
      %v4161 = vrot.slane %v4159, 2
      %v4162 = vshll.u32 %v4059, 16
      %v4164 = vrot.slane %v4162, 3
      %v4165 = vor.u32 %v4161, %v4164
      %v4166 = vsel %vm4068, %v4156, %v4165
      %v4168 = vshrl.u32 %v4060, 16
      %v4170 = vrot.slane %v4168, 2
      %v4171 = vshll.u32 %v4060, 16
      %v4173 = vrot.slane %v4171, 3
      %v4174 = vor.u32 %v4170, %v4173
      %v4175 = vsel %vm4068, %v4165, %v4174
      %v4177 = vshrl.u32 %v4061, 16
      %v4179 = vrot.slane %v4177, 2
      %v4180 = vshll.u32 %v4061, 16
      %v4182 = vrot.slane %v4180, 3
      %v4183 = vor.u32 %v4179, %v4182
      %v4184 = vsel %vm4068, %v4174, %v4183
      %v4186 = vshrl.u32 %v4062, 16
      %v4188 = vrot.slane %v4186, 2
      %v4189 = vshll.u32 %v4062, 16
      %v4191 = vrot.slane %v4189, 3
      %v4192 = vor.u32 %v4188, %v4191
      %v4193 = vsel %vm4068, %v4183, %v4192
      %v4195 = vshrl.u32 %v4063, 16
      %v4197 = vrot.slane %v4195, 2
      %v4198 = vshll.u32 %v4063, 16
      %v4200 = vrot.slane %v4198, 3
      %v4201 = vor.u32 %v4197, %v4200
      %v4202 = vsel %vm4068, %v4192, %v4201
      %v4204 = vshrl.u32 %v4064, 16
      %v4206 = vrot.slane %v4204, 2
      %v4207 = vshll.u32 %v4064, 16
      %v4209 = vrot.slane %v4207, 3
      %v4210 = vor.u32 %v4206, %v4209
      %v4211 = vsel %vm4068, %v4201, %v4210
      %v4213 = vshrl.u32 %v4065, 16
      %v4215 = vrot.slane %v4213, 2
      %v4216 = vshll.u32 %v4065, 16
      %v4218 = vrot.slane %v4216, 3
      %v4219 = vor.u32 %v4215, %v4218
      %v4220 = vsel %vm4068, %v4210, %v4219
      %v4222 = vshrl.u32 %v4066, 16
      %v4224 = vrot.slane %v4222, 2
      %v4225 = vshll.u32 %v4066, 16
      %v4227 = vrot.slane %v4225, 3
      %v4228 = vor.u32 %v4224, %v4227
      %v4229 = vsel %vm4068, %v4219, %v4228
      %v4231 = vshrl.u32 %v4067, 16
      %v4233 = vrot.slane %v4231, 2
      %v4234 = vshll.u32 %v4067, 16
      %v4236 = vrot.slane %v4234, 3
      %v4237 = vor.u32 %v4233, %v4236
      %v4238 = vsel %vm4068, %v4228, %v4237
      %v4240 = vsel %vm350, %v4085, 0
      %v4243 = vsel %vm350, %v4094, 0
      %v4246 = vsel %vm350, %v4103, 0
      %v4249 = vsel %vm350, %v4112, 0
      %v4252 = vsel %vm350, %v4121, 0
      %v4255 = vsel %vm350, %v4130, 0
      %v4258 = vsel %vm350, %v4139, 0
      %v4261 = vsel %vm350, %v4148, 0
      %v4264 = vsel %vm350, %v4157, 0
      %v4267 = vsel %vm350, %v4166, 0
      %v4270 = vsel %vm350, %v4175, 0
      %v4273 = vsel %vm350, %v4184, 0
      %v4276 = vsel %vm350, %v4193, 0
      %v4279 = vsel %vm350, %v4202, 0
      %v4282 = vsel %vm350, %v4211, 0
      %v4285 = vsel %vm350, %v4220, 0
      %v4288 = vsel %vm350, %v4229, 0
      %v4291 = vsel %vm350, %v4238, 0
      %v4294 = vsel %vm405, %v3974, 0
      %4296 = vmatprep.subr.bf16.mxu0 0
      %4297 = vmatpush1.bf16.msra.mxu0 %v4294
      %4298 = vmatprep.subr.bf16.mxu0 0
      %4299 = vmatpush1.bf16.msra.mxu0 0
      %4300 = vmatprep.subr.bf16.mxu0 0
      %4301 = vmatpush1.bf16.msra.mxu0 0
      %4302 = vmatprep.subr.bf16.mxu0 0
      %4303 = vmatpush1.bf16.msra.mxu0 0
      %4304 = vmatprep.subr.bf16.mxu0 0
      %4305 = vmatpush1.bf16.msra.mxu0 0
      %4306 = vmatprep.subr.bf16.mxu0 0
      %4307 = vmatpush1.bf16.msra.mxu0 0
      %4308 = vmatprep.subr.bf16.mxu0 0
      %4309 = vmatpush1.bf16.msra.mxu0 0
      %4310 = vmatprep.subr.bf16.mxu0 0
      %4311 = vmatpush1.bf16.msra.mxu0 0
      %4312 = vmatprep.subr.bf16.mxu0 0
      %4313 = vmatpush1.bf16.msra.mxu0 0
      %4314 = vmatprep.subr.bf16.mxu0 0
      %4315 = vmatpush1.bf16.msra.mxu0 0
      %4316 = vmatprep.subr.bf16.mxu0 0
      %4317 = vmatpush1.bf16.msra.mxu0 0
      %4318 = vmatprep.subr.bf16.mxu0 0
      %4319 = vmatpush1.bf16.msra.mxu0 0
      %4320 = vmatprep.subr.bf16.mxu0 0
      %4321 = vmatpush1.bf16.msra.mxu0 0
      %4322 = vmatprep.subr.bf16.mxu0 0
      %4323 = vmatpush1.bf16.msra.mxu0 0
      %4324 = vmatprep.subr.bf16.mxu0 0
      %4325 = vmatpush1.bf16.msra.mxu0 0
      %4326 = vmatprep.subr.bf16.mxu0 0
      %4327 = vmatpush1.bf16.msra.mxu0 0
      %4328 = vmatprep.mubr.bf16.mxu0 0
      %4329 = vmatmul.mubr.bf16.gmra.mrb[0].mxu0 %v4240
      %v4330 = vpop.f32.mrb[0].mxu0
      %v4331 = vadd.f32 0.0, %v4330
      %v4332 = vpop.f32.mrb[0].mxu0
      %v4333 = vpop.f32.mrb[0].mxu0
      %v4334 = vadd.f32 0.0, %v4333
      %v4335 = vpop.f32.mrb[0].mxu0
      %4336 = vmatprep.mubr.bf16.mxu0 0
      %4337 = vmatmul.mubr.bf16.gmra.mrb[0].mxu0 %v4243
      %v4338 = vpop.f32.mrb[0].mxu0
      %v4339 = vadd.f32 0.0, %v4338
      %v4340 = vpop.f32.mrb[0].mxu0
      %v4341 = vpop.f32.mrb[0].mxu0
      %v4342 = vadd.f32 0.0, %v4341
      %v4343 = vpop.f32.mrb[0].mxu0
      %4344 = vmatprep.mubr.bf16.mxu0 0
      %4345 = vmatmul.mubr.bf16.gmra.mrb[0].mxu0 %v4246
      %v4346 = vpop.f32.mrb[0].mxu0
      %v4347 = vadd.f32 0.0, %v4346
      %v4348 = vpop.f32.mrb[0].mxu0
      %v4349 = vpop.f32.mrb[0].mxu0
      %v4350 = vadd.f32 0.0, %v4349
      %v4351 = vpop.f32.mrb[0].mxu0
      %4352 = vmatprep.mubr.bf16.mxu0 0
      %4353 = vmatmul.mubr.bf16.gmra.mrb[0].mxu0 %v4249
      %v4354 = vpop.f32.mrb[0].mxu0
      %v4355 = vadd.f32 0.0, %v4354
      %v4356 = vpop.f32.mrb[0].mxu0
      %v4357 = vpop.f32.mrb[0].mxu0
      %v4358 = vadd.f32 0.0, %v4357
      %v4359 = vpop.f32.mrb[0].mxu0
      %4360 = vmatprep.mubr.bf16.mxu0 0
      %4361 = vmatmul.mubr.bf16.gmra.mrb[0].mxu0 %v4252
      %v4362 = vpop.f32.mrb[0].mxu0
      %v4363 = vadd.f32 0.0, %v4362
      %v4364 = vpop.f32.mrb[0].mxu0
      %v4365 = vpop.f32.mrb[0].mxu0
      %v4366 = vadd.f32 0.0, %v4365
      %v4367 = vpop.f32.mrb[0].mxu0
      %4368 = vmatprep.mubr.bf16.mxu0 0
      %4369 = vmatmul.mubr.bf16.gmra.mrb[0].mxu0 %v4255
      %v4370 = vpop.f32.mrb[0].mxu0
      %v4371 = vadd.f32 0.0, %v4370
      %v4372 = vpop.f32.mrb[0].mxu0
      %v4373 = vpop.f32.mrb[0].mxu0
      %v4374 = vadd.f32 0.0, %v4373
      %v4375 = vpop.f32.mrb[0].mxu0
      %4376 = vmatprep.mubr.bf16.mxu0 0
      %4377 = vmatmul.mubr.bf16.gmra.mrb[0].mxu0 %v4258
      %v4378 = vpop.f32.mrb[0].mxu0
      %v4379 = vadd.f32 0.0, %v4378
      %v4380 = vpop.f32.mrb[0].mxu0
      %v4381 = vpop.f32.mrb[0].mxu0
      %v4382 = vadd.f32 0.0, %v4381
      %v4383 = vpop.f32.mrb[0].mxu0
      %4384 = vmatprep.mubr.bf16.mxu0 0
      %4385 = vmatmul.mubr.bf16.gmra.mrb[0].mxu0 %v4261
      %v4386 = vpop.f32.mrb[0].mxu0
      %v4387 = vadd.f32 0.0, %v4386
      %v4388 = vpop.f32.mrb[0].mxu0
      %v4389 = vpop.f32.mrb[0].mxu0
      %v4390 = vadd.f32 0.0, %v4389
      %v4391 = vpop.f32.mrb[0].mxu0
      %4392 = vmatprep.mubr.bf16.mxu0 0
      %4393 = vmatmul.mubr.bf16.gmra.mrb[0].mxu0 %v4264
      %v4394 = vpop.f32.mrb[0].mxu0
      %v4395 = vadd.f32 0.0, %v4394
      %v4396 = vpop.f32.mrb[0].mxu0
      %v4397 = vpop.f32.mrb[0].mxu0
      %v4398 = vadd.f32 0.0, %v4397
      %v4399 = vpop.f32.mrb[0].mxu0
      %4400 = vmatprep.mubr.bf16.mxu0 0
      %4401 = vmatmul.mubr.bf16.gmra.mrb[0].mxu0 %v4267
      %v4402 = vpop.f32.mrb[0].mxu0
      %v4403 = vadd.f32 0.0, %v4402
      %v4404 = vpop.f32.mrb[0].mxu0
      %v4405 = vpop.f32.mrb[0].mxu0
      %v4406 = vadd.f32 0.0, %v4405
      %v4407 = vpop.f32.mrb[0].mxu0
      %4408 = vmatprep.mubr.bf16.mxu0 0
      %4409 = vmatmul.mubr.bf16.gmra.mrb[0].mxu0 %v4270
      %v4410 = vpop.f32.mrb[0].mxu0
      %v4411 = vadd.f32 0.0, %v4410
      %v4412 = vpop.f32.mrb[0].mxu0
      %v4413 = vpop.f32.mrb[0].mxu0
      %v4414 = vadd.f32 0.0, %v4413
      %v4415 = vpop.f32.mrb[0].mxu0
      %4416 = vmatprep.mubr.bf16.mxu0 0
      %4417 = vmatmul.mubr.bf16.gmra.mrb[0].mxu0 %v4273
      %v4418 = vpop.f32.mrb[0].mxu0
      %v4419 = vadd.f32 0.0, %v4418
      %v4420 = vpop.f32.mrb[0].mxu0
      %v4421 = vpop.f32.mrb[0].mxu0
      %v4422 = vadd.f32 0.0, %v4421
      %v4423 = vpop.f32.mrb[0].mxu0
      %4424 = vmatprep.mubr.bf16.mxu0 0
      %4425 = vmatmul.mubr.bf16.gmra.mrb[0].mxu0 %v4276
      %v4426 = vpop.f32.mrb[0].mxu0
      %v4427 = vadd.f32 0.0, %v4426
      %v4428 = vpop.f32.mrb[0].mxu0
      %v4429 = vpop.f32.mrb[0].mxu0
      %v4430 = vadd.f32 0.0, %v4429
      %v4431 = vpop.f32.mrb[0].mxu0
      %4432 = vmatprep.mubr.bf16.mxu0 0
      %4433 = vmatmul.mubr.bf16.gmra.mrb[0].mxu0 %v4279
      %v4434 = vpop.f32.mrb[0].mxu0
      %v4435 = vadd.f32 0.0, %v4434
      %v4436 = vpop.f32.mrb[0].mxu0
      %v4437 = vpop.f32.mrb[0].mxu0
      %v4438 = vadd.f32 0.0, %v4437
      %v4439 = vpop.f32.mrb[0].mxu0
      %4440 = vmatprep.mubr.bf16.mxu0 0
      %4441 = vmatmul.mubr.bf16.gmra.mrb[0].mxu0 %v4282
      %v4442 = vpop.f32.mrb[0].mxu0
      %v4443 = vadd.f32 0.0, %v4442
      %v4444 = vpop.f32.mrb[0].mxu0
      %v4445 = vpop.f32.mrb[0].mxu0
      %v4446 = vadd.f32 0.0, %v4445
      %v4447 = vpop.f32.mrb[0].mxu0
      %4448 = vmatprep.mubr.bf16.mxu0 0
      %4449 = vmatmul.mubr.bf16.gmra.mrb[0].mxu0 %v4285
      %v4450 = vpop.f32.mrb[0].mxu0
      %v4451 = vadd.f32 0.0, %v4450
      %v4452 = vpop.f32.mrb[0].mxu0
      %v4453 = vpop.f32.mrb[0].mxu0
      %v4454 = vadd.f32 0.0, %v4453
      %v4455 = vpop.f32.mrb[0].mxu0
      %4456 = vmatprep.mubr.bf16.mxu0 0
      %4457 = vmatmul.mubr.bf16.gmra.mrb[0].mxu0 %v4288
      %v4458 = vpop.f32.mrb[0].mxu0
      %v4459 = vadd.f32 0.0, %v4458
      %v4460 = vpop.f32.mrb[0].mxu0
      %v4461 = vpop.f32.mrb[0].mxu0
      %v4462 = vadd.f32 0.0, %v4461
      %v4463 = vpop.f32.mrb[0].mxu0
      %4464 = vmatprep.mubr.bf16.mxu0 0
      %4465 = vmatmul.mubr.bf16.gmra.mrb[0].mxu0 %v4291
      %v4466 = vpop.f32.mrb[0].mxu0
      %v4467 = vadd.f32 0.0, %v4466
      %v4468 = vpop.f32.mrb[0].mxu0
      %v4469 = vpop.f32.mrb[0].mxu0
      %v4470 = vadd.f32 0.0, %v4469
      %v4471 = vpop.f32.mrb[0].mxu0
      %4472 = vdwg.mxu0
      %v4473 = vld [vmem:[#allocation2] sm:$0xff]
      %v4474 = vld [vmem:[#allocation2 + $0x8] sm:$0xff]
      %v4475 = vld [vmem:[#allocation2 + $0x10] sm:$0xff]
      %v4476 = vld [vmem:[#allocation2 + $0x18] sm:$0xff]
      %v4477 = vld [vmem:[#allocation2 + $0x20] sm:$0xff]
      %v4478 = vld [vmem:[#allocation2 + $0x28] sm:$0xff]
      %v4479 = vld [vmem:[#allocation2 + $0x30] sm:$0xff]
      %v4480 = vld [vmem:[#allocation2 + $0x38] sm:$0xff]
      %v4481 = vld [vmem:[#allocation2 + $0x40] sm:$0xff]
      %v4482 = vld [vmem:[#allocation2 + $0x48] sm:$0xff]
      %v4483 = vld [vmem:[#allocation2 + $0x50] sm:$0xff]
      %v4484 = vld [vmem:[#allocation2 + $0x58] sm:$0xff]
      %v4485 = vld [vmem:[#allocation2 + $0x60] sm:$0xff]
      %v4486 = vld [vmem:[#allocation2 + $0x68] sm:$0xff]
      %v4487 = vld [vmem:[#allocation2 + $0x70] sm:$0xff]
      %v4488 = vld [vmem:[#allocation2 + $0x78] sm:$0xff]
      %v4489 = vld [vmem:[#allocation2 + $0x80] sm:$0xff]
      %v4490 = vld [vmem:[#allocation2 + $0x88] sm:$0xff]
      %v4491 = vld [vmem:[#allocation2 + $0x90] sm:$0xff]
      %v4492 = vld [vmem:[#allocation2 + $0x98] sm:$0xff]
      %v4493 = vld [vmem:[#allocation2 + $0xa0] sm:$0xff]
      %v4494 = vld [vmem:[#allocation2 + $0xa8] sm:$0xff]
      %v4495 = vld [vmem:[#allocation2 + $0xb0] sm:$0xff]
      %v4496 = vld [vmem:[#allocation2 + $0xb8] sm:$0xff]
      %v4497 = vld [vmem:[#allocation2 + $0xc0] sm:$0xff]
      %v4498 = vld [vmem:[#allocation2 + $0xc8] sm:$0xff]
      %v4499 = vld [vmem:[#allocation2 + $0xd0] sm:$0xff]
      %v4500 = vld [vmem:[#allocation2 + $0xd8] sm:$0xff]
      %v4501 = vld [vmem:[#allocation2 + $0xe0] sm:$0xff]
      %v4502 = vld [vmem:[#allocation2 + $0xe8] sm:$0xff]
      %v4503 = vld [vmem:[#allocation2 + $0xf0] sm:$0xff]
      %v4504 = vld [vmem:[#allocation2 + $0xf8] sm:$0xff]
      %v4505 = vld [vmem:[#allocation2 + $0x100] sm:$0xff]
      %v4506 = vld [vmem:[#allocation2 + $0x108] sm:$0xff]
      %v4507 = vld [vmem:[#allocation2 + $0x110] sm:$0xff]
      %v4508 = vld [vmem:[#allocation2 + $0x118] sm:$0xff]
      %v4509 = vadd.f32 %v4473, %v4331
      %v4510 = vadd.f32 %v4474, %v4334
      %v4511 = vadd.f32 %v4475, %v4339
      %v4512 = vadd.f32 %v4476, %v4342
      %v4513 = vadd.f32 %v4477, %v4347
      %v4514 = vadd.f32 %v4478, %v4350
      %v4515 = vadd.f32 %v4479, %v4355
      %v4516 = vadd.f32 %v4480, %v4358
      %v4517 = vadd.f32 %v4481, %v4363
      %v4518 = vadd.f32 %v4482, %v4366
      %v4519 = vadd.f32 %v4483, %v4371
      %v4520 = vadd.f32 %v4484, %v4374
      %v4521 = vadd.f32 %v4485, %v4379
      %v4522 = vadd.f32 %v4486, %v4382
      %v4523 = vadd.f32 %v4487, %v4387
      %v4524 = vadd.f32 %v4488, %v4390
      %v4525 = vadd.f32 %v4489, %v4395
      %v4526 = vadd.f32 %v4490, %v4398
      %v4527 = vadd.f32 %v4491, %v4403
      %v4528 = vadd.f32 %v4492, %v4406
      %v4529 = vadd.f32 %v4493, %v4411
      %v4530 = vadd.f32 %v4494, %v4414
      %v4531 = vadd.f32 %v4495, %v4419
      %v4532 = vadd.f32 %v4496, %v4422
      %v4533 = vadd.f32 %v4497, %v4427
      %v4534 = vadd.f32 %v4498, %v4430
      %v4535 = vadd.f32 %v4499, %v4435
      %v4536 = vadd.f32 %v4500, %v4438
      %v4537 = vadd.f32 %v4501, %v4443
      %v4538 = vadd.f32 %v4502, %v4446
      %v4539 = vadd.f32 %v4503, %v4451
      %v4540 = vadd.f32 %v4504, %v4454
      %v4541 = vadd.f32 %v4505, %v4459
      %v4542 = vadd.f32 %v4506, %v4462
      %v4543 = vadd.f32 %v4507, %v4467
      %v4544 = vadd.f32 %v4508, %v4470
      %4545 = vst [vmem:[#allocation2] sm:$0xff] %v4509
      %4546 = vst [vmem:[#allocation2 + $0x8] sm:$0xff] %v4510
      %4547 = vst [vmem:[#allocation2 + $0x10] sm:$0xff] %v4511
      %4548 = vst [vmem:[#allocation2 + $0x18] sm:$0xff] %v4512
      %4549 = vst [vmem:[#allocation2 + $0x20] sm:$0xff] %v4513
      %4550 = vst [vmem:[#allocation2 + $0x28] sm:$0xff] %v4514
      %4551 = vst [vmem:[#allocation2 + $0x30] sm:$0xff] %v4515
      %4552 = vst [vmem:[#allocation2 + $0x38] sm:$0xff] %v4516
      %4553 = vst [vmem:[#allocation2 + $0x40] sm:$0xff] %v4517
      %4554 = vst [vmem:[#allocation2 + $0x48] sm:$0xff] %v4518
      %4555 = vst [vmem:[#allocation2 + $0x50] sm:$0xff] %v4519
      %4556 = vst [vmem:[#allocation2 + $0x58] sm:$0xff] %v4520
      %4557 = vst [vmem:[#allocation2 + $0x60] sm:$0xff] %v4521
      %4558 = vst [vmem:[#allocation2 + $0x68] sm:$0xff] %v4522
      %4559 = vst [vmem:[#allocation2 + $0x70] sm:$0xff] %v4523
      %4560 = vst [vmem:[#allocation2 + $0x78] sm:$0xff] %v4524
      %4561 = vst [vmem:[#allocation2 + $0x80] sm:$0xff] %v4525
      %4562 = vst [vmem:[#allocation2 + $0x88] sm:$0xff] %v4526
      %4563 = vst [vmem:[#allocation2 + $0x90] sm:$0xff] %v4527
      %4564 = vst [vmem:[#allocation2 + $0x98] sm:$0xff] %v4528
      %4565 = vst [vmem:[#allocation2 + $0xa0] sm:$0xff] %v4529
      %4566 = vst [vmem:[#allocation2 + $0xa8] sm:$0xff] %v4530
      %4567 = vst [vmem:[#allocation2 + $0xb0] sm:$0xff] %v4531
      %4568 = vst [vmem:[#allocation2 + $0xb8] sm:$0xff] %v4532
      %4569 = vst [vmem:[#allocation2 + $0xc0] sm:$0xff] %v4533
      %4570 = vst [vmem:[#allocation2 + $0xc8] sm:$0xff] %v4534
      %4571 = vst [vmem:[#allocation2 + $0xd0] sm:$0xff] %v4535
      %4572 = vst [vmem:[#allocation2 + $0xd8] sm:$0xff] %v4536
      %4573 = vst [vmem:[#allocation2 + $0xe0] sm:$0xff] %v4537
      %4574 = vst [vmem:[#allocation2 + $0xe8] sm:$0xff] %v4538
      %4575 = vst [vmem:[#allocation2 + $0xf0] sm:$0xff] %v4539
      %4576 = vst [vmem:[#allocation2 + $0xf8] sm:$0xff] %v4540
      %4577 = vst [vmem:[#allocation2 + $0x100] sm:$0xff] %v4541
      %4578 = vst [vmem:[#allocation2 + $0x108] sm:$0xff] %v4542
      %4579 = vst [vmem:[#allocation2 + $0x110] sm:$0xff] %v4543
      %4580 = vst [vmem:[#allocation2 + $0x118] sm:$0xff] %v4544
      %v4581 = vld [vmem:[%s206 + $0x10] sm:$0x8]
      %v4582 = vld [vmem:[%s206 + $0x14] sm:$0xf]
      %v4583 = vld [vmem:[%s206 + $0x18] sm:$0xf]
      %v4584 = vld [vmem:[%s206 + $0x1c] sm:$0xf]
      %v4585 = vld [vmem:[%s206 + $0x20] sm:$0xf]
      %v4586 = vld [vmem:[%s206 + $0x24] sm:$0xf]
      %v4587 = vld [vmem:[%s206 + $0x28] sm:$0xf]
      %v4588 = vld [vmem:[%s206 + $0x2c] sm:$0xf]
      %v4589 = vld [vmem:[%s206 + $0x30] sm:$0xf]
      %v4590 = vld [vmem:[%s206 + $0x34] sm:$0xf]
      %v4591 = vld [vmem:[%s206 + $0x38] sm:$0xf]
      %v4592 = vld [vmem:[%s206 + $0x3c] sm:$0xf]
      %v4593 = vld [vmem:[%s206 + $0x40] sm:$0xf]
      %v4594 = vld [vmem:[%s206 + $0x44] sm:$0xf]
      %v4595 = vld [vmem:[%s206 + $0x48] sm:$0xf]
      %v4596 = vld [vmem:[%s206 + $0x4c] sm:$0xf]
      %v4597 = vld [vmem:[%s206 + $0x50] sm:$0xf]
      %v4598 = vld [vmem:[%s206 + $0x54] sm:$0xf]
      %v4599 = vld [vmem:[%s206 + $0x58] sm:$0xf]
      %v4600 = vld [vmem:[%s206 + $0x5c] sm:$0xf]
      %v4601 = vld [vmem:[%s206 + $0x60] sm:$0xf]
      %v4602 = vld [vmem:[%s206 + $0x64] sm:$0xf]
      %v4603 = vld [vmem:[%s206 + $0x68] sm:$0xf]
      %v4604 = vld [vmem:[%s206 + $0x6c] sm:$0xf]
      %v4605 = vld [vmem:[%s206 + $0x70] sm:$0xf]
      %v4606 = vld [vmem:[%s206 + $0x74] sm:$0xf]
      %v4607 = vld [vmem:[%s206 + $0x78] sm:$0xf]
      %v4608 = vld [vmem:[%s206 + $0x7c] sm:$0xf]
      %v4609 = vld [vmem:[%s206 + $0x80] sm:$0xf]
      %v4610 = vld [vmem:[%s206 + $0x84] sm:$0xf]
      %v4611 = vld [vmem:[%s206 + $0x88] sm:$0xf]
      %v4612 = vld [vmem:[%s206 + $0x8c] sm:$0xf]
      %v4613 = vld [vmem:[%s206 + $0x90] sm:$0xf]
      %v4614 = vld [vmem:[%s206 + $0x94] sm:$0xf]
      %v4615 = vld [vmem:[%s206 + $0x98] sm:$0xf]
      %v4616 = vld [vmem:[%s206 + $0x9c] sm:$0xf]
      %v4617 = vld [vmem:[%s206 + $0xa0] sm:$0x7]
      %s4618 = scalar_lea.vmem %s210, 16
      %v4619 = vld [vmem:[%s4618] sm:$0x3]
      %v4657 = vunpack.c.l.b16 %v4581
      %v4658 = vunpack.c.l.b16 %v4582
      %v4659 = vunpack.c.l.b16 %v4583
      %v4660 = vunpack.c.l.b16 %v4584
      %v4661 = vunpack.c.l.b16 %v4585
      %v4662 = vunpack.c.l.b16 %v4586
      %v4663 = vunpack.c.l.b16 %v4587
      %v4664 = vunpack.c.l.b16 %v4588
      %v4665 = vunpack.c.l.b16 %v4589
      %v4666 = vunpack.c.l.b16 %v4590
      %v4667 = vunpack.c.l.b16 %v4591
      %v4668 = vunpack.c.l.b16 %v4592
      %v4669 = vunpack.c.l.b16 %v4593
      %v4670 = vunpack.c.l.b16 %v4594
      %v4671 = vunpack.c.l.b16 %v4595
      %v4672 = vunpack.c.l.b16 %v4596
      %v4673 = vunpack.c.l.b16 %v4597
      %v4674 = vunpack.c.l.b16 %v4598
      %v4675 = vunpack.c.l.b16 %v4599
      %v4676 = vunpack.c.l.b16 %v4600
      %v4677 = vunpack.c.l.b16 %v4601
      %v4678 = vunpack.c.l.b16 %v4602
      %v4679 = vunpack.c.l.b16 %v4603
      %v4680 = vunpack.c.l.b16 %v4604
      %v4681 = vunpack.c.l.b16 %v4605
      %v4682 = vunpack.c.l.b16 %v4606
      %v4683 = vunpack.c.l.b16 %v4607
      %v4684 = vunpack.c.l.b16 %v4608
      %v4685 = vunpack.c.l.b16 %v4609
      %v4686 = vunpack.c.l.b16 %v4610
      %v4687 = vunpack.c.l.b16 %v4611
      %v4688 = vunpack.c.l.b16 %v4612
      %v4689 = vunpack.c.l.b16 %v4613
      %v4690 = vunpack.c.l.b16 %v4614
      %v4691 = vunpack.c.l.b16 %v4615
      %v4692 = vunpack.c.l.b16 %v4616
      %v4693 = vunpack.c.l.b16 %v4617
      %v4694 = vpack.c.b16 %v4658, %v4657
      %v4695 = vpack.c.b16 %v4660, %v4659
      %v4696 = vpack.c.b16 %v4662, %v4661
      %v4697 = vpack.c.b16 %v4664, %v4663
      %v4698 = vpack.c.b16 %v4666, %v4665
      %v4699 = vpack.c.b16 %v4668, %v4667
      %v4700 = vpack.c.b16 %v4670, %v4669
      %v4701 = vpack.c.b16 %v4672, %v4671
      %v4702 = vpack.c.b16 %v4674, %v4673
      %v4703 = vpack.c.b16 %v4676, %v4675
      %v4704 = vpack.c.b16 %v4678, %v4677
      %v4705 = vpack.c.b16 %v4680, %v4679
      %v4706 = vpack.c.b16 %v4682, %v4681
      %v4707 = vpack.c.b16 %v4684, %v4683
      %v4708 = vpack.c.b16 %v4686, %v4685
      %v4709 = vpack.c.b16 %v4688, %v4687
      %v4710 = vpack.c.b16 %v4690, %v4689
      %v4711 = vpack.c.b16 %v4692, %v4691
      %v4712 = vpack.c.b16 %v4693, %v4693
      %vm4713 = vcmask 1044480
      %v4714 = vrot.slane %v4694, 3
      %v4715 = vrot.slane %v4695, 3
      %v4716 = vsel %vm4713, %v4714, %v4715
      %v4717 = vrot.slane %v4696, 3
      %v4718 = vsel %vm4713, %v4715, %v4717
      %v4719 = vrot.slane %v4697, 3
      %v4720 = vsel %vm4713, %v4717, %v4719
      %v4721 = vrot.slane %v4698, 3
      %v4722 = vsel %vm4713, %v4719, %v4721
      %v4723 = vrot.slane %v4699, 3
      %v4724 = vsel %vm4713, %v4721, %v4723
      %v4725 = vrot.slane %v4700, 3
      %v4726 = vsel %vm4713, %v4723, %v4725
      %v4727 = vrot.slane %v4701, 3
      %v4728 = vsel %vm4713, %v4725, %v4727
      %v4729 = vrot.slane %v4702, 3
      %v4730 = vsel %vm4713, %v4727, %v4729
      %v4731 = vrot.slane %v4703, 3
      %v4732 = vsel %vm4713, %v4729, %v4731
      %v4733 = vrot.slane %v4704, 3
      %v4734 = vsel %vm4713, %v4731, %v4733
      %v4735 = vrot.slane %v4705, 3
      %v4736 = vsel %vm4713, %v4733, %v4735
      %v4737 = vrot.slane %v4706, 3
      %v4738 = vsel %vm4713, %v4735, %v4737
      %v4739 = vrot.slane %v4707, 3
      %v4740 = vsel %vm4713, %v4737, %v4739
      %v4741 = vrot.slane %v4708, 3
      %v4742 = vsel %vm4713, %v4739, %v4741
      %v4743 = vrot.slane %v4709, 3
      %v4744 = vsel %vm4713, %v4741, %v4743
      %v4745 = vrot.slane %v4710, 3
      %v4746 = vsel %vm4713, %v4743, %v4745
      %v4747 = vrot.slane %v4711, 3
      %v4748 = vsel %vm4713, %v4745, %v4747
      %v4749 = vrot.slane %v4712, 3
      %v4750 = vsel %vm4713, %v4747, %v4749
      %v4752 = vsel %vm350, %v4716, 0
      %v4755 = vsel %vm350, %v4718, 0
      %v4758 = vsel %vm350, %v4720, 0
      %v4761 = vsel %vm350, %v4722, 0
      %v4764 = vsel %vm350, %v4724, 0
      %v4767 = vsel %vm350, %v4726, 0
      %v4770 = vsel %vm350, %v4728, 0
      %v4773 = vsel %vm350, %v4730, 0
      %v4776 = vsel %vm350, %v4732, 0
      %v4779 = vsel %vm350, %v4734, 0
      %v4782 = vsel %vm350, %v4736, 0
      %v4785 = vsel %vm350, %v4738, 0
      %v4788 = vsel %vm350, %v4740, 0
      %v4791 = vsel %vm350, %v4742, 0
      %v4794 = vsel %vm350, %v4744, 0
      %v4797 = vsel %vm350, %v4746, 0
      %v4800 = vsel %vm350, %v4748, 0
      %v4803 = vsel %vm350, %v4750, 0
      %v4806 = vsel %vm405, %v4619, 0
      %4808 = vmatprep.subr.bf16.mxu0 0
      %4809 = vmatpush1.bf16.msra.mxu0 %v4806
      %4810 = vmatprep.subr.bf16.mxu0 0
      %4811 = vmatpush1.bf16.msra.mxu0 0
      %4812 = vmatprep.subr.bf16.mxu0 0
      %4813 = vmatpush1.bf16.msra.mxu0 0
      %4814 = vmatprep.subr.bf16.mxu0 0
      %4815 = vmatpush1.bf16.msra.mxu0 0
      %4816 = vmatprep.subr.bf16.mxu0 0
      %4817 = vmatpush1.bf16.msra.mxu0 0
      %4818 = vmatprep.subr.bf16.mxu0 0
      %4819 = vmatpush1.bf16.msra.mxu0 0
      %4820 = vmatprep.subr.bf16.mxu0 0
      %4821 = vmatpush1.bf16.msra.mxu0 0
      %4822 = vmatprep.subr.bf16.mxu0 0
      %4823 = vmatpush1.bf16.msra.mxu0 0
      %4824 = vmatprep.subr.bf16.mxu0 0
      %4825 = vmatpush1.bf16.msra.mxu0 0
      %4826 = vmatprep.subr.bf16.mxu0 0
      %4827 = vmatpush1.bf16.msra.mxu0 0
      %4828 = vmatprep.subr.bf16.mxu0 0
      %4829 = vmatpush1.bf16.msra.mxu0 0
      %4830 = vmatprep.subr.bf16.mxu0 0
      %4831 = vmatpush1.bf16.msra.mxu0 0
      %4832 = vmatprep.subr.bf16.mxu0 0
      %4833 = vmatpush1.bf16.msra.mxu0 0
      %4834 = vmatprep.subr.bf16.mxu0 0
      %4835 = vmatpush1.bf16.msra.mxu0 0
      %4836 = vmatprep.subr.bf16.mxu0 0
      %4837 = vmatpush1.bf16.msra.mxu0 0
      %4838 = vmatprep.subr.bf16.mxu0 0
      %4839 = vmatpush1.bf16.msra.mxu0 0
      %4840 = vmatprep.mubr.bf16.mxu0 0
      %4841 = vmatmul.mubr.bf16.gmra.mrb[0].mxu0 %v4752
      %v4842 = vpop.f32.mrb[0].mxu0
      %v4843 = vadd.f32 0.0, %v4842
      %v4844 = vpop.f32.mrb[0].mxu0
      %v4845 = vpop.f32.mrb[0].mxu0
      %v4846 = vadd.f32 0.0, %v4845
      %v4847 = vpop.f32.mrb[0].mxu0
      %4848 = vmatprep.mubr.bf16.mxu0 0
      %4849 = vmatmul.mubr.bf16.gmra.mrb[0].mxu0 %v4755
      %v4850 = vpop.f32.mrb[0].mxu0
      %v4851 = vadd.f32 0.0, %v4850
      %v4852 = vpop.f32.mrb[0].mxu0
      %v4853 = vpop.f32.mrb[0].mxu0
      %v4854 = vadd.f32 0.0, %v4853
      %v4855 = vpop.f32.mrb[0].mxu0
      %4856 = vmatprep.mubr.bf16.mxu0 0
      %4857 = vmatmul.mubr.bf16.gmra.mrb[0].mxu0 %v4758
      %v4858 = vpop.f32.mrb[0].mxu0
      %v4859 = vadd.f32 0.0, %v4858
      %v4860 = vpop.f32.mrb[0].mxu0
      %v4861 = vpop.f32.mrb[0].mxu0
      %v4862 = vadd.f32 0.0, %v4861
      %v4863 = vpop.f32.mrb[0].mxu0
      %4864 = vmatprep.mubr.bf16.mxu0 0
      %4865 = vmatmul.mubr.bf16.gmra.mrb[0].mxu0 %v4761
      %v4866 = vpop.f32.mrb[0].mxu0
      %v4867 = vadd.f32 0.0, %v4866
      %v4868 = vpop.f32.mrb[0].mxu0
      %v4869 = vpop.f32.mrb[0].mxu0
      %v4870 = vadd.f32 0.0, %v4869
      %v4871 = vpop.f32.mrb[0].mxu0
      %4872 = vmatprep.mubr.bf16.mxu0 0
      %4873 = vmatmul.mubr.bf16.gmra.mrb[0].mxu0 %v4764
      %v4874 = vpop.f32.mrb[0].mxu0
      %v4875 = vadd.f32 0.0, %v4874
      %v4876 = vpop.f32.mrb[0].mxu0
      %v4877 = vpop.f32.mrb[0].mxu0
      %v4878 = vadd.f32 0.0, %v4877
      %v4879 = vpop.f32.mrb[0].mxu0
      %4880 = vmatprep.mubr.bf16.mxu0 0
      %4881 = vmatmul.mubr.bf16.gmra.mrb[0].mxu0 %v4767
      %v4882 = vpop.f32.mrb[0].mxu0
      %v4883 = vadd.f32 0.0, %v4882
      %v4884 = vpop.f32.mrb[0].mxu0
      %v4885 = vpop.f32.mrb[0].mxu0
      %v4886 = vadd.f32 0.0, %v4885
      %v4887 = vpop.f32.mrb[0].mxu0
      %4888 = vmatprep.mubr.bf16.mxu0 0
      %4889 = vmatmul.mubr.bf16.gmra.mrb[0].mxu0 %v4770
      %v4890 = vpop.f32.mrb[0].mxu0
      %v4891 = vadd.f32 0.0, %v4890
      %v4892 = vpop.f32.mrb[0].mxu0
      %v4893 = vpop.f32.mrb[0].mxu0
      %v4894 = vadd.f32 0.0, %v4893
      %v4895 = vpop.f32.mrb[0].mxu0
      %4896 = vmatprep.mubr.bf16.mxu0 0
      %4897 = vmatmul.mubr.bf16.gmra.mrb[0].mxu0 %v4773
      %v4898 = vpop.f32.mrb[0].mxu0
      %v4899 = vadd.f32 0.0, %v4898
      %v4900 = vpop.f32.mrb[0].mxu0
      %v4901 = vpop.f32.mrb[0].mxu0
      %v4902 = vadd.f32 0.0, %v4901
      %v4903 = vpop.f32.mrb[0].mxu0
      %4904 = vmatprep.mubr.bf16.mxu0 0
      %4905 = vmatmul.mubr.bf16.gmra.mrb[0].mxu0 %v4776
      %v4906 = vpop.f32.mrb[0].mxu0
      %v4907 = vadd.f32 0.0, %v4906
      %v4908 = vpop.f32.mrb[0].mxu0
      %v4909 = vpop.f32.mrb[0].mxu0
      %v4910 = vadd.f32 0.0, %v4909
      %v4911 = vpop.f32.mrb[0].mxu0
      %4912 = vmatprep.mubr.bf16.mxu0 0
      %4913 = vmatmul.mubr.bf16.gmra.mrb[0].mxu0 %v4779
      %v4914 = vpop.f32.mrb[0].mxu0
      %v4915 = vadd.f32 0.0, %v4914
      %v4916 = vpop.f32.mrb[0].mxu0
      %v4917 = vpop.f32.mrb[0].mxu0
      %v4918 = vadd.f32 0.0, %v4917
      %v4919 = vpop.f32.mrb[0].mxu0
      %4920 = vmatprep.mubr.bf16.mxu0 0
      %4921 = vmatmul.mubr.bf16.gmra.mrb[0].mxu0 %v4782
      %v4922 = vpop.f32.mrb[0].mxu0
      %v4923 = vadd.f32 0.0, %v4922
      %v4924 = vpop.f32.mrb[0].mxu0
      %v4925 = vpop.f32.mrb[0].mxu0
      %v4926 = vadd.f32 0.0, %v4925
      %v4927 = vpop.f32.mrb[0].mxu0
      %4928 = vmatprep.mubr.bf16.mxu0 0
      %4929 = vmatmul.mubr.bf16.gmra.mrb[0].mxu0 %v4785
      %v4930 = vpop.f32.mrb[0].mxu0
      %v4931 = vadd.f32 0.0, %v4930
      %v4932 = vpop.f32.mrb[0].mxu0
      %v4933 = vpop.f32.mrb[0].mxu0
      %v4934 = vadd.f32 0.0, %v4933
      %v4935 = vpop.f32.mrb[0].mxu0
      %4936 = vmatprep.mubr.bf16.mxu0 0
      %4937 = vmatmul.mubr.bf16.gmra.mrb[0].mxu0 %v4788
      %v4938 = vpop.f32.mrb[0].mxu0
      %v4939 = vadd.f32 0.0, %v4938
      %v4940 = vpop.f32.mrb[0].mxu0
      %v4941 = vpop.f32.mrb[0].mxu0
      %v4942 = vadd.f32 0.0, %v4941
      %v4943 = vpop.f32.mrb[0].mxu0
      %4944 = vmatprep.mubr.bf16.mxu0 0
      %4945 = vmatmul.mubr.bf16.gmra.mrb[0].mxu0 %v4791
      %v4946 = vpop.f32.mrb[0].mxu0
      %v4947 = vadd.f32 0.0, %v4946
      %v4948 = vpop.f32.mrb[0].mxu0
      %v4949 = vpop.f32.mrb[0].mxu0
      %v4950 = vadd.f32 0.0, %v4949
      %v4951 = vpop.f32.mrb[0].mxu0
      %4952 = vmatprep.mubr.bf16.mxu0 0
      %4953 = vmatmul.mubr.bf16.gmra.mrb[0].mxu0 %v4794
      %v4954 = vpop.f32.mrb[0].mxu0
      %v4955 = vadd.f32 0.0, %v4954
      %v4956 = vpop.f32.mrb[0].mxu0
      %v4957 = vpop.f32.mrb[0].mxu0
      %v4958 = vadd.f32 0.0, %v4957
      %v4959 = vpop.f32.mrb[0].mxu0
      %4960 = vmatprep.mubr.bf16.mxu0 0
      %4961 = vmatmul.mubr.bf16.gmra.mrb[0].mxu0 %v4797
      %v4962 = vpop.f32.mrb[0].mxu0
      %v4963 = vadd.f32 0.0, %v4962
      %v4964 = vpop.f32.mrb[0].mxu0
      %v4965 = vpop.f32.mrb[0].mxu0
      %v4966 = vadd.f32 0.0, %v4965
      %v4967 = vpop.f32.mrb[0].mxu0
      %4968 = vmatprep.mubr.bf16.mxu0 0
      %4969 = vmatmul.mubr.bf16.gmra.mrb[0].mxu0 %v4800
      %v4970 = vpop.f32.mrb[0].mxu0
      %v4971 = vadd.f32 0.0, %v4970
      %v4972 = vpop.f32.mrb[0].mxu0
      %v4973 = vpop.f32.mrb[0].mxu0
      %v4974 = vadd.f32 0.0, %v4973
      %v4975 = vpop.f32.mrb[0].mxu0
      %4976 = vmatprep.mubr.bf16.mxu0 0
      %4977 = vmatmul.mubr.bf16.gmra.mrb[0].mxu0 %v4803
      %v4978 = vpop.f32.mrb[0].mxu0
      %v4979 = vadd.f32 0.0, %v4978
      %v4980 = vpop.f32.mrb[0].mxu0
      %v4981 = vpop.f32.mrb[0].mxu0
      %v4982 = vadd.f32 0.0, %v4981
      %v4983 = vpop.f32.mrb[0].mxu0
      %4984 = vdwg.mxu0
      %v4985 = vld [vmem:[#allocation2] sm:$0xff]
      %v4986 = vld [vmem:[#allocation2 + $0x8] sm:$0xff]
      %v4987 = vld [vmem:[#allocation2 + $0x10] sm:$0xff]
      %v4988 = vld [vmem:[#allocation2 + $0x18] sm:$0xff]
      %v4989 = vld [vmem:[#allocation2 + $0x20] sm:$0xff]
      %v4990 = vld [vmem:[#allocation2 + $0x28] sm:$0xff]
      %v4991 = vld [vmem:[#allocation2 + $0x30] sm:$0xff]
      %v4992 = vld [vmem:[#allocation2 + $0x38] sm:$0xff]
      %v4993 = vld [vmem:[#allocation2 + $0x40] sm:$0xff]
      %v4994 = vld [vmem:[#allocation2 + $0x48] sm:$0xff]
      %v4995 = vld [vmem:[#allocation2 + $0x50] sm:$0xff]
      %v4996 = vld [vmem:[#allocation2 + $0x58] sm:$0xff]
      %v4997 = vld [vmem:[#allocation2 + $0x60] sm:$0xff]
      %v4998 = vld [vmem:[#allocation2 + $0x68] sm:$0xff]
      %v4999 = vld [vmem:[#allocation2 + $0x70] sm:$0xff]
      %v5000 = vld [vmem:[#allocation2 + $0x78] sm:$0xff]
      %v5001 = vld [vmem:[#allocation2 + $0x80] sm:$0xff]
      %v5002 = vld [vmem:[#allocation2 + $0x88] sm:$0xff]
      %v5003 = vld [vmem:[#allocation2 + $0x90] sm:$0xff]
      %v5004 = vld [vmem:[#allocation2 + $0x98] sm:$0xff]
      %v5005 = vld [vmem:[#allocation2 + $0xa0] sm:$0xff]
      %v5006 = vld [vmem:[#allocation2 + $0xa8] sm:$0xff]
      %v5007 = vld [vmem:[#allocation2 + $0xb0] sm:$0xff]
      %v5008 = vld [vmem:[#allocation2 + $0xb8] sm:$0xff]
      %v5009 = vld [vmem:[#allocation2 + $0xc0] sm:$0xff]
      %v5010 = vld [vmem:[#allocation2 + $0xc8] sm:$0xff]
      %v5011 = vld [vmem:[#allocation2 + $0xd0] sm:$0xff]
      %v5012 = vld [vmem:[#allocation2 + $0xd8] sm:$0xff]
      %v5013 = vld [vmem:[#allocation2 + $0xe0] sm:$0xff]
      %v5014 = vld [vmem:[#allocation2 + $0xe8] sm:$0xff]
      %v5015 = vld [vmem:[#allocation2 + $0xf0] sm:$0xff]
      %v5016 = vld [vmem:[#allocation2 + $0xf8] sm:$0xff]
      %v5017 = vld [vmem:[#allocation2 + $0x100] sm:$0xff]
      %v5018 = vld [vmem:[#allocation2 + $0x108] sm:$0xff]
      %v5019 = vld [vmem:[#allocation2 + $0x110] sm:$0xff]
      %v5020 = vld [vmem:[#allocation2 + $0x118] sm:$0xff]
      %v5021 = vadd.f32 %v4985, %v4843
      %v5022 = vadd.f32 %v4986, %v4846
      %v5023 = vadd.f32 %v4987, %v4851
      %v5024 = vadd.f32 %v4988, %v4854
      %v5025 = vadd.f32 %v4989, %v4859
      %v5026 = vadd.f32 %v4990, %v4862
      %v5027 = vadd.f32 %v4991, %v4867
      %v5028 = vadd.f32 %v4992, %v4870
      %v5029 = vadd.f32 %v4993, %v4875
      %v5030 = vadd.f32 %v4994, %v4878
      %v5031 = vadd.f32 %v4995, %v4883
      %v5032 = vadd.f32 %v4996, %v4886
      %v5033 = vadd.f32 %v4997, %v4891
      %v5034 = vadd.f32 %v4998, %v4894
      %v5035 = vadd.f32 %v4999, %v4899
      %v5036 = vadd.f32 %v5000, %v4902
      %v5037 = vadd.f32 %v5001, %v4907
      %v5038 = vadd.f32 %v5002, %v4910
      %v5039 = vadd.f32 %v5003, %v4915
      %v5040 = vadd.f32 %v5004, %v4918
      %v5041 = vadd.f32 %v5005, %v4923
      %v5042 = vadd.f32 %v5006, %v4926
      %v5043 = vadd.f32 %v5007, %v4931
      %v5044 = vadd.f32 %v5008, %v4934
      %v5045 = vadd.f32 %v5009, %v4939
      %v5046 = vadd.f32 %v5010, %v4942
      %v5047 = vadd.f32 %v5011, %v4947
      %v5048 = vadd.f32 %v5012, %v4950
      %v5049 = vadd.f32 %v5013, %v4955
      %v5050 = vadd.f32 %v5014, %v4958
      %v5051 = vadd.f32 %v5015, %v4963
      %v5052 = vadd.f32 %v5016, %v4966
      %v5053 = vadd.f32 %v5017, %v4971
      %v5054 = vadd.f32 %v5018, %v4974
      %v5055 = vadd.f32 %v5019, %v4979
      %v5056 = vadd.f32 %v5020, %v4982
      %5057 = vst [vmem:[#allocation2] sm:$0xff] %v5021
      %5058 = vst [vmem:[#allocation2 + $0x8] sm:$0xff] %v5022
      %5059 = vst [vmem:[#allocation2 + $0x10] sm:$0xff] %v5023
      %5060 = vst [vmem:[#allocation2 + $0x18] sm:$0xff] %v5024
      %5061 = vst [vmem:[#allocation2 + $0x20] sm:$0xff] %v5025
      %5062 = vst [vmem:[#allocation2 + $0x28] sm:$0xff] %v5026
      %5063 = vst [vmem:[#allocation2 + $0x30] sm:$0xff] %v5027
      %5064 = vst [vmem:[#allocation2 + $0x38] sm:$0xff] %v5028
      %5065 = vst [vmem:[#allocation2 + $0x40] sm:$0xff] %v5029
      %5066 = vst [vmem:[#allocation2 + $0x48] sm:$0xff] %v5030
      %5067 = vst [vmem:[#allocation2 + $0x50] sm:$0xff] %v5031
      %5068 = vst [vmem:[#allocation2 + $0x58] sm:$0xff] %v5032
      %5069 = vst [vmem:[#allocation2 + $0x60] sm:$0xff] %v5033
      %5070 = vst [vmem:[#allocation2 + $0x68] sm:$0xff] %v5034
      %5071 = vst [vmem:[#allocation2 + $0x70] sm:$0xff] %v5035
      %5072 = vst [vmem:[#allocation2 + $0x78] sm:$0xff] %v5036
      %5073 = vst [vmem:[#allocation2 + $0x80] sm:$0xff] %v5037
      %5074 = vst [vmem:[#allocation2 + $0x88] sm:$0xff] %v5038
      %5075 = vst [vmem:[#allocation2 + $0x90] sm:$0xff] %v5039
      %5076 = vst [vmem:[#allocation2 + $0x98] sm:$0xff] %v5040
      %5077 = vst [vmem:[#allocation2 + $0xa0] sm:$0xff] %v5041
      %5078 = vst [vmem:[#allocation2 + $0xa8] sm:$0xff] %v5042
      %5079 = vst [vmem:[#allocation2 + $0xb0] sm:$0xff] %v5043
      %5080 = vst [vmem:[#allocation2 + $0xb8] sm:$0xff] %v5044
      %5081 = vst [vmem:[#allocation2 + $0xc0] sm:$0xff] %v5045
      %5082 = vst [vmem:[#allocation2 + $0xc8] sm:$0xff] %v5046
      %5083 = vst [vmem:[#allocation2 + $0xd0] sm:$0xff] %v5047
      %5084 = vst [vmem:[#allocation2 + $0xd8] sm:$0xff] %v5048
      %5085 = vst [vmem:[#allocation2 + $0xe0] sm:$0xff] %v5049
      %5086 = vst [vmem:[#allocation2 + $0xe8] sm:$0xff] %v5050
      %5087 = vst [vmem:[#allocation2 + $0xf0] sm:$0xff] %v5051
      %5088 = vst [vmem:[#allocation2 + $0xf8] sm:$0xff] %v5052
      %5089 = vst [vmem:[#allocation2 + $0x100] sm:$0xff] %v5053
      %5090 = vst [vmem:[#allocation2 + $0x108] sm:$0xff] %v5054
      %5091 = vst [vmem:[#allocation2 + $0x110] sm:$0xff] %v5055
      %5092 = vst [vmem:[#allocation2 + $0x118] sm:$0xff] %v5056
      %v5093 = vld [vmem:[#allocation2] sm:$0xff]
      %v5094 = vld [vmem:[#allocation2 + $0x8] sm:$0xff]
      %v5095 = vld [vmem:[#allocation2 + $0x10] sm:$0xff]
      %v5096 = vld [vmem:[#allocation2 + $0x18] sm:$0xff]
      %v5097 = vld [vmem:[#allocation2 + $0x20] sm:$0xff]
      %v5098 = vld [vmem:[#allocation2 + $0x28] sm:$0xff]
      %v5099 = vld [vmem:[#allocation2 + $0x30] sm:$0xff]
      %v5100 = vld [vmem:[#allocation2 + $0x38] sm:$0xff]
      %v5101 = vld [vmem:[#allocation2 + $0x40] sm:$0xff]
      %v5102 = vld [vmem:[#allocation2 + $0x48] sm:$0xff]
      %v5103 = vld [vmem:[#allocation2 + $0x50] sm:$0xff]
      %v5104 = vld [vmem:[#allocation2 + $0x58] sm:$0xff]
      %v5105 = vld [vmem:[#allocation2 + $0x60] sm:$0xff]
      %v5106 = vld [vmem:[#allocation2 + $0x68] sm:$0xff]
      %v5107 = vld [vmem:[#allocation2 + $0x70] sm:$0xff]
      %v5108 = vld [vmem:[#allocation2 + $0x78] sm:$0xff]
      %v5109 = vld [vmem:[#allocation2 + $0x80] sm:$0xff]
      %v5110 = vld [vmem:[#allocation2 + $0x88] sm:$0xff]
      %v5111 = vld [vmem:[#allocation2 + $0x90] sm:$0xff]
      %v5112 = vld [vmem:[#allocation2 + $0x98] sm:$0xff]
      %v5113 = vld [vmem:[#allocation2 + $0xa0] sm:$0xff]
      %v5114 = vld [vmem:[#allocation2 + $0xa8] sm:$0xff]
      %v5115 = vld [vmem:[#allocation2 + $0xb0] sm:$0xff]
      %v5116 = vld [vmem:[#allocation2 + $0xb8] sm:$0xff]
      %v5117 = vld [vmem:[#allocation2 + $0xc0] sm:$0xff]
      %v5118 = vld [vmem:[#allocation2 + $0xc8] sm:$0xff]
      %v5119 = vld [vmem:[#allocation2 + $0xd0] sm:$0xff]
      %v5120 = vld [vmem:[#allocation2 + $0xd8] sm:$0xff]
      %v5121 = vld [vmem:[#allocation2 + $0xe0] sm:$0xff]
      %v5122 = vld [vmem:[#allocation2 + $0xe8] sm:$0xff]
      %v5123 = vld [vmem:[#allocation2 + $0xf0] sm:$0xff]
      %v5124 = vld [vmem:[#allocation2 + $0xf8] sm:$0xff]
      %v5125 = vld [vmem:[#allocation2 + $0x100] sm:$0xff]
      %v5126 = vld [vmem:[#allocation2 + $0x108] sm:$0xff]
      %v5127 = vld [vmem:[#allocation2 + $0x110] sm:$0xff]
      %v5128 = vld [vmem:[#allocation2 + $0x118] sm:$0xff]
      %v5129 = vld [vmem:[%s213] sm:$0x1]
      %v5131 = vlaneseq
      %v5132 = vshrl.u32 %v5131, 7
      %v5133 = vsub.s32 0, %v5132
      %v5134 = vrot.slane %v5129, %v5133
      %v5136 = vadd.f32 %v5093, %v5134
      %v5137 = vadd.f32 %v5094, %v5134
      %v5138 = vadd.f32 %v5095, %v5134
      %v5139 = vadd.f32 %v5096, %v5134
      %v5140 = vadd.f32 %v5097, %v5134
      %v5141 = vadd.f32 %v5098, %v5134
      %v5142 = vadd.f32 %v5099, %v5134
      %v5143 = vadd.f32 %v5100, %v5134
      %v5144 = vadd.f32 %v5101, %v5134
      %v5145 = vadd.f32 %v5102, %v5134
      %v5146 = vadd.f32 %v5103, %v5134
      %v5147 = vadd.f32 %v5104, %v5134
      %v5148 = vadd.f32 %v5105, %v5134
      %v5149 = vadd.f32 %v5106, %v5134
      %v5150 = vadd.f32 %v5107, %v5134
      %v5151 = vadd.f32 %v5108, %v5134
      %v5152 = vadd.f32 %v5109, %v5134
      %v5153 = vadd.f32 %v5110, %v5134
      %v5154 = vadd.f32 %v5111, %v5134
      %v5155 = vadd.f32 %v5112, %v5134
      %v5156 = vadd.f32 %v5113, %v5134
      %v5157 = vadd.f32 %v5114, %v5134
      %v5158 = vadd.f32 %v5115, %v5134
      %v5159 = vadd.f32 %v5116, %v5134
      %v5160 = vadd.f32 %v5117, %v5134
      %v5161 = vadd.f32 %v5118, %v5134
      %v5162 = vadd.f32 %v5119, %v5134
      %v5163 = vadd.f32 %v5120, %v5134
      %v5164 = vadd.f32 %v5121, %v5134
      %v5165 = vadd.f32 %v5122, %v5134
      %v5166 = vadd.f32 %v5123, %v5134
      %v5167 = vadd.f32 %v5124, %v5134
      %v5168 = vadd.f32 %v5125, %v5134
      %v5169 = vadd.f32 %v5126, %v5134
      %v5170 = vadd.f32 %v5127, %v5134
      %v5171 = vadd.f32 %v5128, %v5134
      %v5172 = vmax.f32 %v5136, 0.0
      %v5173 = vmax.f32 %v5137, 0.0
      %v5174 = vmax.f32 %v5138, 0.0
      %v5175 = vmax.f32 %v5139, 0.0
      %v5176 = vmax.f32 %v5140, 0.0
      %v5177 = vmax.f32 %v5141, 0.0
      %v5178 = vmax.f32 %v5142, 0.0
      %v5179 = vmax.f32 %v5143, 0.0
      %v5180 = vmax.f32 %v5144, 0.0
      %v5181 = vmax.f32 %v5145, 0.0
      %v5182 = vmax.f32 %v5146, 0.0
      %v5183 = vmax.f32 %v5147, 0.0
      %v5184 = vmax.f32 %v5148, 0.0
      %v5185 = vmax.f32 %v5149, 0.0
      %v5186 = vmax.f32 %v5150, 0.0
      %v5187 = vmax.f32 %v5151, 0.0
      %v5188 = vmax.f32 %v5152, 0.0
      %v5189 = vmax.f32 %v5153, 0.0
      %v5190 = vmax.f32 %v5154, 0.0
      %v5191 = vmax.f32 %v5155, 0.0
      %v5192 = vmax.f32 %v5156, 0.0
      %v5193 = vmax.f32 %v5157, 0.0
      %v5194 = vmax.f32 %v5158, 0.0
      %v5195 = vmax.f32 %v5159, 0.0
      %v5196 = vmax.f32 %v5160, 0.0
      %v5197 = vmax.f32 %v5161, 0.0
      %v5198 = vmax.f32 %v5162, 0.0
      %v5199 = vmax.f32 %v5163, 0.0
      %v5200 = vmax.f32 %v5164, 0.0
      %v5201 = vmax.f32 %v5165, 0.0
      %v5202 = vmax.f32 %v5166, 0.0
      %v5203 = vmax.f32 %v5167, 0.0
      %v5204 = vmax.f32 %v5168, 0.0
      %v5205 = vmax.f32 %v5169, 0.0
      %v5206 = vmax.f32 %v5170, 0.0
      %v5207 = vmax.f32 %v5171, 0.0
      %v5208 = vmin.f32 %v5172, 6.0
      %v5209 = vmin.f32 %v5173, 6.0
      %v5210 = vmin.f32 %v5174, 6.0
      %v5211 = vmin.f32 %v5175, 6.0
      %v5212 = vmin.f32 %v5176, 6.0
      %v5213 = vmin.f32 %v5177, 6.0
      %v5214 = vmin.f32 %v5178, 6.0
      %v5215 = vmin.f32 %v5179, 6.0
      %v5216 = vmin.f32 %v5180, 6.0
      %v5217 = vmin.f32 %v5181, 6.0
      %v5218 = vmin.f32 %v5182, 6.0
      %v5219 = vmin.f32 %v5183, 6.0
      %v5220 = vmin.f32 %v5184, 6.0
      %v5221 = vmin.f32 %v5185, 6.0
      %v5222 = vmin.f32 %v5186, 6.0
      %v5223 = vmin.f32 %v5187, 6.0
      %v5224 = vmin.f32 %v5188, 6.0
      %v5225 = vmin.f32 %v5189, 6.0
      %v5226 = vmin.f32 %v5190, 6.0
      %v5227 = vmin.f32 %v5191, 6.0
      %v5228 = vmin.f32 %v5192, 6.0
      %v5229 = vmin.f32 %v5193, 6.0
      %v5230 = vmin.f32 %v5194, 6.0
      %v5231 = vmin.f32 %v5195, 6.0
      %v5232 = vmin.f32 %v5196, 6.0
      %v5233 = vmin.f32 %v5197, 6.0
      %v5234 = vmin.f32 %v5198, 6.0
      %v5235 = vmin.f32 %v5199, 6.0
      %v5236 = vmin.f32 %v5200, 6.0
      %v5237 = vmin.f32 %v5201, 6.0
      %v5238 = vmin.f32 %v5202, 6.0
      %v5239 = vmin.f32 %v5203, 6.0
      %v5240 = vmin.f32 %v5204, 6.0
      %v5241 = vmin.f32 %v5205, 6.0
      %v5242 = vmin.f32 %v5206, 6.0
      %v5243 = vmin.f32 %v5207, 6.0
      %v5244 = vpack.c.bf16 %v5209, %v5208
      %v5245 = vpack.c.bf16 %v5211, %v5210
      %v5246 = vpack.c.bf16 %v5213, %v5212
      %v5247 = vpack.c.bf16 %v5215, %v5214
      %v5248 = vpack.c.bf16 %v5217, %v5216
      %v5249 = vpack.c.bf16 %v5219, %v5218
      %v5250 = vpack.c.bf16 %v5221, %v5220
      %v5251 = vpack.c.bf16 %v5223, %v5222
      %v5252 = vpack.c.bf16 %v5225, %v5224
      %v5253 = vpack.c.bf16 %v5227, %v5226
      %v5254 = vpack.c.bf16 %v5229, %v5228
      %v5255 = vpack.c.bf16 %v5231, %v5230
      %v5256 = vpack.c.bf16 %v5233, %v5232
      %v5257 = vpack.c.bf16 %v5235, %v5234
      %v5258 = vpack.c.bf16 %v5237, %v5236
      %v5259 = vpack.c.bf16 %v5239, %v5238
      %v5260 = vpack.c.bf16 %v5241, %v5240
      %v5261 = vpack.c.bf16 %v5243, %v5242
      %v5280 = vunpack.c.l.b16 %v5244
      %v5281 = vunpack.c.h.b16 %v5244
      %v5282 = vunpack.c.l.b16 %v5245
      %v5283 = vunpack.c.h.b16 %v5245
      %v5284 = vunpack.c.l.b16 %v5246
      %v5285 = vunpack.c.h.b16 %v5246
      %v5286 = vunpack.c.l.b16 %v5247
      %v5287 = vunpack.c.h.b16 %v5247
      %v5288 = vunpack.c.l.b16 %v5248
      %v5289 = vunpack.c.h.b16 %v5248
      %v5290 = vunpack.c.l.b16 %v5249
      %v5291 = vunpack.c.h.b16 %v5249
      %v5292 = vunpack.c.l.b16 %v5250
      %v5293 = vunpack.c.h.b16 %v5250
      %v5294 = vunpack.c.l.b16 %v5251
      %v5295 = vunpack.c.h.b16 %v5251
      %v5296 = vunpack.c.l.b16 %v5252
      %v5297 = vunpack.c.h.b16 %v5252
      %v5298 = vunpack.c.l.b16 %v5253
      %v5299 = vunpack.c.h.b16 %v5253
      %v5300 = vunpack.c.l.b16 %v5254
      %v5301 = vunpack.c.h.b16 %v5254
      %v5302 = vunpack.c.l.b16 %v5255
      %v5303 = vunpack.c.h.b16 %v5255
      %v5304 = vunpack.c.l.b16 %v5256
      %v5305 = vunpack.c.h.b16 %v5256
      %v5306 = vunpack.c.l.b16 %v5257
      %v5307 = vunpack.c.h.b16 %v5257
      %v5308 = vunpack.c.l.b16 %v5258
      %v5309 = vunpack.c.h.b16 %v5258
      %v5310 = vunpack.c.l.b16 %v5259
      %v5311 = vunpack.c.h.b16 %v5259
      %v5312 = vunpack.c.l.b16 %v5260
      %v5313 = vunpack.c.h.b16 %v5260
      %v5314 = vunpack.c.l.b16 %v5261
      %v5315 = vunpack.c.h.b16 %v5261
      %v5316 = vpack.c.b16 %v5280, %v5280
      %v5317 = vpack.c.b16 %v5281, %v5281
      %v5318 = vpack.c.b16 %v5282, %v5282
      %v5319 = vpack.c.b16 %v5283, %v5283
      %v5320 = vpack.c.b16 %v5284, %v5284
      %v5321 = vpack.c.b16 %v5285, %v5285
      %v5322 = vpack.c.b16 %v5286, %v5286
      %v5323 = vpack.c.b16 %v5287, %v5287
      %v5324 = vpack.c.b16 %v5288, %v5288
      %v5325 = vpack.c.b16 %v5289, %v5289
      %v5326 = vpack.c.b16 %v5290, %v5290
      %v5327 = vpack.c.b16 %v5291, %v5291
      %v5328 = vpack.c.b16 %v5292, %v5292
      %v5329 = vpack.c.b16 %v5293, %v5293
      %v5330 = vpack.c.b16 %v5294, %v5294
      %v5331 = vpack.c.b16 %v5295, %v5295
      %v5332 = vpack.c.b16 %v5296, %v5296
      %v5333 = vpack.c.b16 %v5297, %v5297
      %v5334 = vpack.c.b16 %v5298, %v5298
      %v5335 = vpack.c.b16 %v5299, %v5299
      %v5336 = vpack.c.b16 %v5300, %v5300
      %v5337 = vpack.c.b16 %v5301, %v5301
      %v5338 = vpack.c.b16 %v5302, %v5302
      %v5339 = vpack.c.b16 %v5303, %v5303
      %v5340 = vpack.c.b16 %v5304, %v5304
      %v5341 = vpack.c.b16 %v5305, %v5305
      %v5342 = vpack.c.b16 %v5306, %v5306
      %v5343 = vpack.c.b16 %v5307, %v5307
      %v5344 = vpack.c.b16 %v5308, %v5308
      %v5345 = vpack.c.b16 %v5309, %v5309
      %v5346 = vpack.c.b16 %v5310, %v5310
      %v5347 = vpack.c.b16 %v5311, %v5311
      %v5348 = vpack.c.b16 %v5312, %v5312
      %v5349 = vpack.c.b16 %v5313, %v5313
      %v5350 = vpack.c.b16 %v5314, %v5314
      %v5351 = vpack.c.b16 %v5315, %v5315
      %5388 = vst [vmem:[%s221] sm:$0xf] %v5316
      %5389 = vst [vmem:[%s221 + $0x4] sm:$0xf] %v5317
      %5390 = vst [vmem:[%s221 + $0x8] sm:$0xf] %v5318
      %5391 = vst [vmem:[%s221 + $0xc] sm:$0xf] %v5319
      %5392 = vst [vmem:[%s221 + $0x10] sm:$0xf] %v5320
      %5393 = vst [vmem:[%s221 + $0x14] sm:$0xf] %v5321
      %5394 = vst [vmem:[%s221 + $0x18] sm:$0xf] %v5322
      %5395 = vst [vmem:[%s221 + $0x1c] sm:$0xf] %v5323
      %5396 = vst [vmem:[%s221 + $0x20] sm:$0xf] %v5324
      %5397 = vst [vmem:[%s221 + $0x24] sm:$0xf] %v5325
      %5398 = vst [vmem:[%s221 + $0x28] sm:$0xf] %v5326
      %5399 = vst [vmem:[%s221 + $0x2c] sm:$0xf] %v5327
      %5400 = vst [vmem:[%s221 + $0x30] sm:$0xf] %v5328
      %5401 = vst [vmem:[%s221 + $0x34] sm:$0xf] %v5329
      %5402 = vst [vmem:[%s221 + $0x38] sm:$0xf] %v5330
      %5403 = vst [vmem:[%s221 + $0x3c] sm:$0xf] %v5331
      %5404 = vst [vmem:[%s221 + $0x40] sm:$0xf] %v5332
      %5405 = vst [vmem:[%s221 + $0x44] sm:$0xf] %v5333
      %5406 = vst [vmem:[%s221 + $0x48] sm:$0xf] %v5334
      %5407 = vst [vmem:[%s221 + $0x4c] sm:$0xf] %v5335
      %5408 = vst [vmem:[%s221 + $0x50] sm:$0xf] %v5336
      %5409 = vst [vmem:[%s221 + $0x54] sm:$0xf] %v5337
      %5410 = vst [vmem:[%s221 + $0x58] sm:$0xf] %v5338
      %5411 = vst [vmem:[%s221 + $0x5c] sm:$0xf] %v5339
      %5412 = vst [vmem:[%s221 + $0x60] sm:$0xf] %v5340
      %5413 = vst [vmem:[%s221 + $0x64] sm:$0xf] %v5341
      %5414 = vst [vmem:[%s221 + $0x68] sm:$0xf] %v5342
      %5415 = vst [vmem:[%s221 + $0x6c] sm:$0xf] %v5343
      %5416 = vst [vmem:[%s221 + $0x70] sm:$0xf] %v5344
      %5417 = vst [vmem:[%s221 + $0x74] sm:$0xf] %v5345
      %5418 = vst [vmem:[%s221 + $0x78] sm:$0xf] %v5346
      %5419 = vst [vmem:[%s221 + $0x7c] sm:$0xf] %v5347
      %5420 = vst [vmem:[%s221 + $0x80] sm:$0xf] %v5348
      %5421 = vst [vmem:[%s221 + $0x84] sm:$0xf] %v5349
      %5422 = vst [vmem:[%s221 + $0x88] sm:$0xf] %v5350
      %5423 = vst [vmem:[%s221 + $0x8c] sm:$0xf] %v5351
      %p5424 = scmp.lt.s32.totalorder %s18, 1
      %s5425 = scalar_select %p5424, %s18, 1
      %p5426 = scmp.lt.s32.totalorder %s19, 0
      %s5427 = scalar_select %p5426, %s19, 0
      %s5428 = smul.addr %s5425, 36
      %s5429 = sadd.s32 %s5427, %s5428
      %s5430 = smul.addr %s5429, 4
      %s5431 = scalar_lea.vmem %s3, %s5430
      // Predicated region
      $region33: #{conv_block_forward.1} parent=31 // pred_check
        %p5432 = pneg %p124
      $region34: #{conv_block_forward.1} parent=31 // pred_check_branch
        %5434 = sbr.rel (%p5432) target = $region36
      $region35: #{conv_block_forward.1} parent=31 // pred_region
        _
      $region36: #{conv_block_forward.1} parent=31 // pred_fallthru
        _
    $region32: #{conv_block_forward.1} parent=5 // pred_fallthru
      _
    %p5435 = scmp.le.s32.totalorder 2, %s9
    // Predicated region
    $region37: #{conv_block_forward.1} parent=5 // pred_check
      %p5436 = pneg %p5435
    $region38: #{conv_block_forward.1} parent=5 // pred_check_branch
      %5438 = sbr.rel (%p5436) target = $region40
    $region39: #{conv_block_forward.1} parent=5 // pred_region
      %s5439 = ssub.s32 %s9, 2
      // Predicated region
      $region41: #{conv_block_forward.1} parent=39 // pred_check
        %p5440 = pneg %p130
      $region42: #{conv_block_forward.1} parent=39 // pred_check_branch
        %5442 = sbr.rel (%p5440) target = $region44
      $region43: #{conv_block_forward.1} parent=39 // pred_region
        %p5443 = scmp.lt.s32.totalorder %s20, 1
        %s5444 = scalar_select %p5443, %s20, 1
        %p5445 = scmp.lt.s32.totalorder %s21, 0
        %s5446 = scalar_select %p5445, %s21, 0
        %s5447 = smul.addr %s5444, 36
        %s5448 = sadd.s32 %s5446, %s5447
        %s5449 = smul.addr %s5448, 4
        %s5450 = scalar_lea.vmem %s3, %s5449
      $region44: #{conv_block_forward.1} parent=39 // pred_fallthru
        _
    $region40: #{conv_block_forward.1} parent=5 // pred_fallthru
      _
  $region6: #{conv_block_forward.1} parent=0 // loop_footer
    %s13 = sadd.s32 1, %s9
  $region7: #{conv_block_forward.1} parent=0 // loop_footer_branch
    %8 = sbr.rel target = $region3
  $region8: #{conv_block_forward.1} parent=0 // loop_exit
    _

</llo_original>
